<compile_context>
chip_gen: v6e
topology: v6e:2x2x1
jax: 0.10.0
libtpu: 0.0.40
codegen_flags: <defaults>
</compile_context>

<pallas_src>
import functools

import jax
import jax.numpy as jnp
from jax.experimental import pallas as pl
from jax.experimental.pallas import tpu as pltpu


def _round_up(a, m):
    return (a + m - 1) // m * m


# ----------------------------- Pallas kernel -----------------------------

def _projnet_m_kernel(mask_ref, x_ref, w1_ref, b1_ref, w2_ref, b2_ref,
                      o_ref, hpad_ref, *, Wp, S0, M, L, C_pad):
    """One (batch-chunk b, resblock t) grid step.

    o_ref  : (C_pad, L)  resident running activation X in zero-padded layout.
    hpad_ref: (C_pad, L) scratch for the intermediate ReLU activation (same layout).
    mask_ref: (C_pad, M) 1.0 at interior-pixel slab lanes, 0.0 at halo/garbage lanes.
    w*_ref : (1, C_pad, 9*C_pad) this step's conv weights, b*_ref: (1, C_pad, 1).
    """
    t = pl.program_id(1)

    @pl.when(t == 0)
    def _init():
        # Running activation starts from the (already zero-padded) input block.
        o_ref[...] = x_ref[...]
        # Zero only the halo lane strips of hpad that the slab store never touches
        # (the interior slab is fully rewritten each conv).
        hpad_ref[:, 0:S0] = jnp.zeros((C_pad, S0), jnp.float32)
        if S0 + M < L:
            hpad_ref[:, S0 + M:L] = jnp.zeros((C_pad, L - (S0 + M)), jnp.float32)

    mask = mask_ref[...]                                    # (C_pad, M)

    def conv(src_ref, w_ref, b_ref):
        # 9 per-tap GEMM accumulations; no materialized patch matrix.
        w = w_ref[0]                                        # (C_pad, 9*C_pad)
        acc = None
        for k in range(9):
            off = (k // 3 - 1) * Wp + (k % 3 - 1)           # lane shift of tap k
            win = src_ref[:, S0 + off:S0 + off + M]         # (C_pad, M) shifted view
            term = jnp.dot(w[:, k * C_pad:(k + 1) * C_pad], win,
                           preferred_element_type=jnp.float32)
            acc = term if acc is None else acc + term
        return acc + b_ref[0]                               # bias (C_pad,1) lane-broadcast

    # conv1 + ReLU; mask keeps the zero-padding halos of h physically zero.
    h = jnp.maximum(conv(o_ref, w1_ref, b1_ref), 0.0) * mask
    hpad_ref[:, S0:S0 + M] = h                              # aligned, unmasked slab store
    # conv2 + residual; mask preserves the zero halos of the running X.
    y = conv(hpad_ref, w2_ref, b2_ref) * mask
    o_ref[:, S0:S0 + M] = o_ref[:, S0:S0 + M] + y


# ----------------------------- wrapper -----------------------------

def projnet_m_forward(x, w1, b1, w2, b2):
    """ProjnetM forward.

    x:  (B, C, H, W) float32
    w1, w2: (T, C, C, 3, 3) PyTorch-layout conv weights (Cout, Cin, kh, kw)
    b1, b2: (T, C) biases
    """
    B, C, H, W = x.shape
    T = w1.shape[0]
    C_pad = _round_up(C, 8)                      # f32 sublane tile
    Hp, Wp = H + 2, W + 2

    # Images per batch chunk: smallest divisor of B giving a slab >= 512 lanes
    # (lane density on v5e/v6e); more chunks -> more "parallel" work for v7x.
    bb = B
    for d in range(1, B + 1):
        if B % d == 0 and d * Hp * Wp - 2 * (W + 3) >= 512:
            bb = d
            break
    NB = B // bb

    Npad_c = bb * Hp * Wp                        # padded lanes of one chunk's data
    Q = (-(W + 3)) % 128                         # lane offset of the data -> slab is 128-aligned
    S0 = Q + W + 3                               # first output-slab lane (multiple of 128)
    M = _round_up(max(Npad_c - 2 * (W + 3), 128), 128)   # output slab width (lane-dense)
    L = _round_up(S0 + M + (W + 3), 128)         # per-chunk buffer width (all taps in-bounds)

    # ---- zero-padded, lane-haloed input layout: (C_pad, NB*L) ----
    xp = jnp.pad(x.astype(jnp.float32), ((0, 0), (0, C_pad - C), (1, 1), (1, 1)))
    xp = xp.reshape(NB, bb, C_pad, Hp, Wp).transpose(0, 2, 1, 3, 4).reshape(NB, C_pad, Npad_c)
    xp = jnp.pad(xp, ((0, 0), (0, 0), (Q, L - Q - Npad_c)))
    x2d = xp.transpose(1, 0, 2).reshape(C_pad, NB * L)

    # ---- interior-pixel mask over the output slab (identical for every chunk) ----
    p = jnp.arange(M) + (W + 3)                  # padded-flat position of slab lane j
    hw = p % (Hp * Wp)
    interior = ((p < Npad_c)
                & (hw // Wp >= 1) & (hw // Wp <= H)
                & (hw % Wp >= 1) & (hw % Wp <= W))
    mask2d = jnp.broadcast_to(interior.astype(jnp.float32)[None, :], (C_pad, M))

    # ---- weights -> (T, C_pad, 9*C_pad), column index = (dy*3+dx)*C_pad + cin ----
    def prep_w(w):
        wp = jnp.pad(w.astype(jnp.float32),
                     ((0, 0), (0, C_pad - C), (0, C_pad - C), (0, 0), (0, 0)))
        return wp.transpose(0, 1, 3, 4, 2).reshape(T, C_pad, 9 * C_pad)

    def prep_b(b):
        return jnp.pad(b.astype(jnp.float32), ((0, 0), (0, C_pad - C))).reshape(T, C_pad, 1)

    w1m, w2m = prep_w(w1), prep_w(w2)
    b1m, b2m = prep_b(b1), prep_b(b2)

    kernel = functools.partial(_projnet_m_kernel, Wp=Wp, S0=S0, M=M, L=L, C_pad=C_pad)

    # VMEM budget (double-buffered inputs + resident output block + scratch) & cost hint.
    per_block_bytes = 4 * (2 * C_pad * L       # x block
                           + 2 * C_pad * L     # output block
                           + 2 * C_pad * M     # mask
                           + C_pad * L         # hpad scratch
                           + 4 * (C_pad * 9 * C_pad)   # w1, w2 (double-buffered)
                           + 4 * (C_pad * 128))        # b1, b2 (tile-padded)
    vmem_limit = int(min(max(4 * per_block_bytes, 16 * 1024 * 1024), 64 * 1024 * 1024))
    flops = NB * T * 2 * 9 * 2 * C_pad * C_pad * M
    bytes_accessed = 4 * (2 * C_pad * NB * L + C_pad * M
                          + T * 2 * (C_pad * 9 * C_pad + C_pad))

    out2d = pl.pallas_call(
        kernel,
        out_shape=jax.ShapeDtypeStruct((C_pad, NB * L), jnp.float32),
        grid=(NB, T),
        in_specs=[
            pl.BlockSpec((C_pad, M), lambda b, t: (0, 0)),              # interior mask
            pl.BlockSpec((C_pad, L), lambda b, t: (0, b)),              # padded input chunk
            pl.BlockSpec((1, C_pad, 9 * C_pad), lambda b, t: (t, 0, 0)),  # w1[t]
            pl.BlockSpec((1, C_pad, 1), lambda b, t: (t, 0, 0)),          # b1[t]
            pl.BlockSpec((1, C_pad, 9 * C_pad), lambda b, t: (t, 0, 0)),  # w2[t]
            pl.BlockSpec((1, C_pad, 1), lambda b, t: (t, 0, 0)),          # b2[t]
        ],
        out_specs=pl.BlockSpec((C_pad, L), lambda b, t: (0, b)),        # running X (resident over t)
        scratch_shapes=[pltpu.VMEM((C_pad, L), jnp.float32)],           # intermediate h
        compiler_params=pltpu.CompilerParams(
            dimension_semantics=("parallel", "arbitrary"),
            vmem_limit_bytes=vmem_limit),
        cost_estimate=pl.CostEstimate(flops=flops, transcendentals=0,
                                      bytes_accessed=bytes_accessed),
    )(mask2d, x2d, w1m, b1m, w2m, b2m)

    # ---- strip halos / channel padding back to (B, C, H, W) ----
    out = out2d.reshape(C_pad, NB, L)[:, :, Q:Q + Npad_c]
    out = out.reshape(C_pad, NB, bb, Hp, Wp)[:C, :, :, 1:H + 1, 1:W + 1]
    return out.transpose(1, 2, 0, 3, 4).reshape(B, C, H, W)


# ----------------------------- pure-JAX reference -----------------------------

def _projnet_m_reference(x, w1, b1, w2, b2):
    dn = ('NCHW', 'OIHW', 'NCHW')

    def conv(inp, w, b):
        y = jax.lax.conv_general_dilated(
            inp, w, window_strides=(1, 1), padding=((1, 1), (1, 1)),
            dimension_numbers=dn, precision=jax.lax.Precision.HIGHEST)
        return y + b.reshape(1, -1, 1, 1)

    X = x
    for t in range(w1.shape[0]):
        h = jax.nn.relu(conv(X, w1[t], b1[t]))
        X = X + conv(h, w2[t], b2[t])
    return X


# ----------------------------- main -----------------------------

if __name__ == "__main__":
    configs = [
        dict(B=2, C=4, H=16, W=16, T=2),   # primary small config
        dict(B=4, C=3, H=12, W=20, T=3),   # multi-chunk parallel axis + channel padding
    ]
    fwd = jax.jit(projnet_m_forward)
    base_key = jax.random.PRNGKey(0)

    for i, cfg in enumerate(configs):
        B, C, H, W, T = cfg["B"], cfg["C"], cfg["H"], cfg["W"], cfg["T"]
        kx, kw1, kb1, kw2, kb2 = jax.random.split(jax.random.fold_in(base_key, i), 5)
        x = jax.random.normal(kx, (B, C, H, W), jnp.float32)
        w1 = jax.random.normal(kw1, (T, C, C, 3, 3), jnp.float32) * 0.1
        b1 = jax.random.normal(kb1, (T, C), jnp.float32) * 0.1
        w2 = jax.random.normal(kw2, (T, C, C, 3, 3), jnp.float32) * 0.1
        b2 = jax.random.normal(kb2, (T, C), jnp.float32) * 0.1

        out = jax.block_until_ready(fwd(x, w1, b1, w2, b2))
        ref = _projnet_m_reference(x, w1, b1, w2, b2)

        assert out.shape == (B, C, H, W)
        assert bool(jnp.all(jnp.isfinite(out)))
        max_err = float(jnp.max(jnp.abs(out - ref)))
        assert max_err < 1e-2, f"config {i}: mismatch vs reference: {max_err}"

    print("KERNEL_OK")
</pallas_src>

<mosaic_0001>
module attributes {stable_mosaic.version = 11 : i64} {
  func.func @_projnet_m_kernel(%arg0: i32, %arg1: i32, %arg2: memref<8x640xf32, #tpu.memory_space<vmem>>, %arg3: memref<8x896xf32, #tpu.memory_space<vmem>>, %arg4: memref<1x8x72xf32, #tpu.memory_space<vmem>>, %arg5: memref<1x8x1xf32, #tpu.memory_space<vmem>>, %arg6: memref<1x8x72xf32, #tpu.memory_space<vmem>>, %arg7: memref<1x8x1xf32, #tpu.memory_space<vmem>>, %arg8: memref<8x896xf32, #tpu.memory_space<vmem>>, %arg9: memref<8x896xf32, #tpu.memory_space<vmem>>) attributes {dimension_semantics = [#tpu.dimension_semantics<parallel>, #tpu.dimension_semantics<arbitrary>], iteration_bounds = array<i64: 1, 2>, scalar_prefetch = 0 : i64, scratch_operands = 1 : i64, tpu.core_type = #tpu.core_type<tc>, window_params = [{pipeline_mode = #tpu.pipeline_mode<synchronous>, transform_indices = @transform_0, window_bounds = array<i64: 8, 640>}, {transform_indices = @transform_1, window_bounds = array<i64: 8, 896>}, {transform_indices = @transform_2, window_bounds = array<i64: 1, 8, 72>}, {transform_indices = @transform_3, window_bounds = array<i64: 1, 8, 1>}, {transform_indices = @transform_4, window_bounds = array<i64: 1, 8, 72>}, {transform_indices = @transform_5, window_bounds = array<i64: 1, 8, 1>}, {transform_indices = @transform_6, window_bounds = array<i64: 8, 896>}]} {
    %c0_i32 = arith.constant 0 : i32
    %0 = arith.cmpi eq, %arg1, %c0_i32 : i32
    %1 = arith.extui %0 : i1 to i32
    %c0_i32_0 = arith.constant 0 : i32
    %2 = arith.cmpi ne, %1, %c0_i32_0 : i32
    scf.if %2 {
      %c0_65 = arith.constant 0 : index
      %c0_66 = arith.constant 0 : index
      %94 = vector.load %arg3[%c0_65, %c0_66] : memref<8x896xf32, #tpu.memory_space<vmem>>, vector<8x896xf32>
      %c0_67 = arith.constant 0 : index
      %c0_68 = arith.constant 0 : index
      %95 = vector.load %arg8[%c0_67, %c0_68] : memref<8x896xf32, #tpu.memory_space<vmem>>, vector<8x896xf32>
      tpu.vector_store %arg8[%c0_67, %c0_68], %94 {strides = array<i32>} : memref<8x896xf32, #tpu.memory_space<vmem>>, vector<8x896xf32>,
      %cst_69 = arith.constant 0.000000e+00 : f32
      %96 = vector.broadcast %cst_69 : f32 to vector<8x128xf32>
      %c0_70 = arith.constant 0 : index
      %c0_71 = arith.constant 0 : index
      %97 = vector.load %arg9[%c0_70, %c0_71] : memref<8x896xf32, #tpu.memory_space<vmem>>, vector<8x128xf32>
      tpu.vector_store %arg9[%c0_70, %c0_71], %96 {strides = array<i32>} : memref<8x896xf32, #tpu.memory_space<vmem>>, vector<8x128xf32>,
      %cst_72 = arith.constant 0.000000e+00 : f32
      %98 = vector.broadcast %cst_72 : f32 to vector<8x128xf32>
      %c0_73 = arith.constant 0 : index
      %c768 = arith.constant 768 : index
      %99 = vector.load %arg9[%c0_73, %c768] : memref<8x896xf32, #tpu.memory_space<vmem>>, vector<8x128xf32>
      tpu.vector_store %arg9[%c0_73, %c768], %98 {strides = array<i32>} : memref<8x896xf32, #tpu.memory_space<vmem>>, vector<8x128xf32>,
    } else {
    }
    %c0 = arith.constant 0 : index
    %c0_1 = arith.constant 0 : index
    %3 = vector.load %arg2[%c0, %c0_1] : memref<8x640xf32, #tpu.memory_space<vmem>>, vector<8x640xf32>
    %c0_2 = arith.constant 0 : index
    %c0_3 = arith.constant 0 : index
    %c0_4 = arith.constant 0 : index
    %4 = vector.load %arg4[%c0_2, %c0_3, %c0_4] : memref<1x8x72xf32, #tpu.memory_space<vmem>>, vector<1x8x72xf32>
    %5 = vector.shape_cast %4 : vector<1x8x72xf32> to vector<8x72xf32>
    %c0_5 = arith.constant 0 : index
    %c109 = arith.constant 109 : index
    %6 = vector.load %arg8[%c0_5, %c109] : memref<8x896xf32, #tpu.memory_space<vmem>>, vector<8x640xf32>
    %7 = vector.extract_strided_slice %5 {offsets = [0, 0], sizes = [8, 8], strides = [1, 1]} : vector<8x72xf32> to vector<8x8xf32>
    %cst = arith.constant dense<0.000000e+00> : vector<8x640xf32>
    %8 = tpu.matmul %7, %6, %cst {dimension_numbers = #tpu.dot_dimension_numbers<[1], [0], [0], [1], [0, 0, 1, 1], [], []>} : vector<8x8xf32>, vector<8x640xf32>, vector<8x640xf32> -> vector<8x640xf32>
    %c0_6 = arith.constant 0 : index
    %c110 = arith.constant 110 : index
    %9 = vector.load %arg8[%c0_6, %c110] : memref<8x896xf32, #tpu.memory_space<vmem>>, vector<8x640xf32>
    %10 = vector.extract_strided_slice %5 {offsets = [0, 8], sizes = [8, 8], strides = [1, 1]} : vector<8x72xf32> to vector<8x8xf32>
    %cst_7 = arith.constant dense<0.000000e+00> : vector<8x640xf32>
    %11 = tpu.matmul %10, %9, %cst_7 {dimension_numbers = #tpu.dot_dimension_numbers<[1], [0], [0], [1], [0, 0, 1, 1], [], []>} : vector<8x8xf32>, vector<8x640xf32>, vector<8x640xf32> -> vector<8x640xf32>
    %12 = arith.addf %8, %11 : vector<8x640xf32>
    %c0_8 = arith.constant 0 : index
    %c111 = arith.constant 111 : index
    %13 = vector.load %arg8[%c0_8, %c111] : memref<8x896xf32, #tpu.memory_space<vmem>>, vector<8x640xf32>
    %14 = vector.extract_strided_slice %5 {offsets = [0, 16], sizes = [8, 8], strides = [1, 1]} : vector<8x72xf32> to vector<8x8xf32>
    %cst_9 = arith.constant dense<0.000000e+00> : vector<8x640xf32>
    %15 = tpu.matmul %14, %13, %cst_9 {dimension_numbers = #tpu.dot_dimension_numbers<[1], [0], [0], [1], [0, 0, 1, 1], [], []>} : vector<8x8xf32>, vector<8x640xf32>, vector<8x640xf32> -> vector<8x640xf32>
    %16 = arith.addf %12, %15 : vector<8x640xf32>
    %c0_10 = arith.constant 0 : index
    %c127 = arith.constant 127 : index
    %17 = vector.load %arg8[%c0_10, %c127] : memref<8x896xf32, #tpu.memory_space<vmem>>, vector<8x640xf32>
    %18 = vector.extract_strided_slice %5 {offsets = [0, 24], sizes = [8, 8], strides = [1, 1]} : vector<8x72xf32> to vector<8x8xf32>
    %cst_11 = arith.constant dense<0.000000e+00> : vector<8x640xf32>
    %19 = tpu.matmul %18, %17, %cst_11 {dimension_numbers = #tpu.dot_dimension_numbers<[1], [0], [0], [1], [0, 0, 1, 1], [], []>} : vector<8x8xf32>, vector<8x640xf32>, vector<8x640xf32> -> vector<8x640xf32>
    %20 = arith.addf %16, %19 : vector<8x640xf32>
    %c0_12 = arith.constant 0 : index
    %c128 = arith.constant 128 : index
    %21 = vector.load %arg8[%c0_12, %c128] : memref<8x896xf32, #tpu.memory_space<vmem>>, vector<8x640xf32>
    %22 = vector.extract_strided_slice %5 {offsets = [0, 32], sizes = [8, 8], strides = [1, 1]} : vector<8x72xf32> to vector<8x8xf32>
    %cst_13 = arith.constant dense<0.000000e+00> : vector<8x640xf32>
    %23 = tpu.matmul %22, %21, %cst_13 {dimension_numbers = #tpu.dot_dimension_numbers<[1], [0], [0], [1], [0, 0, 1, 1], [], []>} : vector<8x8xf32>, vector<8x640xf32>, vector<8x640xf32> -> vector<8x640xf32>
    %24 = arith.addf %20, %23 : vector<8x640xf32>
    %c0_14 = arith.constant 0 : index
    %c129 = arith.constant 129 : index
    %25 = vector.load %arg8[%c0_14, %c129] : memref<8x896xf32, #tpu.memory_space<vmem>>, vector<8x640xf32>
    %26 = vector.extract_strided_slice %5 {offsets = [0, 40], sizes = [8, 8], strides = [1, 1]} : vector<8x72xf32> to vector<8x8xf32>
    %cst_15 = arith.constant dense<0.000000e+00> : vector<8x640xf32>
    %27 = tpu.matmul %26, %25, %cst_15 {dimension_numbers = #tpu.dot_dimension_numbers<[1], [0], [0], [1], [0, 0, 1, 1], [], []>} : vector<8x8xf32>, vector<8x640xf32>, vector<8x640xf32> -> vector<8x640xf32>
    %28 = arith.addf %24, %27 : vector<8x640xf32>
    %c0_16 = arith.constant 0 : index
    %c145 = arith.constant 145 : index
    %29 = vector.load %arg8[%c0_16, %c145] : memref<8x896xf32, #tpu.memory_space<vmem>>, vector<8x640xf32>
    %30 = vector.extract_strided_slice %5 {offsets = [0, 48], sizes = [8, 8], strides = [1, 1]} : vector<8x72xf32> to vector<8x8xf32>
    %cst_17 = arith.constant dense<0.000000e+00> : vector<8x640xf32>
    %31 = tpu.matmul %30, %29, %cst_17 {dimension_numbers = #tpu.dot_dimension_numbers<[1], [0], [0], [1], [0, 0, 1, 1], [], []>} : vector<8x8xf32>, vector<8x640xf32>, vector<8x640xf32> -> vector<8x640xf32>
    %32 = arith.addf %28, %31 : vector<8x640xf32>
    %c0_18 = arith.constant 0 : index
    %c146 = arith.constant 146 : index
    %33 = vector.load %arg8[%c0_18, %c146] : memref<8x896xf32, #tpu.memory_space<vmem>>, vector<8x640xf32>
    %34 = vector.extract_strided_slice %5 {offsets = [0, 56], sizes = [8, 8], strides = [1, 1]} : vector<8x72xf32> to vector<8x8xf32>
    %cst_19 = arith.constant dense<0.000000e+00> : vector<8x640xf32>
    %35 = tpu.matmul %34, %33, %cst_19 {dimension_numbers = #tpu.dot_dimension_numbers<[1], [0], [0], [1], [0, 0, 1, 1], [], []>} : vector<8x8xf32>, vector<8x640xf32>, vector<8x640xf32> -> vector<8x640xf32>
    %36 = arith.addf %32, %35 : vector<8x640xf32>
    %c0_20 = arith.constant 0 : index
    %c147 = arith.constant 147 : index
    %37 = vector.load %arg8[%c0_20, %c147] : memref<8x896xf32, #tpu.memory_space<vmem>>, vector<8x640xf32>
    %38 = vector.extract_strided_slice %5 {offsets = [0, 64], sizes = [8, 8], strides = [1, 1]} : vector<8x72xf32> to vector<8x8xf32>
    %cst_21 = arith.constant dense<0.000000e+00> : vector<8x640xf32>
    %39 = tpu.matmul %38, %37, %cst_21 {dimension_numbers = #tpu.dot_dimension_numbers<[1], [0], [0], [1], [0, 0, 1, 1], [], []>} : vector<8x8xf32>, vector<8x640xf32>, vector<8x640xf32> -> vector<8x640xf32>
    %40 = arith.addf %36, %39 : vector<8x640xf32>
    %c0_22 = arith.constant 0 : index
    %c0_23 = arith.constant 0 : index
    %c0_24 = arith.constant 0 : index
    %41 = vector.load %arg5[%c0_22, %c0_23, %c0_24] : memref<1x8x1xf32, #tpu.memory_space<vmem>>, vector<1x8x1xf32>
    %42 = vector.shape_cast %41 : vector<1x8x1xf32> to vector<8x1xf32>
    %43 = vector.broadcast %42 : vector<8x1xf32> to vector<8x640xf32>
    %44 = arith.addf %40, %43 : vector<8x640xf32>
    %cst_25 = arith.constant 0.000000e+00 : f32
    %45 = vector.broadcast %cst_25 : f32 to vector<8x640xf32>
    %46 = arith.maximumf %44, %45 : vector<8x640xf32>
    %47 = arith.mulf %46, %3 : vector<8x640xf32>
    %c0_26 = arith.constant 0 : index
    %c128_27 = arith.constant 128 : index
    %48 = vector.load %arg9[%c0_26, %c128_27] : memref<8x896xf32, #tpu.memory_space<vmem>>, vector<8x640xf32>
    tpu.vector_store %arg9[%c0_26, %c128_27], %47 {strides = array<i32>} : memref<8x896xf32, #tpu.memory_space<vmem>>, vector<8x640xf32>,
    %c0_28 = arith.constant 0 : index
    %c0_29 = arith.constant 0 : index
    %c0_30 = arith.constant 0 : index
    %49 = vector.load %arg6[%c0_28, %c0_29, %c0_30] : memref<1x8x72xf32, #tpu.memory_space<vmem>>, vector<1x8x72xf32>
    %50 = vector.shape_cast %49 : vector<1x8x72xf32> to vector<8x72xf32>
    %c0_31 = arith.constant 0 : index
    %c109_32 = arith.constant 109 : index
    %51 = vector.load %arg9[%c0_31, %c109_32] : memref<8x896xf32, #tpu.memory_space<vmem>>, vector<8x640xf32>
    %52 = vector.extract_strided_slice %50 {offsets = [0, 0], sizes = [8, 8], strides = [1, 1]} : vector<8x72xf32> to vector<8x8xf32>
    %cst_33 = arith.constant dense<0.000000e+00> : vector<8x640xf32>
    %53 = tpu.matmul %52, %51, %cst_33 {dimension_numbers = #tpu.dot_dimension_numbers<[1], [0], [0], [1], [0, 0, 1, 1], [], []>} : vector<8x8xf32>, vector<8x640xf32>, vector<8x640xf32> -> vector<8x640xf32>
    %c0_34 = arith.constant 0 : index
    %c110_35 = arith.constant 110 : index
    %54 = vector.load %arg9[%c0_34, %c110_35] : memref<8x896xf32, #tpu.memory_space<vmem>>, vector<8x640xf32>
    %55 = vector.extract_strided_slice %50 {offsets = [0, 8], sizes = [8, 8], strides = [1, 1]} : vector<8x72xf32> to vector<8x8xf32>
    %cst_36 = arith.constant dense<0.000000e+00> : vector<8x640xf32>
    %56 = tpu.matmul %55, %54, %cst_36 {dimension_numbers = #tpu.dot_dimension_numbers<[1], [0], [0], [1], [0, 0, 1, 1], [], []>} : vector<8x8xf32>, vector<8x640xf32>, vector<8x640xf32> -> vector<8x640xf32>
    %57 = arith.addf %53, %56 : vector<8x640xf32>
    %c0_37 = arith.constant 0 : index
    %c111_38 = arith.constant 111 : index
    %58 = vector.load %arg9[%c0_37, %c111_38] : memref<8x896xf32, #tpu.memory_space<vmem>>, vector<8x640xf32>
    %59 = vector.extract_strided_slice %50 {offsets = [0, 16], sizes = [8, 8], strides = [1, 1]} : vector<8x72xf32> to vector<8x8xf32>
    %cst_39 = arith.constant dense<0.000000e+00> : vector<8x640xf32>
    %60 = tpu.matmul %59, %58, %cst_39 {dimension_numbers = #tpu.dot_dimension_numbers<[1], [0], [0], [1], [0, 0, 1, 1], [], []>} : vector<8x8xf32>, vector<8x640xf32>, vector<8x640xf32> -> vector<8x640xf32>
    %61 = arith.addf %57, %60 : vector<8x640xf32>
    %c0_40 = arith.constant 0 : index
    %c127_41 = arith.constant 127 : index
    %62 = vector.load %arg9[%c0_40, %c127_41] : memref<8x896xf32, #tpu.memory_space<vmem>>, vector<8x640xf32>
    %63 = vector.extract_strided_slice %50 {offsets = [0, 24], sizes = [8, 8], strides = [1, 1]} : vector<8x72xf32> to vector<8x8xf32>
    %cst_42 = arith.constant dense<0.000000e+00> : vector<8x640xf32>
    %64 = tpu.matmul %63, %62, %cst_42 {dimension_numbers = #tpu.dot_dimension_numbers<[1], [0], [0], [1], [0, 0, 1, 1], [], []>} : vector<8x8xf32>, vector<8x640xf32>, vector<8x640xf32> -> vector<8x640xf32>
    %65 = arith.addf %61, %64 : vector<8x640xf32>
    %c0_43 = arith.constant 0 : index
    %c128_44 = arith.constant 128 : index
    %66 = vector.load %arg9[%c0_43, %c128_44] : memref<8x896xf32, #tpu.memory_space<vmem>>, vector<8x640xf32>
    %67 = vector.extract_strided_slice %50 {offsets = [0, 32], sizes = [8, 8], strides = [1, 1]} : vector<8x72xf32> to vector<8x8xf32>
    %cst_45 = arith.constant dense<0.000000e+00> : vector<8x640xf32>
    %68 = tpu.matmul %67, %66, %cst_45 {dimension_numbers = #tpu.dot_dimension_numbers<[1], [0], [0], [1], [0, 0, 1, 1], [], []>} : vector<8x8xf32>, vector<8x640xf32>, vector<8x640xf32> -> vector<8x640xf32>
    %69 = arith.addf %65, %68 : vector<8x640xf32>
    %c0_46 = arith.constant 0 : index
    %c129_47 = arith.constant 129 : index
    %70 = vector.load %arg9[%c0_46, %c129_47] : memref<8x896xf32, #tpu.memory_space<vmem>>, vector<8x640xf32>
    %71 = vector.extract_strided_slice %50 {offsets = [0, 40], sizes = [8, 8], strides = [1, 1]} : vector<8x72xf32> to vector<8x8xf32>
    %cst_48 = arith.constant dense<0.000000e+00> : vector<8x640xf32>
    %72 = tpu.matmul %71, %70, %cst_48 {dimension_numbers = #tpu.dot_dimension_numbers<[1], [0], [0], [1], [0, 0, 1, 1], [], []>} : vector<8x8xf32>, vector<8x640xf32>, vector<8x640xf32> -> vector<8x640xf32>
    %73 = arith.addf %69, %72 : vector<8x640xf32>
    %c0_49 = arith.constant 0 : index
    %c145_50 = arith.constant 145 : index
    %74 = vector.load %arg9[%c0_49, %c145_50] : memref<8x896xf32, #tpu.memory_space<vmem>>, vector<8x640xf32>
    %75 = vector.extract_strided_slice %50 {offsets = [0, 48], sizes = [8, 8], strides = [1, 1]} : vector<8x72xf32> to vector<8x8xf32>
    %cst_51 = arith.constant dense<0.000000e+00> : vector<8x640xf32>
    %76 = tpu.matmul %75, %74, %cst_51 {dimension_numbers = #tpu.dot_dimension_numbers<[1], [0], [0], [1], [0, 0, 1, 1], [], []>} : vector<8x8xf32>, vector<8x640xf32>, vector<8x640xf32> -> vector<8x640xf32>
    %77 = arith.addf %73, %76 : vector<8x640xf32>
    %c0_52 = arith.constant 0 : index
    %c146_53 = arith.constant 146 : index
    %78 = vector.load %arg9[%c0_52, %c146_53] : memref<8x896xf32, #tpu.memory_space<vmem>>, vector<8x640xf32>
    %79 = vector.extract_strided_slice %50 {offsets = [0, 56], sizes = [8, 8], strides = [1, 1]} : vector<8x72xf32> to vector<8x8xf32>
    %cst_54 = arith.constant dense<0.000000e+00> : vector<8x640xf32>
    %80 = tpu.matmul %79, %78, %cst_54 {dimension_numbers = #tpu.dot_dimension_numbers<[1], [0], [0], [1], [0, 0, 1, 1], [], []>} : vector<8x8xf32>, vector<8x640xf32>, vector<8x640xf32> -> vector<8x640xf32>
    %81 = arith.addf %77, %80 : vector<8x640xf32>
    %c0_55 = arith.constant 0 : index
    %c147_56 = arith.constant 147 : index
    %82 = vector.load %arg9[%c0_55, %c147_56] : memref<8x896xf32, #tpu.memory_space<vmem>>, vector<8x640xf32>
    %83 = vector.extract_strided_slice %50 {offsets = [0, 64], sizes = [8, 8], strides = [1, 1]} : vector<8x72xf32> to vector<8x8xf32>
    %cst_57 = arith.constant dense<0.000000e+00> : vector<8x640xf32>
    %84 = tpu.matmul %83, %82, %cst_57 {dimension_numbers = #tpu.dot_dimension_numbers<[1], [0], [0], [1], [0, 0, 1, 1], [], []>} : vector<8x8xf32>, vector<8x640xf32>, vector<8x640xf32> -> vector<8x640xf32>
    %85 = arith.addf %81, %84 : vector<8x640xf32>
    %c0_58 = arith.constant 0 : index
    %c0_59 = arith.constant 0 : index
    %c0_60 = arith.constant 0 : index
    %86 = vector.load %arg7[%c0_58, %c0_59, %c0_60] : memref<1x8x1xf32, #tpu.memory_space<vmem>>, vector<1x8x1xf32>
    %87 = vector.shape_cast %86 : vector<1x8x1xf32> to vector<8x1xf32>
    %88 = vector.broadcast %87 : vector<8x1xf32> to vector<8x640xf32>
    %89 = arith.addf %85, %88 : vector<8x640xf32>
    %90 = arith.mulf %89, %3 : vector<8x640xf32>
    %c0_61 = arith.constant 0 : index
    %c128_62 = arith.constant 128 : index
    %91 = vector.load %arg8[%c0_61, %c128_62] : memref<8x896xf32, #tpu.memory_space<vmem>>, vector<8x640xf32>
    %92 = arith.addf %91, %90 : vector<8x640xf32>
    %c0_63 = arith.constant 0 : index
    %c128_64 = arith.constant 128 : index
    %93 = vector.load %arg8[%c0_63, %c128_64] : memref<8x896xf32, #tpu.memory_space<vmem>>, vector<8x640xf32>
    tpu.vector_store %arg8[%c0_63, %c128_64], %92 {strides = array<i32>} : memref<8x896xf32, #tpu.memory_space<vmem>>, vector<8x640xf32>,
    return
  }
  func.func @transform_0(%arg0: i32, %arg1: i32) -> (i32, i32) {
    %c0_i32 = arith.constant 0 : i32
    %c0_i32_0 = arith.constant 0 : i32
    %c0_i32_1 = arith.constant 0 : i32
    return %c0_i32, %c0_i32_0 : i32, i32
  }
  func.func @transform_1(%arg0: i32, %arg1: i32) -> (i32, i32) {
    %c0_i32 = arith.constant 0 : i32
    %c0_i32_0 = arith.constant 0 : i32
    return %c0_i32, %arg0 : i32, i32
  }
  func.func @transform_2(%arg0: i32, %arg1: i32) -> (i32, i32, i32) {
    %c0_i32 = arith.constant 0 : i32
    %c0_i32_0 = arith.constant 0 : i32
    %c0_i32_1 = arith.constant 0 : i32
    return %arg1, %c0_i32, %c0_i32_0 : i32, i32, i32
  }
  func.func @transform_3(%arg0: i32, %arg1: i32) -> (i32, i32, i32) {
    %c0_i32 = arith.constant 0 : i32
    %c0_i32_0 = arith.constant 0 : i32
    %c0_i32_1 = arith.constant 0 : i32
    return %arg1, %c0_i32, %c0_i32_0 : i32, i32, i32
  }
  func.func @transform_4(%arg0: i32, %arg1: i32) -> (i32, i32, i32) {
    %c0_i32 = arith.constant 0 : i32
    %c0_i32_0 = arith.constant 0 : i32
    %c0_i32_1 = arith.constant 0 : i32
    return %arg1, %c0_i32, %c0_i32_0 : i32, i32, i32
  }
  func.func @transform_5(%arg0: i32, %arg1: i32) -> (i32, i32, i32) {
    %c0_i32 = arith.constant 0 : i32
    %c0_i32_0 = arith.constant 0 : i32
    %c0_i32_1 = arith.constant 0 : i32
    return %arg1, %c0_i32, %c0_i32_0 : i32, i32, i32
  }
  func.func @transform_6(%arg0: i32, %arg1: i32) -> (i32, i32) {
    %c0_i32 = arith.constant 0 : i32
    %c0_i32_0 = arith.constant 0 : i32
    return %c0_i32, %arg0 : i32, i32
  }
}

</mosaic_0001>

<llo_original>
// kernel: projnet_m_forward.1
$region0: #{projnet_m_forward.1}
  #allocation0 [shape = 'u32[]', space=smem, size = 0x4, offset = 0x4, fixed_abs, tag = 'smem constant byte address 0x4 - core index']
  #allocation1 [shape = 'u32[144,128]{1,0:T(1,128)}', space=vmem, size = 0x12000, scoped, tag = 'internal scratch']
  #allocation2 [shape = 'f32[8,896]{1,0:T(8,128)}', space=vmem, size = 0x7000, scoped, tag = 'scratch operand']
  %s0 = inlined_call_operand.vmem [shape: f32[8,640], index: 0, kind: input, shape index: {}]
  %s1 = inlined_call_operand.vmem [shape: f32[8,896], index: 1, kind: input, shape index: {}]
  %s2 = inlined_call_operand.vmem [shape: f32[2,8,72], index: 2, kind: input, shape index: {}]
  %s3 = inlined_call_operand.vmem [shape: f32[2,8,1], index: 3, kind: input, shape index: {}]
  %s4 = inlined_call_operand.vmem [shape: f32[2,8,72], index: 4, kind: input, shape index: {}]
  %s5 = inlined_call_operand.vmem [shape: f32[2,8,1], index: 5, kind: input, shape index: {}]
  %s6 = inlined_call_operand.vmem [shape: f32[8,896], index: 6, kind: output, shape index: {}]
  %s7 = sld [smem:[#allocation0]]
  $region61: #{projnet_m_forward.1} parent=0
    _
  %s9 = ssub.s32 1, %s7
  %s10 = scalar_select 0, %s9, %s7
  loop: start=0, step=1, limit=4
  $region2: #{projnet_m_forward.1} parent=0 // loop_pre_header
    _
  $region3: #{projnet_m_forward.1} parent=0 // loop_header
    %s12 = sphi 0, %s16
    %p13 = scmp.ge.s32.totalorder %s12, 4
    %s19 = sphi 0, %s31
    %s20 = sphi 0, %s27
    %s21 = sphi 0, %s19
    %s22 = sphi 0, %s20
    %s23 = sphi 0, %s21
    %s24 = sphi 0, %s22
    %s32 = sphi 0, %s32
    %s34 = sphi 0, %s32
    %s35 = sphi 0, %s34
    %s49 = sphi 0, %s35
    %s55 = sphi 0, %s57
    %s58 = sphi 0, %s55
    %s59 = sphi 0, %s58
    %s75 = sphi 0, %s59
    %s81 = sphi 0, %s83
    %s84 = sphi 0, %s81
    %s85 = sphi 0, %s84
    %s101 = sphi 0, %s85
    %s107 = sphi 0, %s109
    %s110 = sphi 0, %s107
    %s111 = sphi 0, %s110
    %s127 = sphi 0, %s111
    %s133 = sphi 0, %s135
    %s136 = sphi 0, %s133
    %s137 = sphi 0, %s136
    %s153 = sphi 0, %s137
    %s159 = sphi 0, %s161
    %s162 = sphi 0, %s159
    %s163 = sphi 0, %s162
    %s179 = sphi 0, %s163
    %s185 = sphi 0, %s187
    %s188 = sphi 0, %s185
    %s189 = sphi 0, %s188
    %s205 = sphi 0, %s189
  $region4: #{projnet_m_forward.1} parent=0 // loop_header_branch
    %15 = sbr.rel (%p13) target = $region8
  $region5: #{projnet_m_forward.1} parent=0 // loop_body
    %s17 = ssub.s32 %s12, 1
    %s18 = ssub.s32 %s12, 2
    %s25 = sadd.s32 1, %s20
    %p26 = scmp.ge.s32.totalorder %s25, 2
    %s27 = scalar_select %p26, 0, %s25
    %s28 = sadd.s32 1, %s19
    %s29 = scalar_select %p26, %s28, %s19
    %p30 = scmp.ge.s32.totalorder %s29, 1
    %s31 = scalar_select %p30, 0, %s29
    %s33 = sadd.s32 %s32, 1
    %p36 = scmp.eq.s32.totalorder %s12, 1
    %p37 = scmp.ne.s32.totalorder %s32, %s34
    %p38 = scmp.eq.s32.totalorder %s12, 0
    %p39 = por %p37, %p38
    %p40 = scmp.ne.s32.totalorder %s32, %s34
    %p41 = scmp.eq.s32.totalorder %s17, 1
    %p42 = por %p40, %p41
    %p43 = scmp.ne.s32.totalorder %s34, %s35
    %p44 = scmp.eq.s32.totalorder %s17, 0
    %p45 = por %p43, %p44
    %p46 = scmp.ne.s32.totalorder %s34, %s35
    %p47 = scmp.eq.s32.totalorder %s18, 1
    %p48 = por %p46, %p47
    %p50 = scmp.ne.s32.totalorder %s35, %s49
    %p51 = scmp.eq.s32.totalorder %s18, 0
    %p52 = por %p50, %p51
    %s53 = ssub.s32 %s19, %s31
    %p54 = scmp.eq.s32.totalorder %s53, 0
    %s56 = sadd.s32 %s55, 1
    %s57 = scalar_select %p54, %s55, %s56
    %p60 = pneg %p54
    %p61 = scmp.eq.s32.totalorder %s12, 1
    %p62 = por %p60, %p61
    %p63 = scmp.ne.s32.totalorder %s55, %s58
    %p64 = scmp.eq.s32.totalorder %s12, 0
    %p65 = por %p63, %p64
    %p66 = scmp.ne.s32.totalorder %s55, %s58
    %p67 = scmp.eq.s32.totalorder %s17, 1
    %p68 = por %p66, %p67
    %p69 = scmp.ne.s32.totalorder %s58, %s59
    %p70 = scmp.eq.s32.totalorder %s17, 0
    %p71 = por %p69, %p70
    %p72 = scmp.ne.s32.totalorder %s58, %s59
    %p73 = scmp.eq.s32.totalorder %s18, 1
    %p74 = por %p72, %p73
    %p76 = scmp.ne.s32.totalorder %s59, %s75
    %p77 = scmp.eq.s32.totalorder %s18, 0
    %p78 = por %p76, %p77
    %s79 = ssub.s32 %s20, %s27
    %p80 = scmp.eq.s32.totalorder %s79, 0
    %s82 = sadd.s32 %s81, 1
    %s83 = scalar_select %p80, %s81, %s82
    %p86 = pneg %p80
    %p87 = scmp.eq.s32.totalorder %s12, 1
    %p88 = por %p86, %p87
    %p89 = scmp.ne.s32.totalorder %s81, %s84
    %p90 = scmp.eq.s32.totalorder %s12, 0
    %p91 = por %p89, %p90
    %p92 = scmp.ne.s32.totalorder %s81, %s84
    %p93 = scmp.eq.s32.totalorder %s17, 1
    %p94 = por %p92, %p93
    %p95 = scmp.ne.s32.totalorder %s84, %s85
    %p96 = scmp.eq.s32.totalorder %s17, 0
    %p97 = por %p95, %p96
    %p98 = scmp.ne.s32.totalorder %s84, %s85
    %p99 = scmp.eq.s32.totalorder %s18, 1
    %p100 = por %p98, %p99
    %p102 = scmp.ne.s32.totalorder %s85, %s101
    %p103 = scmp.eq.s32.totalorder %s18, 0
    %p104 = por %p102, %p103
    %s105 = ssub.s32 %s20, %s27
    %p106 = scmp.eq.s32.totalorder %s105, 0
    %s108 = sadd.s32 %s107, 1
    %s109 = scalar_select %p106, %s107, %s108
    %p112 = pneg %p106
    %p113 = scmp.eq.s32.totalorder %s12, 1
    %p114 = por %p112, %p113
    %p115 = scmp.ne.s32.totalorder %s107, %s110
    %p116 = scmp.eq.s32.totalorder %s12, 0
    %p117 = por %p115, %p116
    %p118 = scmp.ne.s32.totalorder %s107, %s110
    %p119 = scmp.eq.s32.totalorder %s17, 1
    %p120 = por %p118, %p119
    %p121 = scmp.ne.s32.totalorder %s110, %s111
    %p122 = scmp.eq.s32.totalorder %s17, 0
    %p123 = por %p121, %p122
    %p124 = scmp.ne.s32.totalorder %s110, %s111
    %p125 = scmp.eq.s32.totalorder %s18, 1
    %p126 = por %p124, %p125
    %p128 = scmp.ne.s32.totalorder %s111, %s127
    %p129 = scmp.eq.s32.totalorder %s18, 0
    %p130 = por %p128, %p129
    %s131 = ssub.s32 %s20, %s27
    %p132 = scmp.eq.s32.totalorder %s131, 0
    %s134 = sadd.s32 %s133, 1
    %s135 = scalar_select %p132, %s133, %s134
    %p138 = pneg %p132
    %p139 = scmp.eq.s32.totalorder %s12, 1
    %p140 = por %p138, %p139
    %p141 = scmp.ne.s32.totalorder %s133, %s136
    %p142 = scmp.eq.s32.totalorder %s12, 0
    %p143 = por %p141, %p142
    %p144 = scmp.ne.s32.totalorder %s133, %s136
    %p145 = scmp.eq.s32.totalorder %s17, 1
    %p146 = por %p144, %p145
    %p147 = scmp.ne.s32.totalorder %s136, %s137
    %p148 = scmp.eq.s32.totalorder %s17, 0
    %p149 = por %p147, %p148
    %p150 = scmp.ne.s32.totalorder %s136, %s137
    %p151 = scmp.eq.s32.totalorder %s18, 1
    %p152 = por %p150, %p151
    %p154 = scmp.ne.s32.totalorder %s137, %s153
    %p155 = scmp.eq.s32.totalorder %s18, 0
    %p156 = por %p154, %p155
    %s157 = ssub.s32 %s20, %s27
    %p158 = scmp.eq.s32.totalorder %s157, 0
    %s160 = sadd.s32 %s159, 1
    %s161 = scalar_select %p158, %s159, %s160
    %p164 = pneg %p158
    %p165 = scmp.eq.s32.totalorder %s12, 1
    %p166 = por %p164, %p165
    %p167 = scmp.ne.s32.totalorder %s159, %s162
    %p168 = scmp.eq.s32.totalorder %s12, 0
    %p169 = por %p167, %p168
    %p170 = scmp.ne.s32.totalorder %s159, %s162
    %p171 = scmp.eq.s32.totalorder %s17, 1
    %p172 = por %p170, %p171
    %p173 = scmp.ne.s32.totalorder %s162, %s163
    %p174 = scmp.eq.s32.totalorder %s17, 0
    %p175 = por %p173, %p174
    %p176 = scmp.ne.s32.totalorder %s162, %s163
    %p177 = scmp.eq.s32.totalorder %s18, 1
    %p178 = por %p176, %p177
    %p180 = scmp.ne.s32.totalorder %s163, %s179
    %p181 = scmp.eq.s32.totalorder %s18, 0
    %p182 = por %p180, %p181
    %s183 = ssub.s32 %s19, %s31
    %p184 = scmp.eq.s32.totalorder %s183, 0
    %s186 = sadd.s32 %s185, 1
    %s187 = scalar_select %p184, %s185, %s186
    %p190 = pneg %p184
    %p191 = scmp.eq.s32.totalorder %s12, 1
    %p192 = por %p190, %p191
    %p193 = scmp.ne.s32.totalorder %s185, %s188
    %p194 = scmp.eq.s32.totalorder %s12, 0
    %p195 = por %p193, %p194
    %p196 = scmp.ne.s32.totalorder %s185, %s188
    %p197 = scmp.eq.s32.totalorder %s17, 1
    %p198 = por %p196, %p197
    %p199 = scmp.ne.s32.totalorder %s188, %s189
    %p200 = scmp.eq.s32.totalorder %s17, 0
    %p201 = por %p199, %p200
    %p202 = scmp.ne.s32.totalorder %s188, %s189
    %p203 = scmp.eq.s32.totalorder %s18, 1
    %p204 = por %p202, %p203
    %p206 = scmp.ne.s32.totalorder %s189, %s205
    %p207 = scmp.eq.s32.totalorder %s18, 0
    %p208 = por %p206, %p207
    %p209 = scmp.le.s32.totalorder 1, %s12
    %p210 = scmp.lt.s32.totalorder %s12, 3
    %p211 = pnand %p209, %p210
    %p212 = pneg %p211
    // Predicated region
    $region9: #{projnet_m_forward.1} parent=5 // pred_check
      _
    $region10: #{projnet_m_forward.1} parent=5 // pred_check_branch
      %214 = sbr.rel (%p211) target = $region12
    $region11: #{projnet_m_forward.1} parent=5 // pred_region
      %s215 = ssub.s32 %s12, 1
      // Predicated region
      $region13: #{projnet_m_forward.1} parent=11 // pred_check
        %p216 = pneg %p45
      $region14: #{projnet_m_forward.1} parent=11 // pred_check_branch
        %218 = sbr.rel (%p216) target = $region16
      $region15: #{projnet_m_forward.1} parent=11 // pred_region
        _
      $region16: #{projnet_m_forward.1} parent=11 // pred_fallthru
        _
      // Predicated region
      $region17: #{projnet_m_forward.1} parent=11 // pred_check
        %p219 = pneg %p71
      $region18: #{projnet_m_forward.1} parent=11 // pred_check_branch
        %221 = sbr.rel (%p219) target = $region20
      $region19: #{projnet_m_forward.1} parent=11 // pred_region
        %s222 = smul.u32 7, %s21
        %p223 = scmp.lt.s32.totalorder %s222, 6
        %s224 = scalar_select %p223, %s222, 6
        %s225 = smul.addr %s224, 8
        %s226 = scalar_lea.vmem %s1, %s225
        %s227 = smul.u32 7, %s21
      $region20: #{projnet_m_forward.1} parent=11 // pred_fallthru
        _
    $region12: #{projnet_m_forward.1} parent=5 // pred_fallthru
      _
    %p228 = scmp.lt.s32.totalorder %s12, 2
    // Predicated region
    $region21: #{projnet_m_forward.1} parent=5 // pred_check
      %p229 = pneg %p228
    $region22: #{projnet_m_forward.1} parent=5 // pred_check_branch
      %231 = sbr.rel (%p229) target = $region24
    $region23: #{projnet_m_forward.1} parent=5 // pred_region
      // Predicated region
      $region25: #{projnet_m_forward.1} parent=23 // pred_check
        %p232 = pneg %p91
      $region26: #{projnet_m_forward.1} parent=23 // pred_check_branch
        %234 = sbr.rel (%p232) target = $region28
      $region27: #{projnet_m_forward.1} parent=23 // pred_region
        %p235 = scmp.lt.s32.totalorder %s20, 1
        %s236 = scalar_select %p235, %s20, 1
        %s237 = smul.addr %s236, 8
        %s238 = scalar_lea.vmem %s2, %s237
      $region28: #{projnet_m_forward.1} parent=23 // pred_fallthru
        _
      // Predicated region
      $region29: #{projnet_m_forward.1} parent=23 // pred_check
        %p239 = pneg %p117
      $region30: #{projnet_m_forward.1} parent=23 // pred_check_branch
        %241 = sbr.rel (%p239) target = $region32
      $region31: #{projnet_m_forward.1} parent=23 // pred_region
        %p242 = scmp.lt.s32.totalorder %s20, 1
        %s243 = scalar_select %p242, %s20, 1
        %s244 = smul.addr %s243, 8
        %s245 = scalar_lea.vmem %s3, %s244
      $region32: #{projnet_m_forward.1} parent=23 // pred_fallthru
        _
      // Predicated region
      $region33: #{projnet_m_forward.1} parent=23 // pred_check
        %p246 = pneg %p143
      $region34: #{projnet_m_forward.1} parent=23 // pred_check_branch
        %248 = sbr.rel (%p246) target = $region36
      $region35: #{projnet_m_forward.1} parent=23 // pred_region
        %p249 = scmp.lt.s32.totalorder %s20, 1
        %s250 = scalar_select %p249, %s20, 1
        %s251 = smul.addr %s250, 8
        %s252 = scalar_lea.vmem %s4, %s251
      $region36: #{projnet_m_forward.1} parent=23 // pred_fallthru
        _
      // Predicated region
      $region37: #{projnet_m_forward.1} parent=23 // pred_check
        %p253 = pneg %p169
      $region38: #{projnet_m_forward.1} parent=23 // pred_check_branch
        %255 = sbr.rel (%p253) target = $region40
      $region39: #{projnet_m_forward.1} parent=23 // pred_region
        %p256 = scmp.lt.s32.totalorder %s20, 1
        %s257 = scalar_select %p256, %s20, 1
        %s258 = smul.addr %s257, 8
        %s259 = scalar_lea.vmem %s5, %s258
      $region40: #{projnet_m_forward.1} parent=23 // pred_fallthru
        _
    $region24: #{projnet_m_forward.1} parent=5 // pred_fallthru
      _
    %p260 = scmp.le.s32.totalorder 1, %s12
    %p261 = scmp.lt.s32.totalorder %s12, 3
    %p262 = pnand %p260, %p261
    %p263 = pneg %p262
    // Predicated region
    $region41: #{projnet_m_forward.1} parent=5 // pred_check
      _
    $region42: #{projnet_m_forward.1} parent=5 // pred_check_branch
      %265 = sbr.rel (%p262) target = $region44
    $region43: #{projnet_m_forward.1} parent=5 // pred_region
      %s266 = ssub.s32 %s12, 1
      %p267 = pneg %p45
      %p268 = pneg %p42
      %s269 = smul.u32 7, %s21
      %p270 = scmp.lt.s32.totalorder %s269, 6
      %s271 = scalar_select %p270, %s269, 6
      %s272 = smul.addr %s271, 8
      %s273 = scalar_lea.vmem %s1, %s272
      %p274 = pneg %p71
      %p275 = pneg %p68
      %p276 = scmp.lt.s32.totalorder %s22, 1
      %s277 = scalar_select %p276, %s22, 1
      %s278 = smul.addr %s277, 8
      %s279 = scalar_lea.vmem %s2, %s278
      %p280 = pneg %p97
      %p281 = pneg %p94
      %p282 = scmp.lt.s32.totalorder %s22, 1
      %s283 = scalar_select %p282, %s22, 1
      %s284 = smul.addr %s283, 8
      %s285 = scalar_lea.vmem %s3, %s284
      %p286 = pneg %p123
      %p287 = pneg %p120
      %p288 = scmp.lt.s32.totalorder %s22, 1
      %s289 = scalar_select %p288, %s22, 1
      %s290 = smul.addr %s289, 8
      %s291 = scalar_lea.vmem %s4, %s290
      %p292 = pneg %p149
      %p293 = pneg %p146
      %p294 = scmp.lt.s32.totalorder %s22, 1
      %s295 = scalar_select %p294, %s22, 1
      %s296 = smul.addr %s295, 8
      %s297 = scalar_lea.vmem %s5, %s296
      %p298 = pneg %p175
      %p299 = pneg %p172
      %p300 = pneg %p201
      %p301 = pneg %p198
      %s302 = smul.u32 7, %s21
      %p303 = scmp.lt.s32.totalorder %s302, 6
      %s304 = scalar_select %p303, %s302, 6
      %s305 = smul.addr %s304, 8
      %s306 = scalar_lea.vmem %s6, %s305
      %s307 = smul.u32 7, %s21
      %p308 = scmp.lt.s32.totalorder %s307, 6
      %s309 = scalar_select %p308, %s307, 6
      %s310 = smul.addr %s309, 8
      %s311 = scalar_lea.vmem %s1, %s310
      %s312 = smul.u32 7, %s21
      %p313 = scmp.lt.s32.totalorder %s22, 1
      %s314 = scalar_select %p313, %s22, 1
      %s315 = smul.addr %s314, 8
      %s316 = scalar_lea.vmem %s2, %s315
      %p317 = scmp.lt.s32.totalorder %s22, 1
      %s318 = scalar_select %p317, %s22, 1
      %s319 = smul.addr %s318, 8
      %s320 = scalar_lea.vmem %s3, %s319
      %p321 = scmp.lt.s32.totalorder %s22, 1
      %s322 = scalar_select %p321, %s22, 1
      %s323 = smul.addr %s322, 8
      %s324 = scalar_lea.vmem %s4, %s323
      %p325 = scmp.lt.s32.totalorder %s22, 1
      %s326 = scalar_select %p325, %s22, 1
      %s327 = smul.addr %s326, 8
      %s328 = scalar_lea.vmem %s5, %s327
      %s329 = smul.u32 7, %s21
      %p330 = scmp.lt.s32.totalorder %s329, 6
      %s331 = scalar_select %p330, %s329, 6
      %s332 = smul.addr %s331, 8
      %s333 = scalar_lea.vmem %s6, %s332
      %s334 = smul.u32 7, %s21
      %p335 = scmp.eq.s32.totalorder %s22, 0
      // Predicated region
      $region45: #{projnet_m_forward.1} parent=43 // pred_check
        %p336 = pneg %p335
      $region46: #{projnet_m_forward.1} parent=43 // pred_check_branch
        %338 = sbr.rel (%p336) target = $region48
      $region47: #{projnet_m_forward.1} parent=43 // pred_region
        %v339 = vld [vmem:[%s311] sm:$0xff]
        %v340 = vld [vmem:[%s311 + $0x8] sm:$0xff]
        %v341 = vld [vmem:[%s311 + $0x10] sm:$0xff]
        %v342 = vld [vmem:[%s311 + $0x18] sm:$0xff]
        %v343 = vld [vmem:[%s311 + $0x20] sm:$0xff]
        %v344 = vld [vmem:[%s311 + $0x28] sm:$0xff]
        %v345 = vld [vmem:[%s311 + $0x30] sm:$0xff]
        %346 = vst [vmem:[%s333] sm:$0xff] %v339
        %347 = vst [vmem:[%s333 + $0x8] sm:$0xff] %v340
        %348 = vst [vmem:[%s333 + $0x10] sm:$0xff] %v341
        %349 = vst [vmem:[%s333 + $0x18] sm:$0xff] %v342
        %350 = vst [vmem:[%s333 + $0x20] sm:$0xff] %v343
        %351 = vst [vmem:[%s333 + $0x28] sm:$0xff] %v344
        %352 = vst [vmem:[%s333 + $0x30] sm:$0xff] %v345
        %353 = vst [vmem:[#allocation2] sm:$0xff] 0.0
        %354 = vst [vmem:[#allocation2 + $0x30] sm:$0xff] 0.0
      $region48: #{projnet_m_forward.1} parent=43 // pred_fallthru
        _
      %v355 = vld [vmem:[%s0] sm:$0xff]
      %v356 = vld [vmem:[%s0 + $0x8] sm:$0xff]
      %v357 = vld [vmem:[%s0 + $0x10] sm:$0xff]
      %v358 = vld [vmem:[%s0 + $0x18] sm:$0xff]
      %v359 = vld [vmem:[%s0 + $0x20] sm:$0xff]
      %v360 = vld [vmem:[%s316] sm:$0xff]
      %v361 = vld [vmem:[%s333] sm:$0xff]
      %v362 = vld [vmem:[%s333 + $0x8] sm:$0xff]
      %v363 = vld [vmem:[%s333 + $0x10] sm:$0xff]
      %v364 = vld [vmem:[%s333 + $0x18] sm:$0xff]
      %v365 = vld [vmem:[%s333 + $0x20] sm:$0xff]
      %v366 = vld [vmem:[%s333 + $0x28] sm:$0xff]
      %368 = vrot.lane.b32.xlu0 %v360, 120
      %v369 = vpop.permute.xlu0 %368
      %376 = vrot.lane.b32.xlu0 %v361, 18
      %v377 = vpop.permute.xlu0 %376
      %378 = vrot.lane.b32.xlu0 %v362, 18
      %v379 = vpop.permute.xlu0 %378
      %380 = vrot.lane.b32.xlu0 %v363, 18
      %v381 = vpop.permute.xlu0 %380
      %382 = vrot.lane.b32.xlu0 %v364, 18
      %v383 = vpop.permute.xlu0 %382
      %384 = vrot.lane.b32.xlu0 %v365, 18
      %v385 = vpop.permute.xlu0 %384
      %386 = vrot.lane.b32.xlu0 %v366, 18
      %v387 = vpop.permute.xlu0 %386
      %vm388 = vcmask 146432
      %v389 = vsel %vm388, %v377, %v379
      %v390 = vsel %vm388, %v379, %v381
      %v391 = vsel %vm388, %v381, %v383
      %v392 = vsel %vm388, %v383, %v385
      %v393 = vsel %vm388, %v385, %v387
      %vm399 = vcmask 64512
      %v400 = vsel %vm399, %v369, 0
      %402 = vmatprep.subr.mxu0 0.0
      %403 = vmatpush1.msra.mxu0 0.0
      %404 = vmatprep.subr.mxu0 0.0
      %405 = vmatpush1.msra.mxu0 0.0
      %406 = vmatprep.subr.mxu0 0.0
      %407 = vmatpush1.msra.mxu0 0.0
      %408 = vmatprep.subr.mxu0 0.0
      %409 = vmatpush1.msra.mxu0 0.0
      %410 = vmatprep.subr.mxu0 0.0
      %411 = vmatpush1.msra.mxu0 0.0
      %412 = vmatprep.subr.mxu0 0.0
      %413 = vmatpush1.msra.mxu0 0.0
      %414 = vmatprep.subr.mxu0 0.0
      %415 = vmatpush1.msra.mxu0 0.0
      %416 = vmatprep.subr.mxu0 0.0
      %417 = vmatpush1.msra.mxu0 0.0
      %418 = vmatprep.subr.mxu0 0.0
      %419 = vmatpush1.msra.mxu0 0.0
      %420 = vmatprep.subr.mxu0 0.0
      %421 = vmatpush1.msra.mxu0 0.0
      %422 = vmatprep.subr.mxu0 0.0
      %423 = vmatpush1.msra.mxu0 0.0
      %424 = vmatprep.subr.mxu0 0.0
      %425 = vmatpush1.msra.mxu0 0.0
      %426 = vmatprep.subr.mxu0 0.0
      %427 = vmatpush1.msra.mxu0 0.0
      %428 = vmatprep.subr.mxu0 0.0
      %429 = vmatpush1.msra.mxu0 0.0
      %430 = vmatprep.subr.mxu0 0.0
      %431 = vmatpush1.msra.mxu0 0.0
      %432 = vmatprep.subr.mxu0 %v390
      %433 = vmatpush1.msra.mxu0 %v389
      %434 = vmatprep.subr.mxu0 0.0
      %435 = vmatpush2.msra.mxu0 0.0
      %436 = vmatprep.subr.mxu0 0.0
      %437 = vmatpush2.msra.mxu0 0.0
      %438 = vmatprep.subr.mxu0 0.0
      %439 = vmatpush2.msra.mxu0 0.0
      %440 = vmatprep.subr.mxu0 0.0
      %441 = vmatpush2.msra.mxu0 0.0
      %442 = vmatprep.subr.mxu0 0.0
      %443 = vmatpush2.msra.mxu0 0.0
      %444 = vmatprep.subr.mxu0 0.0
      %445 = vmatpush2.msra.mxu0 0.0
      %446 = vmatprep.subr.mxu0 0.0
      %447 = vmatpush2.msra.mxu0 0.0
      %448 = vmatprep.subr.mxu0 0.0
      %449 = vmatpush2.msra.mxu0 0.0
      %450 = vmatprep.subr.mxu0 0.0
      %451 = vmatpush2.msra.mxu0 0.0
      %452 = vmatprep.subr.mxu0 0.0
      %453 = vmatpush2.msra.mxu0 0.0
      %454 = vmatprep.subr.mxu0 0.0
      %455 = vmatpush2.msra.mxu0 0.0
      %456 = vmatprep.subr.mxu0 0.0
      %457 = vmatpush2.msra.mxu0 0.0
      %458 = vmatprep.subr.mxu0 0.0
      %459 = vmatpush2.msra.mxu0 0.0
      %460 = vmatprep.subr.mxu0 0.0
      %461 = vmatpush2.msra.mxu0 0.0
      %462 = vmatprep.subr.mxu0 0.0
      %463 = vmatpush2.msra.mxu0 0.0
      %464 = vmatprep.subr.mxu0 0.0
      %465 = vmatpush2.msra.mxu0 0.0
      %466 = vmatprep.mubr.f32.mxu0 0.0
      %467 = vmatmul.mubr.f32.gmra.mxu0 %v400
      %v468 = vpop.f32.mrf.mxu0
      %v469 = vadd.f32 0.0, %v468
      %v470 = vpop.f32.mrf.mxu0
      %v471 = vadd.f32 0.0, %v470
      %472 = vdwg.mxu0
      %473 = vmatprep.subr.mxu0 0.0
      %474 = vmatpush1.msra.mxu0 0.0
      %475 = vmatprep.subr.mxu0 0.0
      %476 = vmatpush1.msra.mxu0 0.0
      %477 = vmatprep.subr.mxu0 0.0
      %478 = vmatpush1.msra.mxu0 0.0
      %479 = vmatprep.subr.mxu0 0.0
      %480 = vmatpush1.msra.mxu0 0.0
      %481 = vmatprep.subr.mxu0 0.0
      %482 = vmatpush1.msra.mxu0 0.0
      %483 = vmatprep.subr.mxu0 0.0
      %484 = vmatpush1.msra.mxu0 0.0
      %485 = vmatprep.subr.mxu0 0.0
      %486 = vmatpush1.msra.mxu0 0.0
      %487 = vmatprep.subr.mxu0 0.0
      %488 = vmatpush1.msra.mxu0 0.0
      %489 = vmatprep.subr.mxu0 0.0
      %490 = vmatpush1.msra.mxu0 0.0
      %491 = vmatprep.subr.mxu0 0.0
      %492 = vmatpush1.msra.mxu0 0.0
      %493 = vmatprep.subr.mxu0 0.0
      %494 = vmatpush1.msra.mxu0 0.0
      %495 = vmatprep.subr.mxu0 0.0
      %496 = vmatpush1.msra.mxu0 0.0
      %497 = vmatprep.subr.mxu0 0.0
      %498 = vmatpush1.msra.mxu0 0.0
      %499 = vmatprep.subr.mxu0 0.0
      %500 = vmatpush1.msra.mxu0 0.0
      %501 = vmatprep.subr.mxu0 0.0
      %502 = vmatpush1.msra.mxu0 0.0
      %503 = vmatprep.subr.mxu0 %v392
      %504 = vmatpush1.msra.mxu0 %v391
      %505 = vmatprep.subr.mxu0 0.0
      %506 = vmatpush2.msra.mxu0 0.0
      %507 = vmatprep.subr.mxu0 0.0
      %508 = vmatpush2.msra.mxu0 0.0
      %509 = vmatprep.subr.mxu0 0.0
      %510 = vmatpush2.msra.mxu0 0.0
      %511 = vmatprep.subr.mxu0 0.0
      %512 = vmatpush2.msra.mxu0 0.0
      %513 = vmatprep.subr.mxu0 0.0
      %514 = vmatpush2.msra.mxu0 0.0
      %515 = vmatprep.subr.mxu0 0.0
      %516 = vmatpush2.msra.mxu0 0.0
      %517 = vmatprep.subr.mxu0 0.0
      %518 = vmatpush2.msra.mxu0 0.0
      %519 = vmatprep.subr.mxu0 0.0
      %520 = vmatpush2.msra.mxu0 0.0
      %521 = vmatprep.subr.mxu0 0.0
      %522 = vmatpush2.msra.mxu0 0.0
      %523 = vmatprep.subr.mxu0 0.0
      %524 = vmatpush2.msra.mxu0 0.0
      %525 = vmatprep.subr.mxu0 0.0
      %526 = vmatpush2.msra.mxu0 0.0
      %527 = vmatprep.subr.mxu0 0.0
      %528 = vmatpush2.msra.mxu0 0.0
      %529 = vmatprep.subr.mxu0 0.0
      %530 = vmatpush2.msra.mxu0 0.0
      %531 = vmatprep.subr.mxu0 0.0
      %532 = vmatpush2.msra.mxu0 0.0
      %533 = vmatprep.subr.mxu0 0.0
      %534 = vmatpush2.msra.mxu0 0.0
      %535 = vmatprep.subr.mxu0 0.0
      %536 = vmatpush2.msra.mxu0 0.0
      %537 = vmatprep.mubr.f32.mxu0 0.0
      %538 = vmatmul.mubr.f32.gmra.mxu0 %v400
      %v539 = vpop.f32.mrf.mxu0
      %v540 = vadd.f32 0.0, %v539
      %v541 = vpop.f32.mrf.mxu0
      %v542 = vadd.f32 0.0, %v541
      %543 = vdwg.mxu0
      %544 = vmatprep.subr.mxu0 0.0
      %545 = vmatpush1.msra.mxu0 0.0
      %546 = vmatprep.subr.mxu0 0.0
      %547 = vmatpush1.msra.mxu0 0.0
      %548 = vmatprep.subr.mxu0 0.0
      %549 = vmatpush1.msra.mxu0 0.0
      %550 = vmatprep.subr.mxu0 0.0
      %551 = vmatpush1.msra.mxu0 0.0
      %552 = vmatprep.subr.mxu0 0.0
      %553 = vmatpush1.msra.mxu0 0.0
      %554 = vmatprep.subr.mxu0 0.0
      %555 = vmatpush1.msra.mxu0 0.0
      %556 = vmatprep.subr.mxu0 0.0
      %557 = vmatpush1.msra.mxu0 0.0
      %558 = vmatprep.subr.mxu0 0.0
      %559 = vmatpush1.msra.mxu0 0.0
      %560 = vmatprep.subr.mxu0 0.0
      %561 = vmatpush1.msra.mxu0 0.0
      %562 = vmatprep.subr.mxu0 0.0
      %563 = vmatpush1.msra.mxu0 0.0
      %564 = vmatprep.subr.mxu0 0.0
      %565 = vmatpush1.msra.mxu0 0.0
      %566 = vmatprep.subr.mxu0 0.0
      %567 = vmatpush1.msra.mxu0 0.0
      %568 = vmatprep.subr.mxu0 0.0
      %569 = vmatpush1.msra.mxu0 0.0
      %570 = vmatprep.subr.mxu0 0.0
      %571 = vmatpush1.msra.mxu0 0.0
      %572 = vmatprep.subr.mxu0 0.0
      %573 = vmatpush1.msra.mxu0 0.0
      %574 = vmatprep.subr.mxu0 0.0
      %575 = vmatpush1.msra.mxu0 %v393
      %576 = vmatprep.subr.mxu0 0.0
      %577 = vmatpush2.msra.mxu0 0.0
      %578 = vmatprep.subr.mxu0 0.0
      %579 = vmatpush2.msra.mxu0 0.0
      %580 = vmatprep.subr.mxu0 0.0
      %581 = vmatpush2.msra.mxu0 0.0
      %582 = vmatprep.subr.mxu0 0.0
      %583 = vmatpush2.msra.mxu0 0.0
      %584 = vmatprep.subr.mxu0 0.0
      %585 = vmatpush2.msra.mxu0 0.0
      %586 = vmatprep.subr.mxu0 0.0
      %587 = vmatpush2.msra.mxu0 0.0
      %588 = vmatprep.subr.mxu0 0.0
      %589 = vmatpush2.msra.mxu0 0.0
      %590 = vmatprep.subr.mxu0 0.0
      %591 = vmatpush2.msra.mxu0 0.0
      %592 = vmatprep.subr.mxu0 0.0
      %593 = vmatpush2.msra.mxu0 0.0
      %594 = vmatprep.subr.mxu0 0.0
      %595 = vmatpush2.msra.mxu0 0.0
      %596 = vmatprep.subr.mxu0 0.0
      %597 = vmatpush2.msra.mxu0 0.0
      %598 = vmatprep.subr.mxu0 0.0
      %599 = vmatpush2.msra.mxu0 0.0
      %600 = vmatprep.subr.mxu0 0.0
      %601 = vmatpush2.msra.mxu0 0.0
      %602 = vmatprep.subr.mxu0 0.0
      %603 = vmatpush2.msra.mxu0 0.0
      %604 = vmatprep.subr.mxu0 0.0
      %605 = vmatpush2.msra.mxu0 0.0
      %606 = vmatprep.subr.mxu0 0.0
      %607 = vmatpush2.msra.mxu0 0.0
      %608 = vmatprep.mubr.f32.mxu0 0.0
      %609 = vmatmul.mubr.f32.gmra.mxu0 %v400
      %v610 = vpop.f32.mrf.mxu0
      %v611 = vadd.f32 0.0, %v610
      %v612 = vpop.f32.mrf.mxu0
      %613 = vdwg.mxu0
      %614 = vrot.lane.b32.xlu0 %v361, 19
      %v615 = vpop.permute.xlu0 %614
      %616 = vrot.lane.b32.xlu0 %v362, 19
      %v617 = vpop.permute.xlu0 %616
      %618 = vrot.lane.b32.xlu0 %v363, 19
      %v619 = vpop.permute.xlu0 %618
      %620 = vrot.lane.b32.xlu0 %v364, 19
      %v621 = vpop.permute.xlu0 %620
      %622 = vrot.lane.b32.xlu0 %v365, 19
      %v623 = vpop.permute.xlu0 %622
      %624 = vrot.lane.b32.xlu0 %v366, 19
      %v625 = vpop.permute.xlu0 %624
      %vm626 = vcmask 154624
      %v627 = vsel %vm626, %v615, %v617
      %v628 = vsel %vm626, %v617, %v619
      %v629 = vsel %vm626, %v619, %v621
      %v630 = vsel %vm626, %v621, %v623
      %v631 = vsel %vm626, %v623, %v625
      %v637 = vsel %vm399, %v360, 0
      %639 = vmatprep.subr.mxu0 0.0
      %640 = vmatpush1.msra.mxu0 0.0
      %641 = vmatprep.subr.mxu0 0.0
      %642 = vmatpush1.msra.mxu0 0.0
      %643 = vmatprep.subr.mxu0 0.0
      %644 = vmatpush1.msra.mxu0 0.0
      %645 = vmatprep.subr.mxu0 0.0
      %646 = vmatpush1.msra.mxu0 0.0
      %647 = vmatprep.subr.mxu0 0.0
      %648 = vmatpush1.msra.mxu0 0.0
      %649 = vmatprep.subr.mxu0 0.0
      %650 = vmatpush1.msra.mxu0 0.0
      %651 = vmatprep.subr.mxu0 0.0
      %652 = vmatpush1.msra.mxu0 0.0
      %653 = vmatprep.subr.mxu0 0.0
      %654 = vmatpush1.msra.mxu0 0.0
      %655 = vmatprep.subr.mxu0 0.0
      %656 = vmatpush1.msra.mxu0 0.0
      %657 = vmatprep.subr.mxu0 0.0
      %658 = vmatpush1.msra.mxu0 0.0
      %659 = vmatprep.subr.mxu0 0.0
      %660 = vmatpush1.msra.mxu0 0.0
      %661 = vmatprep.subr.mxu0 0.0
      %662 = vmatpush1.msra.mxu0 0.0
      %663 = vmatprep.subr.mxu0 0.0
      %664 = vmatpush1.msra.mxu0 0.0
      %665 = vmatprep.subr.mxu0 0.0
      %666 = vmatpush1.msra.mxu0 0.0
      %667 = vmatprep.subr.mxu0 0.0
      %668 = vmatpush1.msra.mxu0 0.0
      %669 = vmatprep.subr.mxu0 %v628
      %670 = vmatpush1.msra.mxu0 %v627
      %671 = vmatprep.subr.mxu0 0.0
      %672 = vmatpush2.msra.mxu0 0.0
      %673 = vmatprep.subr.mxu0 0.0
      %674 = vmatpush2.msra.mxu0 0.0
      %675 = vmatprep.subr.mxu0 0.0
      %676 = vmatpush2.msra.mxu0 0.0
      %677 = vmatprep.subr.mxu0 0.0
      %678 = vmatpush2.msra.mxu0 0.0
      %679 = vmatprep.subr.mxu0 0.0
      %680 = vmatpush2.msra.mxu0 0.0
      %681 = vmatprep.subr.mxu0 0.0
      %682 = vmatpush2.msra.mxu0 0.0
      %683 = vmatprep.subr.mxu0 0.0
      %684 = vmatpush2.msra.mxu0 0.0
      %685 = vmatprep.subr.mxu0 0.0
      %686 = vmatpush2.msra.mxu0 0.0
      %687 = vmatprep.subr.mxu0 0.0
      %688 = vmatpush2.msra.mxu0 0.0
      %689 = vmatprep.subr.mxu0 0.0
      %690 = vmatpush2.msra.mxu0 0.0
      %691 = vmatprep.subr.mxu0 0.0
      %692 = vmatpush2.msra.mxu0 0.0
      %693 = vmatprep.subr.mxu0 0.0
      %694 = vmatpush2.msra.mxu0 0.0
      %695 = vmatprep.subr.mxu0 0.0
      %696 = vmatpush2.msra.mxu0 0.0
      %697 = vmatprep.subr.mxu0 0.0
      %698 = vmatpush2.msra.mxu0 0.0
      %699 = vmatprep.subr.mxu0 0.0
      %700 = vmatpush2.msra.mxu0 0.0
      %701 = vmatprep.subr.mxu0 0.0
      %702 = vmatpush2.msra.mxu0 0.0
      %703 = vmatprep.mubr.f32.mxu0 0.0
      %704 = vmatmul.mubr.f32.gmra.mxu0 %v637
      %v705 = vpop.f32.mrf.mxu0
      %v706 = vadd.f32 %v469, %v705
      %v707 = vpop.f32.mrf.mxu0
      %v708 = vadd.f32 %v471, %v707
      %709 = vdwg.mxu0
      %710 = vmatprep.subr.mxu0 0.0
      %711 = vmatpush1.msra.mxu0 0.0
      %712 = vmatprep.subr.mxu0 0.0
      %713 = vmatpush1.msra.mxu0 0.0
      %714 = vmatprep.subr.mxu0 0.0
      %715 = vmatpush1.msra.mxu0 0.0
      %716 = vmatprep.subr.mxu0 0.0
      %717 = vmatpush1.msra.mxu0 0.0
      %718 = vmatprep.subr.mxu0 0.0
      %719 = vmatpush1.msra.mxu0 0.0
      %720 = vmatprep.subr.mxu0 0.0
      %721 = vmatpush1.msra.mxu0 0.0
      %722 = vmatprep.subr.mxu0 0.0
      %723 = vmatpush1.msra.mxu0 0.0
      %724 = vmatprep.subr.mxu0 0.0
      %725 = vmatpush1.msra.mxu0 0.0
      %726 = vmatprep.subr.mxu0 0.0
      %727 = vmatpush1.msra.mxu0 0.0
      %728 = vmatprep.subr.mxu0 0.0
      %729 = vmatpush1.msra.mxu0 0.0
      %730 = vmatprep.subr.mxu0 0.0
      %731 = vmatpush1.msra.mxu0 0.0
      %732 = vmatprep.subr.mxu0 0.0
      %733 = vmatpush1.msra.mxu0 0.0
      %734 = vmatprep.subr.mxu0 0.0
      %735 = vmatpush1.msra.mxu0 0.0
      %736 = vmatprep.subr.mxu0 0.0
      %737 = vmatpush1.msra.mxu0 0.0
      %738 = vmatprep.subr.mxu0 0.0
      %739 = vmatpush1.msra.mxu0 0.0
      %740 = vmatprep.subr.mxu0 %v630
      %741 = vmatpush1.msra.mxu0 %v629
      %742 = vmatprep.subr.mxu0 0.0
      %743 = vmatpush2.msra.mxu0 0.0
      %744 = vmatprep.subr.mxu0 0.0
      %745 = vmatpush2.msra.mxu0 0.0
      %746 = vmatprep.subr.mxu0 0.0
      %747 = vmatpush2.msra.mxu0 0.0
      %748 = vmatprep.subr.mxu0 0.0
      %749 = vmatpush2.msra.mxu0 0.0
      %750 = vmatprep.subr.mxu0 0.0
      %751 = vmatpush2.msra.mxu0 0.0
      %752 = vmatprep.subr.mxu0 0.0
      %753 = vmatpush2.msra.mxu0 0.0
      %754 = vmatprep.subr.mxu0 0.0
      %755 = vmatpush2.msra.mxu0 0.0
      %756 = vmatprep.subr.mxu0 0.0
      %757 = vmatpush2.msra.mxu0 0.0
      %758 = vmatprep.subr.mxu0 0.0
      %759 = vmatpush2.msra.mxu0 0.0
      %760 = vmatprep.subr.mxu0 0.0
      %761 = vmatpush2.msra.mxu0 0.0
      %762 = vmatprep.subr.mxu0 0.0
      %763 = vmatpush2.msra.mxu0 0.0
      %764 = vmatprep.subr.mxu0 0.0
      %765 = vmatpush2.msra.mxu0 0.0
      %766 = vmatprep.subr.mxu0 0.0
      %767 = vmatpush2.msra.mxu0 0.0
      %768 = vmatprep.subr.mxu0 0.0
      %769 = vmatpush2.msra.mxu0 0.0
      %770 = vmatprep.subr.mxu0 0.0
      %771 = vmatpush2.msra.mxu0 0.0
      %772 = vmatprep.subr.mxu0 0.0
      %773 = vmatpush2.msra.mxu0 0.0
      %774 = vmatprep.mubr.f32.mxu0 0.0
      %775 = vmatmul.mubr.f32.gmra.mxu0 %v637
      %v776 = vpop.f32.mrf.mxu0
      %v777 = vadd.f32 %v540, %v776
      %v778 = vpop.f32.mrf.mxu0
      %v779 = vadd.f32 %v542, %v778
      %780 = vdwg.mxu0
      %781 = vmatprep.subr.mxu0 0.0
      %782 = vmatpush1.msra.mxu0 0.0
      %783 = vmatprep.subr.mxu0 0.0
      %784 = vmatpush1.msra.mxu0 0.0
      %785 = vmatprep.subr.mxu0 0.0
      %786 = vmatpush1.msra.mxu0 0.0
      %787 = vmatprep.subr.mxu0 0.0
      %788 = vmatpush1.msra.mxu0 0.0
      %789 = vmatprep.subr.mxu0 0.0
      %790 = vmatpush1.msra.mxu0 0.0
      %791 = vmatprep.subr.mxu0 0.0
      %792 = vmatpush1.msra.mxu0 0.0
      %793 = vmatprep.subr.mxu0 0.0
      %794 = vmatpush1.msra.mxu0 0.0
      %795 = vmatprep.subr.mxu0 0.0
      %796 = vmatpush1.msra.mxu0 0.0
      %797 = vmatprep.subr.mxu0 0.0
      %798 = vmatpush1.msra.mxu0 0.0
      %799 = vmatprep.subr.mxu0 0.0
      %800 = vmatpush1.msra.mxu0 0.0
      %801 = vmatprep.subr.mxu0 0.0
      %802 = vmatpush1.msra.mxu0 0.0
      %803 = vmatprep.subr.mxu0 0.0
      %804 = vmatpush1.msra.mxu0 0.0
      %805 = vmatprep.subr.mxu0 0.0
      %806 = vmatpush1.msra.mxu0 0.0
      %807 = vmatprep.subr.mxu0 0.0
      %808 = vmatpush1.msra.mxu0 0.0
      %809 = vmatprep.subr.mxu0 0.0
      %810 = vmatpush1.msra.mxu0 0.0
      %811 = vmatprep.subr.mxu0 0.0
      %812 = vmatpush1.msra.mxu0 %v631
      %813 = vmatprep.subr.mxu0 0.0
      %814 = vmatpush2.msra.mxu0 0.0
      %815 = vmatprep.subr.mxu0 0.0
      %816 = vmatpush2.msra.mxu0 0.0
      %817 = vmatprep.subr.mxu0 0.0
      %818 = vmatpush2.msra.mxu0 0.0
      %819 = vmatprep.subr.mxu0 0.0
      %820 = vmatpush2.msra.mxu0 0.0
      %821 = vmatprep.subr.mxu0 0.0
      %822 = vmatpush2.msra.mxu0 0.0
      %823 = vmatprep.subr.mxu0 0.0
      %824 = vmatpush2.msra.mxu0 0.0
      %825 = vmatprep.subr.mxu0 0.0
      %826 = vmatpush2.msra.mxu0 0.0
      %827 = vmatprep.subr.mxu0 0.0
      %828 = vmatpush2.msra.mxu0 0.0
      %829 = vmatprep.subr.mxu0 0.0
      %830 = vmatpush2.msra.mxu0 0.0
      %831 = vmatprep.subr.mxu0 0.0
      %832 = vmatpush2.msra.mxu0 0.0
      %833 = vmatprep.subr.mxu0 0.0
      %834 = vmatpush2.msra.mxu0 0.0
      %835 = vmatprep.subr.mxu0 0.0
      %836 = vmatpush2.msra.mxu0 0.0
      %837 = vmatprep.subr.mxu0 0.0
      %838 = vmatpush2.msra.mxu0 0.0
      %839 = vmatprep.subr.mxu0 0.0
      %840 = vmatpush2.msra.mxu0 0.0
      %841 = vmatprep.subr.mxu0 0.0
      %842 = vmatpush2.msra.mxu0 0.0
      %843 = vmatprep.subr.mxu0 0.0
      %844 = vmatpush2.msra.mxu0 0.0
      %845 = vmatprep.mubr.f32.mxu0 0.0
      %846 = vmatmul.mubr.f32.gmra.mxu0 %v637
      %v847 = vpop.f32.mrf.mxu0
      %v848 = vadd.f32 %v611, %v847
      %v849 = vpop.f32.mrf.mxu0
      %850 = vdwg.mxu0
      %851 = vrot.lane.b32.xlu0 %v360, 112
      %v852 = vpop.permute.xlu0 %851
      %853 = vrot.lane.b32.xlu0 %v361, 17
      %v854 = vpop.permute.xlu0 %853
      %855 = vrot.lane.b32.xlu0 %v362, 17
      %v856 = vpop.permute.xlu0 %855
      %857 = vrot.lane.b32.xlu0 %v363, 17
      %v858 = vpop.permute.xlu0 %857
      %859 = vrot.lane.b32.xlu0 %v364, 17
      %v860 = vpop.permute.xlu0 %859
      %861 = vrot.lane.b32.xlu0 %v365, 17
      %v862 = vpop.permute.xlu0 %861
      %863 = vrot.lane.b32.xlu0 %v366, 17
      %v864 = vpop.permute.xlu0 %863
      %vm865 = vcmask 138240
      %v866 = vsel %vm865, %v854, %v856
      %v867 = vsel %vm865, %v856, %v858
      %v868 = vsel %vm865, %v858, %v860
      %v869 = vsel %vm865, %v860, %v862
      %v870 = vsel %vm865, %v862, %v864
      %v876 = vsel %vm399, %v852, 0
      %878 = vmatprep.subr.mxu0 0.0
      %879 = vmatpush1.msra.mxu0 0.0
      %880 = vmatprep.subr.mxu0 0.0
      %881 = vmatpush1.msra.mxu0 0.0
      %882 = vmatprep.subr.mxu0 0.0
      %883 = vmatpush1.msra.mxu0 0.0
      %884 = vmatprep.subr.mxu0 0.0
      %885 = vmatpush1.msra.mxu0 0.0
      %886 = vmatprep.subr.mxu0 0.0
      %887 = vmatpush1.msra.mxu0 0.0
      %888 = vmatprep.subr.mxu0 0.0
      %889 = vmatpush1.msra.mxu0 0.0
      %890 = vmatprep.subr.mxu0 0.0
      %891 = vmatpush1.msra.mxu0 0.0
      %892 = vmatprep.subr.mxu0 0.0
      %893 = vmatpush1.msra.mxu0 0.0
      %894 = vmatprep.subr.mxu0 0.0
      %895 = vmatpush1.msra.mxu0 0.0
      %896 = vmatprep.subr.mxu0 0.0
      %897 = vmatpush1.msra.mxu0 0.0
      %898 = vmatprep.subr.mxu0 0.0
      %899 = vmatpush1.msra.mxu0 0.0
      %900 = vmatprep.subr.mxu0 0.0
      %901 = vmatpush1.msra.mxu0 0.0
      %902 = vmatprep.subr.mxu0 0.0
      %903 = vmatpush1.msra.mxu0 0.0
      %904 = vmatprep.subr.mxu0 0.0
      %905 = vmatpush1.msra.mxu0 0.0
      %906 = vmatprep.subr.mxu0 0.0
      %907 = vmatpush1.msra.mxu0 0.0
      %908 = vmatprep.subr.mxu0 %v867
      %909 = vmatpush1.msra.mxu0 %v866
      %910 = vmatprep.subr.mxu0 0.0
      %911 = vmatpush2.msra.mxu0 0.0
      %912 = vmatprep.subr.mxu0 0.0
      %913 = vmatpush2.msra.mxu0 0.0
      %914 = vmatprep.subr.mxu0 0.0
      %915 = vmatpush2.msra.mxu0 0.0
      %916 = vmatprep.subr.mxu0 0.0
      %917 = vmatpush2.msra.mxu0 0.0
      %918 = vmatprep.subr.mxu0 0.0
      %919 = vmatpush2.msra.mxu0 0.0
      %920 = vmatprep.subr.mxu0 0.0
      %921 = vmatpush2.msra.mxu0 0.0
      %922 = vmatprep.subr.mxu0 0.0
      %923 = vmatpush2.msra.mxu0 0.0
      %924 = vmatprep.subr.mxu0 0.0
      %925 = vmatpush2.msra.mxu0 0.0
      %926 = vmatprep.subr.mxu0 0.0
      %927 = vmatpush2.msra.mxu0 0.0
      %928 = vmatprep.subr.mxu0 0.0
      %929 = vmatpush2.msra.mxu0 0.0
      %930 = vmatprep.subr.mxu0 0.0
      %931 = vmatpush2.msra.mxu0 0.0
      %932 = vmatprep.subr.mxu0 0.0
      %933 = vmatpush2.msra.mxu0 0.0
      %934 = vmatprep.subr.mxu0 0.0
      %935 = vmatpush2.msra.mxu0 0.0
      %936 = vmatprep.subr.mxu0 0.0
      %937 = vmatpush2.msra.mxu0 0.0
      %938 = vmatprep.subr.mxu0 0.0
      %939 = vmatpush2.msra.mxu0 0.0
      %940 = vmatprep.subr.mxu0 0.0
      %941 = vmatpush2.msra.mxu0 0.0
      %942 = vmatprep.mubr.f32.mxu0 0.0
      %943 = vmatmul.mubr.f32.gmra.mxu0 %v876
      %v944 = vpop.f32.mrf.mxu0
      %v945 = vadd.f32 0.0, %v944
      %v946 = vpop.f32.mrf.mxu0
      %v947 = vadd.f32 0.0, %v946
      %948 = vdwg.mxu0
      %949 = vmatprep.subr.mxu0 0.0
      %950 = vmatpush1.msra.mxu0 0.0
      %951 = vmatprep.subr.mxu0 0.0
      %952 = vmatpush1.msra.mxu0 0.0
      %953 = vmatprep.subr.mxu0 0.0
      %954 = vmatpush1.msra.mxu0 0.0
      %955 = vmatprep.subr.mxu0 0.0
      %956 = vmatpush1.msra.mxu0 0.0
      %957 = vmatprep.subr.mxu0 0.0
      %958 = vmatpush1.msra.mxu0 0.0
      %959 = vmatprep.subr.mxu0 0.0
      %960 = vmatpush1.msra.mxu0 0.0
      %961 = vmatprep.subr.mxu0 0.0
      %962 = vmatpush1.msra.mxu0 0.0
      %963 = vmatprep.subr.mxu0 0.0
      %964 = vmatpush1.msra.mxu0 0.0
      %965 = vmatprep.subr.mxu0 0.0
      %966 = vmatpush1.msra.mxu0 0.0
      %967 = vmatprep.subr.mxu0 0.0
      %968 = vmatpush1.msra.mxu0 0.0
      %969 = vmatprep.subr.mxu0 0.0
      %970 = vmatpush1.msra.mxu0 0.0
      %971 = vmatprep.subr.mxu0 0.0
      %972 = vmatpush1.msra.mxu0 0.0
      %973 = vmatprep.subr.mxu0 0.0
      %974 = vmatpush1.msra.mxu0 0.0
      %975 = vmatprep.subr.mxu0 0.0
      %976 = vmatpush1.msra.mxu0 0.0
      %977 = vmatprep.subr.mxu0 0.0
      %978 = vmatpush1.msra.mxu0 0.0
      %979 = vmatprep.subr.mxu0 %v869
      %980 = vmatpush1.msra.mxu0 %v868
      %981 = vmatprep.subr.mxu0 0.0
      %982 = vmatpush2.msra.mxu0 0.0
      %983 = vmatprep.subr.mxu0 0.0
      %984 = vmatpush2.msra.mxu0 0.0
      %985 = vmatprep.subr.mxu0 0.0
      %986 = vmatpush2.msra.mxu0 0.0
      %987 = vmatprep.subr.mxu0 0.0
      %988 = vmatpush2.msra.mxu0 0.0
      %989 = vmatprep.subr.mxu0 0.0
      %990 = vmatpush2.msra.mxu0 0.0
      %991 = vmatprep.subr.mxu0 0.0
      %992 = vmatpush2.msra.mxu0 0.0
      %993 = vmatprep.subr.mxu0 0.0
      %994 = vmatpush2.msra.mxu0 0.0
      %995 = vmatprep.subr.mxu0 0.0
      %996 = vmatpush2.msra.mxu0 0.0
      %997 = vmatprep.subr.mxu0 0.0
      %998 = vmatpush2.msra.mxu0 0.0
      %999 = vmatprep.subr.mxu0 0.0
      %1000 = vmatpush2.msra.mxu0 0.0
      %1001 = vmatprep.subr.mxu0 0.0
      %1002 = vmatpush2.msra.mxu0 0.0
      %1003 = vmatprep.subr.mxu0 0.0
      %1004 = vmatpush2.msra.mxu0 0.0
      %1005 = vmatprep.subr.mxu0 0.0
      %1006 = vmatpush2.msra.mxu0 0.0
      %1007 = vmatprep.subr.mxu0 0.0
      %1008 = vmatpush2.msra.mxu0 0.0
      %1009 = vmatprep.subr.mxu0 0.0
      %1010 = vmatpush2.msra.mxu0 0.0
      %1011 = vmatprep.subr.mxu0 0.0
      %1012 = vmatpush2.msra.mxu0 0.0
      %1013 = vmatprep.mubr.f32.mxu0 0.0
      %1014 = vmatmul.mubr.f32.gmra.mxu0 %v876
      %v1015 = vpop.f32.mrf.mxu0
      %v1016 = vadd.f32 0.0, %v1015
      %v1017 = vpop.f32.mrf.mxu0
      %v1018 = vadd.f32 0.0, %v1017
      %1019 = vdwg.mxu0
      %1020 = vmatprep.subr.mxu0 0.0
      %1021 = vmatpush1.msra.mxu0 0.0
      %1022 = vmatprep.subr.mxu0 0.0
      %1023 = vmatpush1.msra.mxu0 0.0
      %1024 = vmatprep.subr.mxu0 0.0
      %1025 = vmatpush1.msra.mxu0 0.0
      %1026 = vmatprep.subr.mxu0 0.0
      %1027 = vmatpush1.msra.mxu0 0.0
      %1028 = vmatprep.subr.mxu0 0.0
      %1029 = vmatpush1.msra.mxu0 0.0
      %1030 = vmatprep.subr.mxu0 0.0
      %1031 = vmatpush1.msra.mxu0 0.0
      %1032 = vmatprep.subr.mxu0 0.0
      %1033 = vmatpush1.msra.mxu0 0.0
      %1034 = vmatprep.subr.mxu0 0.0
      %1035 = vmatpush1.msra.mxu0 0.0
      %1036 = vmatprep.subr.mxu0 0.0
      %1037 = vmatpush1.msra.mxu0 0.0
      %1038 = vmatprep.subr.mxu0 0.0
      %1039 = vmatpush1.msra.mxu0 0.0
      %1040 = vmatprep.subr.mxu0 0.0
      %1041 = vmatpush1.msra.mxu0 0.0
      %1042 = vmatprep.subr.mxu0 0.0
      %1043 = vmatpush1.msra.mxu0 0.0
      %1044 = vmatprep.subr.mxu0 0.0
      %1045 = vmatpush1.msra.mxu0 0.0
      %1046 = vmatprep.subr.mxu0 0.0
      %1047 = vmatpush1.msra.mxu0 0.0
      %1048 = vmatprep.subr.mxu0 0.0
      %1049 = vmatpush1.msra.mxu0 0.0
      %1050 = vmatprep.subr.mxu0 0.0
      %1051 = vmatpush1.msra.mxu0 %v870
      %1052 = vmatprep.subr.mxu0 0.0
      %1053 = vmatpush2.msra.mxu0 0.0
      %1054 = vmatprep.subr.mxu0 0.0
      %1055 = vmatpush2.msra.mxu0 0.0
      %1056 = vmatprep.subr.mxu0 0.0
      %1057 = vmatpush2.msra.mxu0 0.0
      %1058 = vmatprep.subr.mxu0 0.0
      %1059 = vmatpush2.msra.mxu0 0.0
      %1060 = vmatprep.subr.mxu0 0.0
      %1061 = vmatpush2.msra.mxu0 0.0
      %1062 = vmatprep.subr.mxu0 0.0
      %1063 = vmatpush2.msra.mxu0 0.0
      %1064 = vmatprep.subr.mxu0 0.0
      %1065 = vmatpush2.msra.mxu0 0.0
      %1066 = vmatprep.subr.mxu0 0.0
      %1067 = vmatpush2.msra.mxu0 0.0
      %1068 = vmatprep.subr.mxu0 0.0
      %1069 = vmatpush2.msra.mxu0 0.0
      %1070 = vmatprep.subr.mxu0 0.0
      %1071 = vmatpush2.msra.mxu0 0.0
      %1072 = vmatprep.subr.mxu0 0.0
      %1073 = vmatpush2.msra.mxu0 0.0
      %1074 = vmatprep.subr.mxu0 0.0
      %1075 = vmatpush2.msra.mxu0 0.0
      %1076 = vmatprep.subr.mxu0 0.0
      %1077 = vmatpush2.msra.mxu0 0.0
      %1078 = vmatprep.subr.mxu0 0.0
      %1079 = vmatpush2.msra.mxu0 0.0
      %1080 = vmatprep.subr.mxu0 0.0
      %1081 = vmatpush2.msra.mxu0 0.0
      %1082 = vmatprep.subr.mxu0 0.0
      %1083 = vmatpush2.msra.mxu0 0.0
      %1084 = vmatprep.mubr.f32.mxu0 0.0
      %1085 = vmatmul.mubr.f32.gmra.mxu0 %v876
      %v1086 = vpop.f32.mrf.mxu0
      %v1087 = vadd.f32 0.0, %v1086
      %v1088 = vpop.f32.mrf.mxu0
      %1089 = vdwg.mxu0
      %v1090 = vadd.f32 %v706, %v945
      %v1091 = vadd.f32 %v708, %v947
      %v1092 = vadd.f32 %v777, %v1016
      %v1093 = vadd.f32 %v779, %v1018
      %v1094 = vadd.f32 %v848, %v1087
      %1095 = vrot.lane.b32.xlu0 %v360, 104
      %v1096 = vpop.permute.xlu0 %1095
      %1097 = vrot.lane.b32.xlu0 %v361, 1
      %v1098 = vpop.permute.xlu0 %1097
      %1099 = vrot.lane.b32.xlu0 %v362, 1
      %v1100 = vpop.permute.xlu0 %1099
      %1101 = vrot.lane.b32.xlu0 %v363, 1
      %v1102 = vpop.permute.xlu0 %1101
      %1103 = vrot.lane.b32.xlu0 %v364, 1
      %v1104 = vpop.permute.xlu0 %1103
      %1105 = vrot.lane.b32.xlu0 %v365, 1
      %v1106 = vpop.permute.xlu0 %1105
      %1107 = vrot.lane.b32.xlu0 %v366, 1
      %v1108 = vpop.permute.xlu0 %1107
      %vm1109 = vcmask 7168
      %v1110 = vsel %vm1109, %v1098, %v1100
      %v1111 = vsel %vm1109, %v1100, %v1102
      %v1112 = vsel %vm1109, %v1102, %v1104
      %v1113 = vsel %vm1109, %v1104, %v1106
      %v1114 = vsel %vm1109, %v1106, %v1108
      %v1120 = vsel %vm399, %v1096, 0
      %1122 = vmatprep.subr.mxu0 0.0
      %1123 = vmatpush1.msra.mxu0 0.0
      %1124 = vmatprep.subr.mxu0 0.0
      %1125 = vmatpush1.msra.mxu0 0.0
      %1126 = vmatprep.subr.mxu0 0.0
      %1127 = vmatpush1.msra.mxu0 0.0
      %1128 = vmatprep.subr.mxu0 0.0
      %1129 = vmatpush1.msra.mxu0 0.0
      %1130 = vmatprep.subr.mxu0 0.0
      %1131 = vmatpush1.msra.mxu0 0.0
      %1132 = vmatprep.subr.mxu0 0.0
      %1133 = vmatpush1.msra.mxu0 0.0
      %1134 = vmatprep.subr.mxu0 0.0
      %1135 = vmatpush1.msra.mxu0 0.0
      %1136 = vmatprep.subr.mxu0 0.0
      %1137 = vmatpush1.msra.mxu0 0.0
      %1138 = vmatprep.subr.mxu0 0.0
      %1139 = vmatpush1.msra.mxu0 0.0
      %1140 = vmatprep.subr.mxu0 0.0
      %1141 = vmatpush1.msra.mxu0 0.0
      %1142 = vmatprep.subr.mxu0 0.0
      %1143 = vmatpush1.msra.mxu0 0.0
      %1144 = vmatprep.subr.mxu0 0.0
      %1145 = vmatpush1.msra.mxu0 0.0
      %1146 = vmatprep.subr.mxu0 0.0
      %1147 = vmatpush1.msra.mxu0 0.0
      %1148 = vmatprep.subr.mxu0 0.0
      %1149 = vmatpush1.msra.mxu0 0.0
      %1150 = vmatprep.subr.mxu0 0.0
      %1151 = vmatpush1.msra.mxu0 0.0
      %1152 = vmatprep.subr.mxu0 %v1111
      %1153 = vmatpush1.msra.mxu0 %v1110
      %1154 = vmatprep.subr.mxu0 0.0
      %1155 = vmatpush2.msra.mxu0 0.0
      %1156 = vmatprep.subr.mxu0 0.0
      %1157 = vmatpush2.msra.mxu0 0.0
      %1158 = vmatprep.subr.mxu0 0.0
      %1159 = vmatpush2.msra.mxu0 0.0
      %1160 = vmatprep.subr.mxu0 0.0
      %1161 = vmatpush2.msra.mxu0 0.0
      %1162 = vmatprep.subr.mxu0 0.0
      %1163 = vmatpush2.msra.mxu0 0.0
      %1164 = vmatprep.subr.mxu0 0.0
      %1165 = vmatpush2.msra.mxu0 0.0
      %1166 = vmatprep.subr.mxu0 0.0
      %1167 = vmatpush2.msra.mxu0 0.0
      %1168 = vmatprep.subr.mxu0 0.0
      %1169 = vmatpush2.msra.mxu0 0.0
      %1170 = vmatprep.subr.mxu0 0.0
      %1171 = vmatpush2.msra.mxu0 0.0
      %1172 = vmatprep.subr.mxu0 0.0
      %1173 = vmatpush2.msra.mxu0 0.0
      %1174 = vmatprep.subr.mxu0 0.0
      %1175 = vmatpush2.msra.mxu0 0.0
      %1176 = vmatprep.subr.mxu0 0.0
      %1177 = vmatpush2.msra.mxu0 0.0
      %1178 = vmatprep.subr.mxu0 0.0
      %1179 = vmatpush2.msra.mxu0 0.0
      %1180 = vmatprep.subr.mxu0 0.0
      %1181 = vmatpush2.msra.mxu0 0.0
      %1182 = vmatprep.subr.mxu0 0.0
      %1183 = vmatpush2.msra.mxu0 0.0
      %1184 = vmatprep.subr.mxu0 0.0
      %1185 = vmatpush2.msra.mxu0 0.0
      %1186 = vmatprep.mubr.f32.mxu0 0.0
      %1187 = vmatmul.mubr.f32.gmra.mxu0 %v1120
      %v1188 = vpop.f32.mrf.mxu0
      %v1189 = vadd.f32 0.0, %v1188
      %v1190 = vpop.f32.mrf.mxu0
      %v1191 = vadd.f32 0.0, %v1190
      %1192 = vdwg.mxu0
      %1193 = vmatprep.subr.mxu0 0.0
      %1194 = vmatpush1.msra.mxu0 0.0
      %1195 = vmatprep.subr.mxu0 0.0
      %1196 = vmatpush1.msra.mxu0 0.0
      %1197 = vmatprep.subr.mxu0 0.0
      %1198 = vmatpush1.msra.mxu0 0.0
      %1199 = vmatprep.subr.mxu0 0.0
      %1200 = vmatpush1.msra.mxu0 0.0
      %1201 = vmatprep.subr.mxu0 0.0
      %1202 = vmatpush1.msra.mxu0 0.0
      %1203 = vmatprep.subr.mxu0 0.0
      %1204 = vmatpush1.msra.mxu0 0.0
      %1205 = vmatprep.subr.mxu0 0.0
      %1206 = vmatpush1.msra.mxu0 0.0
      %1207 = vmatprep.subr.mxu0 0.0
      %1208 = vmatpush1.msra.mxu0 0.0
      %1209 = vmatprep.subr.mxu0 0.0
      %1210 = vmatpush1.msra.mxu0 0.0
      %1211 = vmatprep.subr.mxu0 0.0
      %1212 = vmatpush1.msra.mxu0 0.0
      %1213 = vmatprep.subr.mxu0 0.0
      %1214 = vmatpush1.msra.mxu0 0.0
      %1215 = vmatprep.subr.mxu0 0.0
      %1216 = vmatpush1.msra.mxu0 0.0
      %1217 = vmatprep.subr.mxu0 0.0
      %1218 = vmatpush1.msra.mxu0 0.0
      %1219 = vmatprep.subr.mxu0 0.0
      %1220 = vmatpush1.msra.mxu0 0.0
      %1221 = vmatprep.subr.mxu0 0.0
      %1222 = vmatpush1.msra.mxu0 0.0
      %1223 = vmatprep.subr.mxu0 %v1113
      %1224 = vmatpush1.msra.mxu0 %v1112
      %1225 = vmatprep.subr.mxu0 0.0
      %1226 = vmatpush2.msra.mxu0 0.0
      %1227 = vmatprep.subr.mxu0 0.0
      %1228 = vmatpush2.msra.mxu0 0.0
      %1229 = vmatprep.subr.mxu0 0.0
      %1230 = vmatpush2.msra.mxu0 0.0
      %1231 = vmatprep.subr.mxu0 0.0
      %1232 = vmatpush2.msra.mxu0 0.0
      %1233 = vmatprep.subr.mxu0 0.0
      %1234 = vmatpush2.msra.mxu0 0.0
      %1235 = vmatprep.subr.mxu0 0.0
      %1236 = vmatpush2.msra.mxu0 0.0
      %1237 = vmatprep.subr.mxu0 0.0
      %1238 = vmatpush2.msra.mxu0 0.0
      %1239 = vmatprep.subr.mxu0 0.0
      %1240 = vmatpush2.msra.mxu0 0.0
      %1241 = vmatprep.subr.mxu0 0.0
      %1242 = vmatpush2.msra.mxu0 0.0
      %1243 = vmatprep.subr.mxu0 0.0
      %1244 = vmatpush2.msra.mxu0 0.0
      %1245 = vmatprep.subr.mxu0 0.0
      %1246 = vmatpush2.msra.mxu0 0.0
      %1247 = vmatprep.subr.mxu0 0.0
      %1248 = vmatpush2.msra.mxu0 0.0
      %1249 = vmatprep.subr.mxu0 0.0
      %1250 = vmatpush2.msra.mxu0 0.0
      %1251 = vmatprep.subr.mxu0 0.0
      %1252 = vmatpush2.msra.mxu0 0.0
      %1253 = vmatprep.subr.mxu0 0.0
      %1254 = vmatpush2.msra.mxu0 0.0
      %1255 = vmatprep.subr.mxu0 0.0
      %1256 = vmatpush2.msra.mxu0 0.0
      %1257 = vmatprep.mubr.f32.mxu0 0.0
      %1258 = vmatmul.mubr.f32.gmra.mxu0 %v1120
      %v1259 = vpop.f32.mrf.mxu0
      %v1260 = vadd.f32 0.0, %v1259
      %v1261 = vpop.f32.mrf.mxu0
      %v1262 = vadd.f32 0.0, %v1261
      %1263 = vdwg.mxu0
      %1264 = vmatprep.subr.mxu0 0.0
      %1265 = vmatpush1.msra.mxu0 0.0
      %1266 = vmatprep.subr.mxu0 0.0
      %1267 = vmatpush1.msra.mxu0 0.0
      %1268 = vmatprep.subr.mxu0 0.0
      %1269 = vmatpush1.msra.mxu0 0.0
      %1270 = vmatprep.subr.mxu0 0.0
      %1271 = vmatpush1.msra.mxu0 0.0
      %1272 = vmatprep.subr.mxu0 0.0
      %1273 = vmatpush1.msra.mxu0 0.0
      %1274 = vmatprep.subr.mxu0 0.0
      %1275 = vmatpush1.msra.mxu0 0.0
      %1276 = vmatprep.subr.mxu0 0.0
      %1277 = vmatpush1.msra.mxu0 0.0
      %1278 = vmatprep.subr.mxu0 0.0
      %1279 = vmatpush1.msra.mxu0 0.0
      %1280 = vmatprep.subr.mxu0 0.0
      %1281 = vmatpush1.msra.mxu0 0.0
      %1282 = vmatprep.subr.mxu0 0.0
      %1283 = vmatpush1.msra.mxu0 0.0
      %1284 = vmatprep.subr.mxu0 0.0
      %1285 = vmatpush1.msra.mxu0 0.0
      %1286 = vmatprep.subr.mxu0 0.0
      %1287 = vmatpush1.msra.mxu0 0.0
      %1288 = vmatprep.subr.mxu0 0.0
      %1289 = vmatpush1.msra.mxu0 0.0
      %1290 = vmatprep.subr.mxu0 0.0
      %1291 = vmatpush1.msra.mxu0 0.0
      %1292 = vmatprep.subr.mxu0 0.0
      %1293 = vmatpush1.msra.mxu0 0.0
      %1294 = vmatprep.subr.mxu0 0.0
      %1295 = vmatpush1.msra.mxu0 %v1114
      %1296 = vmatprep.subr.mxu0 0.0
      %1297 = vmatpush2.msra.mxu0 0.0
      %1298 = vmatprep.subr.mxu0 0.0
      %1299 = vmatpush2.msra.mxu0 0.0
      %1300 = vmatprep.subr.mxu0 0.0
      %1301 = vmatpush2.msra.mxu0 0.0
      %1302 = vmatprep.subr.mxu0 0.0
      %1303 = vmatpush2.msra.mxu0 0.0
      %1304 = vmatprep.subr.mxu0 0.0
      %1305 = vmatpush2.msra.mxu0 0.0
      %1306 = vmatprep.subr.mxu0 0.0
      %1307 = vmatpush2.msra.mxu0 0.0
      %1308 = vmatprep.subr.mxu0 0.0
      %1309 = vmatpush2.msra.mxu0 0.0
      %1310 = vmatprep.subr.mxu0 0.0
      %1311 = vmatpush2.msra.mxu0 0.0
      %1312 = vmatprep.subr.mxu0 0.0
      %1313 = vmatpush2.msra.mxu0 0.0
      %1314 = vmatprep.subr.mxu0 0.0
      %1315 = vmatpush2.msra.mxu0 0.0
      %1316 = vmatprep.subr.mxu0 0.0
      %1317 = vmatpush2.msra.mxu0 0.0
      %1318 = vmatprep.subr.mxu0 0.0
      %1319 = vmatpush2.msra.mxu0 0.0
      %1320 = vmatprep.subr.mxu0 0.0
      %1321 = vmatpush2.msra.mxu0 0.0
      %1322 = vmatprep.subr.mxu0 0.0
      %1323 = vmatpush2.msra.mxu0 0.0
      %1324 = vmatprep.subr.mxu0 0.0
      %1325 = vmatpush2.msra.mxu0 0.0
      %1326 = vmatprep.subr.mxu0 0.0
      %1327 = vmatpush2.msra.mxu0 0.0
      %1328 = vmatprep.mubr.f32.mxu0 0.0
      %1329 = vmatmul.mubr.f32.gmra.mxu0 %v1120
      %v1330 = vpop.f32.mrf.mxu0
      %v1331 = vadd.f32 0.0, %v1330
      %v1332 = vpop.f32.mrf.mxu0
      %1333 = vdwg.mxu0
      %v1334 = vadd.f32 %v1090, %v1189
      %v1335 = vadd.f32 %v1091, %v1191
      %v1336 = vadd.f32 %v1092, %v1260
      %v1337 = vadd.f32 %v1093, %v1262
      %v1338 = vadd.f32 %v1094, %v1331
      %1339 = vrot.lane.b32.xlu0 %v360, 96
      %v1340 = vpop.permute.xlu0 %1339
      %v1341 = vsel %vm399, %v1340, 0
      %1343 = vmatprep.subr.mxu0 0.0
      %1344 = vmatpush1.msra.mxu0 0.0
      %1345 = vmatprep.subr.mxu0 0.0
      %1346 = vmatpush1.msra.mxu0 0.0
      %1347 = vmatprep.subr.mxu0 0.0
      %1348 = vmatpush1.msra.mxu0 0.0
      %1349 = vmatprep.subr.mxu0 0.0
      %1350 = vmatpush1.msra.mxu0 0.0
      %1351 = vmatprep.subr.mxu0 0.0
      %1352 = vmatpush1.msra.mxu0 0.0
      %1353 = vmatprep.subr.mxu0 0.0
      %1354 = vmatpush1.msra.mxu0 0.0
      %1355 = vmatprep.subr.mxu0 0.0
      %1356 = vmatpush1.msra.mxu0 0.0
      %1357 = vmatprep.subr.mxu0 0.0
      %1358 = vmatpush1.msra.mxu0 0.0
      %1359 = vmatprep.subr.mxu0 0.0
      %1360 = vmatpush1.msra.mxu0 0.0
      %1361 = vmatprep.subr.mxu0 0.0
      %1362 = vmatpush1.msra.mxu0 0.0
      %1363 = vmatprep.subr.mxu0 0.0
      %1364 = vmatpush1.msra.mxu0 0.0
      %1365 = vmatprep.subr.mxu0 0.0
      %1366 = vmatpush1.msra.mxu0 0.0
      %1367 = vmatprep.subr.mxu0 0.0
      %1368 = vmatpush1.msra.mxu0 0.0
      %1369 = vmatprep.subr.mxu0 0.0
      %1370 = vmatpush1.msra.mxu0 0.0
      %1371 = vmatprep.subr.mxu0 0.0
      %1372 = vmatpush1.msra.mxu0 0.0
      %1373 = vmatprep.subr.mxu0 %v363
      %1374 = vmatpush1.msra.mxu0 %v362
      %1375 = vmatprep.subr.mxu0 0.0
      %1376 = vmatpush2.msra.mxu0 0.0
      %1377 = vmatprep.subr.mxu0 0.0
      %1378 = vmatpush2.msra.mxu0 0.0
      %1379 = vmatprep.subr.mxu0 0.0
      %1380 = vmatpush2.msra.mxu0 0.0
      %1381 = vmatprep.subr.mxu0 0.0
      %1382 = vmatpush2.msra.mxu0 0.0
      %1383 = vmatprep.subr.mxu0 0.0
      %1384 = vmatpush2.msra.mxu0 0.0
      %1385 = vmatprep.subr.mxu0 0.0
      %1386 = vmatpush2.msra.mxu0 0.0
      %1387 = vmatprep.subr.mxu0 0.0
      %1388 = vmatpush2.msra.mxu0 0.0
      %1389 = vmatprep.subr.mxu0 0.0
      %1390 = vmatpush2.msra.mxu0 0.0
      %1391 = vmatprep.subr.mxu0 0.0
      %1392 = vmatpush2.msra.mxu0 0.0
      %1393 = vmatprep.subr.mxu0 0.0
      %1394 = vmatpush2.msra.mxu0 0.0
      %1395 = vmatprep.subr.mxu0 0.0
      %1396 = vmatpush2.msra.mxu0 0.0
      %1397 = vmatprep.subr.mxu0 0.0
      %1398 = vmatpush2.msra.mxu0 0.0
      %1399 = vmatprep.subr.mxu0 0.0
      %1400 = vmatpush2.msra.mxu0 0.0
      %1401 = vmatprep.subr.mxu0 0.0
      %1402 = vmatpush2.msra.mxu0 0.0
      %1403 = vmatprep.subr.mxu0 0.0
      %1404 = vmatpush2.msra.mxu0 0.0
      %1405 = vmatprep.subr.mxu0 0.0
      %1406 = vmatpush2.msra.mxu0 0.0
      %1407 = vmatprep.mubr.f32.mxu0 0.0
      %1408 = vmatmul.mubr.f32.gmra.mxu0 %v1341
      %v1409 = vpop.f32.mrf.mxu0
      %v1410 = vadd.f32 0.0, %v1409
      %v1411 = vpop.f32.mrf.mxu0
      %v1412 = vadd.f32 0.0, %v1411
      %1413 = vdwg.mxu0
      %1414 = vmatprep.subr.mxu0 0.0
      %1415 = vmatpush1.msra.mxu0 0.0
      %1416 = vmatprep.subr.mxu0 0.0
      %1417 = vmatpush1.msra.mxu0 0.0
      %1418 = vmatprep.subr.mxu0 0.0
      %1419 = vmatpush1.msra.mxu0 0.0
      %1420 = vmatprep.subr.mxu0 0.0
      %1421 = vmatpush1.msra.mxu0 0.0
      %1422 = vmatprep.subr.mxu0 0.0
      %1423 = vmatpush1.msra.mxu0 0.0
      %1424 = vmatprep.subr.mxu0 0.0
      %1425 = vmatpush1.msra.mxu0 0.0
      %1426 = vmatprep.subr.mxu0 0.0
      %1427 = vmatpush1.msra.mxu0 0.0
      %1428 = vmatprep.subr.mxu0 0.0
      %1429 = vmatpush1.msra.mxu0 0.0
      %1430 = vmatprep.subr.mxu0 0.0
      %1431 = vmatpush1.msra.mxu0 0.0
      %1432 = vmatprep.subr.mxu0 0.0
      %1433 = vmatpush1.msra.mxu0 0.0
      %1434 = vmatprep.subr.mxu0 0.0
      %1435 = vmatpush1.msra.mxu0 0.0
      %1436 = vmatprep.subr.mxu0 0.0
      %1437 = vmatpush1.msra.mxu0 0.0
      %1438 = vmatprep.subr.mxu0 0.0
      %1439 = vmatpush1.msra.mxu0 0.0
      %1440 = vmatprep.subr.mxu0 0.0
      %1441 = vmatpush1.msra.mxu0 0.0
      %1442 = vmatprep.subr.mxu0 0.0
      %1443 = vmatpush1.msra.mxu0 0.0
      %1444 = vmatprep.subr.mxu0 %v365
      %1445 = vmatpush1.msra.mxu0 %v364
      %1446 = vmatprep.subr.mxu0 0.0
      %1447 = vmatpush2.msra.mxu0 0.0
      %1448 = vmatprep.subr.mxu0 0.0
      %1449 = vmatpush2.msra.mxu0 0.0
      %1450 = vmatprep.subr.mxu0 0.0
      %1451 = vmatpush2.msra.mxu0 0.0
      %1452 = vmatprep.subr.mxu0 0.0
      %1453 = vmatpush2.msra.mxu0 0.0
      %1454 = vmatprep.subr.mxu0 0.0
      %1455 = vmatpush2.msra.mxu0 0.0
      %1456 = vmatprep.subr.mxu0 0.0
      %1457 = vmatpush2.msra.mxu0 0.0
      %1458 = vmatprep.subr.mxu0 0.0
      %1459 = vmatpush2.msra.mxu0 0.0
      %1460 = vmatprep.subr.mxu0 0.0
      %1461 = vmatpush2.msra.mxu0 0.0
      %1462 = vmatprep.subr.mxu0 0.0
      %1463 = vmatpush2.msra.mxu0 0.0
      %1464 = vmatprep.subr.mxu0 0.0
      %1465 = vmatpush2.msra.mxu0 0.0
      %1466 = vmatprep.subr.mxu0 0.0
      %1467 = vmatpush2.msra.mxu0 0.0
      %1468 = vmatprep.subr.mxu0 0.0
      %1469 = vmatpush2.msra.mxu0 0.0
      %1470 = vmatprep.subr.mxu0 0.0
      %1471 = vmatpush2.msra.mxu0 0.0
      %1472 = vmatprep.subr.mxu0 0.0
      %1473 = vmatpush2.msra.mxu0 0.0
      %1474 = vmatprep.subr.mxu0 0.0
      %1475 = vmatpush2.msra.mxu0 0.0
      %1476 = vmatprep.subr.mxu0 0.0
      %1477 = vmatpush2.msra.mxu0 0.0
      %1478 = vmatprep.mubr.f32.mxu0 0.0
      %1479 = vmatmul.mubr.f32.gmra.mxu0 %v1341
      %v1480 = vpop.f32.mrf.mxu0
      %v1481 = vadd.f32 0.0, %v1480
      %v1482 = vpop.f32.mrf.mxu0
      %v1483 = vadd.f32 0.0, %v1482
      %1484 = vdwg.mxu0
      %1485 = vmatprep.subr.mxu0 0.0
      %1486 = vmatpush1.msra.mxu0 0.0
      %1487 = vmatprep.subr.mxu0 0.0
      %1488 = vmatpush1.msra.mxu0 0.0
      %1489 = vmatprep.subr.mxu0 0.0
      %1490 = vmatpush1.msra.mxu0 0.0
      %1491 = vmatprep.subr.mxu0 0.0
      %1492 = vmatpush1.msra.mxu0 0.0
      %1493 = vmatprep.subr.mxu0 0.0
      %1494 = vmatpush1.msra.mxu0 0.0
      %1495 = vmatprep.subr.mxu0 0.0
      %1496 = vmatpush1.msra.mxu0 0.0
      %1497 = vmatprep.subr.mxu0 0.0
      %1498 = vmatpush1.msra.mxu0 0.0
      %1499 = vmatprep.subr.mxu0 0.0
      %1500 = vmatpush1.msra.mxu0 0.0
      %1501 = vmatprep.subr.mxu0 0.0
      %1502 = vmatpush1.msra.mxu0 0.0
      %1503 = vmatprep.subr.mxu0 0.0
      %1504 = vmatpush1.msra.mxu0 0.0
      %1505 = vmatprep.subr.mxu0 0.0
      %1506 = vmatpush1.msra.mxu0 0.0
      %1507 = vmatprep.subr.mxu0 0.0
      %1508 = vmatpush1.msra.mxu0 0.0
      %1509 = vmatprep.subr.mxu0 0.0
      %1510 = vmatpush1.msra.mxu0 0.0
      %1511 = vmatprep.subr.mxu0 0.0
      %1512 = vmatpush1.msra.mxu0 0.0
      %1513 = vmatprep.subr.mxu0 0.0
      %1514 = vmatpush1.msra.mxu0 0.0
      %1515 = vmatprep.subr.mxu0 0.0
      %1516 = vmatpush1.msra.mxu0 %v366
      %1517 = vmatprep.subr.mxu0 0.0
      %1518 = vmatpush2.msra.mxu0 0.0
      %1519 = vmatprep.subr.mxu0 0.0
      %1520 = vmatpush2.msra.mxu0 0.0
      %1521 = vmatprep.subr.mxu0 0.0
      %1522 = vmatpush2.msra.mxu0 0.0
      %1523 = vmatprep.subr.mxu0 0.0
      %1524 = vmatpush2.msra.mxu0 0.0
      %1525 = vmatprep.subr.mxu0 0.0
      %1526 = vmatpush2.msra.mxu0 0.0
      %1527 = vmatprep.subr.mxu0 0.0
      %1528 = vmatpush2.msra.mxu0 0.0
      %1529 = vmatprep.subr.mxu0 0.0
      %1530 = vmatpush2.msra.mxu0 0.0
      %1531 = vmatprep.subr.mxu0 0.0
      %1532 = vmatpush2.msra.mxu0 0.0
      %1533 = vmatprep.subr.mxu0 0.0
      %1534 = vmatpush2.msra.mxu0 0.0
      %1535 = vmatprep.subr.mxu0 0.0
      %1536 = vmatpush2.msra.mxu0 0.0
      %1537 = vmatprep.subr.mxu0 0.0
      %1538 = vmatpush2.msra.mxu0 0.0
      %1539 = vmatprep.subr.mxu0 0.0
      %1540 = vmatpush2.msra.mxu0 0.0
      %1541 = vmatprep.subr.mxu0 0.0
      %1542 = vmatpush2.msra.mxu0 0.0
      %1543 = vmatprep.subr.mxu0 0.0
      %1544 = vmatpush2.msra.mxu0 0.0
      %1545 = vmatprep.subr.mxu0 0.0
      %1546 = vmatpush2.msra.mxu0 0.0
      %1547 = vmatprep.subr.mxu0 0.0
      %1548 = vmatpush2.msra.mxu0 0.0
      %1549 = vmatprep.mubr.f32.mxu0 0.0
      %1550 = vmatmul.mubr.f32.gmra.mxu0 %v1341
      %v1551 = vpop.f32.mrf.mxu0
      %v1552 = vadd.f32 0.0, %v1551
      %v1553 = vpop.f32.mrf.mxu0
      %1554 = vdwg.mxu0
      %v1555 = vadd.f32 %v1334, %v1410
      %v1556 = vadd.f32 %v1335, %v1412
      %v1557 = vadd.f32 %v1336, %v1481
      %v1558 = vadd.f32 %v1337, %v1483
      %v1559 = vadd.f32 %v1338, %v1552
      %v1560 = vld [vmem:[%s333 + $0x8] sm:$0xff]
      %v1561 = vld [vmem:[%s333 + $0x10] sm:$0xff]
      %v1562 = vld [vmem:[%s333 + $0x18] sm:$0xff]
      %v1563 = vld [vmem:[%s333 + $0x20] sm:$0xff]
      %v1564 = vld [vmem:[%s333 + $0x28] sm:$0xff]
      %v1565 = vld [vmem:[%s333 + $0x30] sm:$0xff]
      %1566 = vrot.lane.b32.xlu0 %v360, 88
      %v1567 = vpop.permute.xlu0 %1566
      %1574 = vrot.lane.b32.xlu0 %v1560, 127
      %v1575 = vpop.permute.xlu0 %1574
      %1576 = vrot.lane.b32.xlu0 %v1561, 127
      %v1577 = vpop.permute.xlu0 %1576
      %1578 = vrot.lane.b32.xlu0 %v1562, 127
      %v1579 = vpop.permute.xlu0 %1578
      %1580 = vrot.lane.b32.xlu0 %v1563, 127
      %v1581 = vpop.permute.xlu0 %1580
      %1582 = vrot.lane.b32.xlu0 %v1564, 127
      %v1583 = vpop.permute.xlu0 %1582
      %1584 = vrot.lane.b32.xlu0 %v1565, 127
      %v1585 = vpop.permute.xlu0 %1584
      %vm1586 = vcmask 1039360
      %v1587 = vsel %vm1586, %v1575, %v1577
      %v1588 = vsel %vm1586, %v1577, %v1579
      %v1589 = vsel %vm1586, %v1579, %v1581
      %v1590 = vsel %vm1586, %v1581, %v1583
      %v1591 = vsel %vm1586, %v1583, %v1585
      %v1597 = vsel %vm399, %v1567, 0
      %1599 = vmatprep.subr.mxu0 0.0
      %1600 = vmatpush1.msra.mxu0 0.0
      %1601 = vmatprep.subr.mxu0 0.0
      %1602 = vmatpush1.msra.mxu0 0.0
      %1603 = vmatprep.subr.mxu0 0.0
      %1604 = vmatpush1.msra.mxu0 0.0
      %1605 = vmatprep.subr.mxu0 0.0
      %1606 = vmatpush1.msra.mxu0 0.0
      %1607 = vmatprep.subr.mxu0 0.0
      %1608 = vmatpush1.msra.mxu0 0.0
      %1609 = vmatprep.subr.mxu0 0.0
      %1610 = vmatpush1.msra.mxu0 0.0
      %1611 = vmatprep.subr.mxu0 0.0
      %1612 = vmatpush1.msra.mxu0 0.0
      %1613 = vmatprep.subr.mxu0 0.0
      %1614 = vmatpush1.msra.mxu0 0.0
      %1615 = vmatprep.subr.mxu0 0.0
      %1616 = vmatpush1.msra.mxu0 0.0
      %1617 = vmatprep.subr.mxu0 0.0
      %1618 = vmatpush1.msra.mxu0 0.0
      %1619 = vmatprep.subr.mxu0 0.0
      %1620 = vmatpush1.msra.mxu0 0.0
      %1621 = vmatprep.subr.mxu0 0.0
      %1622 = vmatpush1.msra.mxu0 0.0
      %1623 = vmatprep.subr.mxu0 0.0
      %1624 = vmatpush1.msra.mxu0 0.0
      %1625 = vmatprep.subr.mxu0 0.0
      %1626 = vmatpush1.msra.mxu0 0.0
      %1627 = vmatprep.subr.mxu0 0.0
      %1628 = vmatpush1.msra.mxu0 0.0
      %1629 = vmatprep.subr.mxu0 %v1588
      %1630 = vmatpush1.msra.mxu0 %v1587
      %1631 = vmatprep.subr.mxu0 0.0
      %1632 = vmatpush2.msra.mxu0 0.0
      %1633 = vmatprep.subr.mxu0 0.0
      %1634 = vmatpush2.msra.mxu0 0.0
      %1635 = vmatprep.subr.mxu0 0.0
      %1636 = vmatpush2.msra.mxu0 0.0
      %1637 = vmatprep.subr.mxu0 0.0
      %1638 = vmatpush2.msra.mxu0 0.0
      %1639 = vmatprep.subr.mxu0 0.0
      %1640 = vmatpush2.msra.mxu0 0.0
      %1641 = vmatprep.subr.mxu0 0.0
      %1642 = vmatpush2.msra.mxu0 0.0
      %1643 = vmatprep.subr.mxu0 0.0
      %1644 = vmatpush2.msra.mxu0 0.0
      %1645 = vmatprep.subr.mxu0 0.0
      %1646 = vmatpush2.msra.mxu0 0.0
      %1647 = vmatprep.subr.mxu0 0.0
      %1648 = vmatpush2.msra.mxu0 0.0
      %1649 = vmatprep.subr.mxu0 0.0
      %1650 = vmatpush2.msra.mxu0 0.0
      %1651 = vmatprep.subr.mxu0 0.0
      %1652 = vmatpush2.msra.mxu0 0.0
      %1653 = vmatprep.subr.mxu0 0.0
      %1654 = vmatpush2.msra.mxu0 0.0
      %1655 = vmatprep.subr.mxu0 0.0
      %1656 = vmatpush2.msra.mxu0 0.0
      %1657 = vmatprep.subr.mxu0 0.0
      %1658 = vmatpush2.msra.mxu0 0.0
      %1659 = vmatprep.subr.mxu0 0.0
      %1660 = vmatpush2.msra.mxu0 0.0
      %1661 = vmatprep.subr.mxu0 0.0
      %1662 = vmatpush2.msra.mxu0 0.0
      %1663 = vmatprep.mubr.f32.mxu0 0.0
      %1664 = vmatmul.mubr.f32.gmra.mxu0 %v1597
      %v1665 = vpop.f32.mrf.mxu0
      %v1666 = vadd.f32 0.0, %v1665
      %v1667 = vpop.f32.mrf.mxu0
      %v1668 = vadd.f32 0.0, %v1667
      %1669 = vdwg.mxu0
      %1670 = vmatprep.subr.mxu0 0.0
      %1671 = vmatpush1.msra.mxu0 0.0
      %1672 = vmatprep.subr.mxu0 0.0
      %1673 = vmatpush1.msra.mxu0 0.0
      %1674 = vmatprep.subr.mxu0 0.0
      %1675 = vmatpush1.msra.mxu0 0.0
      %1676 = vmatprep.subr.mxu0 0.0
      %1677 = vmatpush1.msra.mxu0 0.0
      %1678 = vmatprep.subr.mxu0 0.0
      %1679 = vmatpush1.msra.mxu0 0.0
      %1680 = vmatprep.subr.mxu0 0.0
      %1681 = vmatpush1.msra.mxu0 0.0
      %1682 = vmatprep.subr.mxu0 0.0
      %1683 = vmatpush1.msra.mxu0 0.0
      %1684 = vmatprep.subr.mxu0 0.0
      %1685 = vmatpush1.msra.mxu0 0.0
      %1686 = vmatprep.subr.mxu0 0.0
      %1687 = vmatpush1.msra.mxu0 0.0
      %1688 = vmatprep.subr.mxu0 0.0
      %1689 = vmatpush1.msra.mxu0 0.0
      %1690 = vmatprep.subr.mxu0 0.0
      %1691 = vmatpush1.msra.mxu0 0.0
      %1692 = vmatprep.subr.mxu0 0.0
      %1693 = vmatpush1.msra.mxu0 0.0
      %1694 = vmatprep.subr.mxu0 0.0
      %1695 = vmatpush1.msra.mxu0 0.0
      %1696 = vmatprep.subr.mxu0 0.0
      %1697 = vmatpush1.msra.mxu0 0.0
      %1698 = vmatprep.subr.mxu0 0.0
      %1699 = vmatpush1.msra.mxu0 0.0
      %1700 = vmatprep.subr.mxu0 %v1590
      %1701 = vmatpush1.msra.mxu0 %v1589
      %1702 = vmatprep.subr.mxu0 0.0
      %1703 = vmatpush2.msra.mxu0 0.0
      %1704 = vmatprep.subr.mxu0 0.0
      %1705 = vmatpush2.msra.mxu0 0.0
      %1706 = vmatprep.subr.mxu0 0.0
      %1707 = vmatpush2.msra.mxu0 0.0
      %1708 = vmatprep.subr.mxu0 0.0
      %1709 = vmatpush2.msra.mxu0 0.0
      %1710 = vmatprep.subr.mxu0 0.0
      %1711 = vmatpush2.msra.mxu0 0.0
      %1712 = vmatprep.subr.mxu0 0.0
      %1713 = vmatpush2.msra.mxu0 0.0
      %1714 = vmatprep.subr.mxu0 0.0
      %1715 = vmatpush2.msra.mxu0 0.0
      %1716 = vmatprep.subr.mxu0 0.0
      %1717 = vmatpush2.msra.mxu0 0.0
      %1718 = vmatprep.subr.mxu0 0.0
      %1719 = vmatpush2.msra.mxu0 0.0
      %1720 = vmatprep.subr.mxu0 0.0
      %1721 = vmatpush2.msra.mxu0 0.0
      %1722 = vmatprep.subr.mxu0 0.0
      %1723 = vmatpush2.msra.mxu0 0.0
      %1724 = vmatprep.subr.mxu0 0.0
      %1725 = vmatpush2.msra.mxu0 0.0
      %1726 = vmatprep.subr.mxu0 0.0
      %1727 = vmatpush2.msra.mxu0 0.0
      %1728 = vmatprep.subr.mxu0 0.0
      %1729 = vmatpush2.msra.mxu0 0.0
      %1730 = vmatprep.subr.mxu0 0.0
      %1731 = vmatpush2.msra.mxu0 0.0
      %1732 = vmatprep.subr.mxu0 0.0
      %1733 = vmatpush2.msra.mxu0 0.0
      %1734 = vmatprep.mubr.f32.mxu0 0.0
      %1735 = vmatmul.mubr.f32.gmra.mxu0 %v1597
      %v1736 = vpop.f32.mrf.mxu0
      %v1737 = vadd.f32 0.0, %v1736
      %v1738 = vpop.f32.mrf.mxu0
      %v1739 = vadd.f32 0.0, %v1738
      %1740 = vdwg.mxu0
      %1741 = vmatprep.subr.mxu0 0.0
      %1742 = vmatpush1.msra.mxu0 0.0
      %1743 = vmatprep.subr.mxu0 0.0
      %1744 = vmatpush1.msra.mxu0 0.0
      %1745 = vmatprep.subr.mxu0 0.0
      %1746 = vmatpush1.msra.mxu0 0.0
      %1747 = vmatprep.subr.mxu0 0.0
      %1748 = vmatpush1.msra.mxu0 0.0
      %1749 = vmatprep.subr.mxu0 0.0
      %1750 = vmatpush1.msra.mxu0 0.0
      %1751 = vmatprep.subr.mxu0 0.0
      %1752 = vmatpush1.msra.mxu0 0.0
      %1753 = vmatprep.subr.mxu0 0.0
      %1754 = vmatpush1.msra.mxu0 0.0
      %1755 = vmatprep.subr.mxu0 0.0
      %1756 = vmatpush1.msra.mxu0 0.0
      %1757 = vmatprep.subr.mxu0 0.0
      %1758 = vmatpush1.msra.mxu0 0.0
      %1759 = vmatprep.subr.mxu0 0.0
      %1760 = vmatpush1.msra.mxu0 0.0
      %1761 = vmatprep.subr.mxu0 0.0
      %1762 = vmatpush1.msra.mxu0 0.0
      %1763 = vmatprep.subr.mxu0 0.0
      %1764 = vmatpush1.msra.mxu0 0.0
      %1765 = vmatprep.subr.mxu0 0.0
      %1766 = vmatpush1.msra.mxu0 0.0
      %1767 = vmatprep.subr.mxu0 0.0
      %1768 = vmatpush1.msra.mxu0 0.0
      %1769 = vmatprep.subr.mxu0 0.0
      %1770 = vmatpush1.msra.mxu0 0.0
      %1771 = vmatprep.subr.mxu0 0.0
      %1772 = vmatpush1.msra.mxu0 %v1591
      %1773 = vmatprep.subr.mxu0 0.0
      %1774 = vmatpush2.msra.mxu0 0.0
      %1775 = vmatprep.subr.mxu0 0.0
      %1776 = vmatpush2.msra.mxu0 0.0
      %1777 = vmatprep.subr.mxu0 0.0
      %1778 = vmatpush2.msra.mxu0 0.0
      %1779 = vmatprep.subr.mxu0 0.0
      %1780 = vmatpush2.msra.mxu0 0.0
      %1781 = vmatprep.subr.mxu0 0.0
      %1782 = vmatpush2.msra.mxu0 0.0
      %1783 = vmatprep.subr.mxu0 0.0
      %1784 = vmatpush2.msra.mxu0 0.0
      %1785 = vmatprep.subr.mxu0 0.0
      %1786 = vmatpush2.msra.mxu0 0.0
      %1787 = vmatprep.subr.mxu0 0.0
      %1788 = vmatpush2.msra.mxu0 0.0
      %1789 = vmatprep.subr.mxu0 0.0
      %1790 = vmatpush2.msra.mxu0 0.0
      %1791 = vmatprep.subr.mxu0 0.0
      %1792 = vmatpush2.msra.mxu0 0.0
      %1793 = vmatprep.subr.mxu0 0.0
      %1794 = vmatpush2.msra.mxu0 0.0
      %1795 = vmatprep.subr.mxu0 0.0
      %1796 = vmatpush2.msra.mxu0 0.0
      %1797 = vmatprep.subr.mxu0 0.0
      %1798 = vmatpush2.msra.mxu0 0.0
      %1799 = vmatprep.subr.mxu0 0.0
      %1800 = vmatpush2.msra.mxu0 0.0
      %1801 = vmatprep.subr.mxu0 0.0
      %1802 = vmatpush2.msra.mxu0 0.0
      %1803 = vmatprep.subr.mxu0 0.0
      %1804 = vmatpush2.msra.mxu0 0.0
      %1805 = vmatprep.mubr.f32.mxu0 0.0
      %1806 = vmatmul.mubr.f32.gmra.mxu0 %v1597
      %v1807 = vpop.f32.mrf.mxu0
      %v1808 = vadd.f32 0.0, %v1807
      %v1809 = vpop.f32.mrf.mxu0
      %1810 = vdwg.mxu0
      %v1811 = vadd.f32 %v1555, %v1666
      %v1812 = vadd.f32 %v1556, %v1668
      %v1813 = vadd.f32 %v1557, %v1737
      %v1814 = vadd.f32 %v1558, %v1739
      %v1815 = vadd.f32 %v1559, %v1808
      %1816 = vrot.lane.b32.xlu0 %v360, 80
      %v1817 = vpop.permute.xlu0 %1816
      %1818 = vrot.lane.b32.xlu0 %v1560, 111
      %v1819 = vpop.permute.xlu0 %1818
      %1820 = vrot.lane.b32.xlu0 %v1561, 111
      %v1821 = vpop.permute.xlu0 %1820
      %1822 = vrot.lane.b32.xlu0 %v1562, 111
      %v1823 = vpop.permute.xlu0 %1822
      %1824 = vrot.lane.b32.xlu0 %v1563, 111
      %v1825 = vpop.permute.xlu0 %1824
      %1826 = vrot.lane.b32.xlu0 %v1564, 111
      %v1827 = vpop.permute.xlu0 %1826
      %1828 = vrot.lane.b32.xlu0 %v1565, 111
      %v1829 = vpop.permute.xlu0 %1828
      %vm1830 = vcmask 908288
      %v1831 = vsel %vm1830, %v1819, %v1821
      %v1832 = vsel %vm1830, %v1821, %v1823
      %v1833 = vsel %vm1830, %v1823, %v1825
      %v1834 = vsel %vm1830, %v1825, %v1827
      %v1835 = vsel %vm1830, %v1827, %v1829
      %v1841 = vsel %vm399, %v1817, 0
      %1843 = vmatprep.subr.mxu0 0.0
      %1844 = vmatpush1.msra.mxu0 0.0
      %1845 = vmatprep.subr.mxu0 0.0
      %1846 = vmatpush1.msra.mxu0 0.0
      %1847 = vmatprep.subr.mxu0 0.0
      %1848 = vmatpush1.msra.mxu0 0.0
      %1849 = vmatprep.subr.mxu0 0.0
      %1850 = vmatpush1.msra.mxu0 0.0
      %1851 = vmatprep.subr.mxu0 0.0
      %1852 = vmatpush1.msra.mxu0 0.0
      %1853 = vmatprep.subr.mxu0 0.0
      %1854 = vmatpush1.msra.mxu0 0.0
      %1855 = vmatprep.subr.mxu0 0.0
      %1856 = vmatpush1.msra.mxu0 0.0
      %1857 = vmatprep.subr.mxu0 0.0
      %1858 = vmatpush1.msra.mxu0 0.0
      %1859 = vmatprep.subr.mxu0 0.0
      %1860 = vmatpush1.msra.mxu0 0.0
      %1861 = vmatprep.subr.mxu0 0.0
      %1862 = vmatpush1.msra.mxu0 0.0
      %1863 = vmatprep.subr.mxu0 0.0
      %1864 = vmatpush1.msra.mxu0 0.0
      %1865 = vmatprep.subr.mxu0 0.0
      %1866 = vmatpush1.msra.mxu0 0.0
      %1867 = vmatprep.subr.mxu0 0.0
      %1868 = vmatpush1.msra.mxu0 0.0
      %1869 = vmatprep.subr.mxu0 0.0
      %1870 = vmatpush1.msra.mxu0 0.0
      %1871 = vmatprep.subr.mxu0 0.0
      %1872 = vmatpush1.msra.mxu0 0.0
      %1873 = vmatprep.subr.mxu0 %v1832
      %1874 = vmatpush1.msra.mxu0 %v1831
      %1875 = vmatprep.subr.mxu0 0.0
      %1876 = vmatpush2.msra.mxu0 0.0
      %1877 = vmatprep.subr.mxu0 0.0
      %1878 = vmatpush2.msra.mxu0 0.0
      %1879 = vmatprep.subr.mxu0 0.0
      %1880 = vmatpush2.msra.mxu0 0.0
      %1881 = vmatprep.subr.mxu0 0.0
      %1882 = vmatpush2.msra.mxu0 0.0
      %1883 = vmatprep.subr.mxu0 0.0
      %1884 = vmatpush2.msra.mxu0 0.0
      %1885 = vmatprep.subr.mxu0 0.0
      %1886 = vmatpush2.msra.mxu0 0.0
      %1887 = vmatprep.subr.mxu0 0.0
      %1888 = vmatpush2.msra.mxu0 0.0
      %1889 = vmatprep.subr.mxu0 0.0
      %1890 = vmatpush2.msra.mxu0 0.0
      %1891 = vmatprep.subr.mxu0 0.0
      %1892 = vmatpush2.msra.mxu0 0.0
      %1893 = vmatprep.subr.mxu0 0.0
      %1894 = vmatpush2.msra.mxu0 0.0
      %1895 = vmatprep.subr.mxu0 0.0
      %1896 = vmatpush2.msra.mxu0 0.0
      %1897 = vmatprep.subr.mxu0 0.0
      %1898 = vmatpush2.msra.mxu0 0.0
      %1899 = vmatprep.subr.mxu0 0.0
      %1900 = vmatpush2.msra.mxu0 0.0
      %1901 = vmatprep.subr.mxu0 0.0
      %1902 = vmatpush2.msra.mxu0 0.0
      %1903 = vmatprep.subr.mxu0 0.0
      %1904 = vmatpush2.msra.mxu0 0.0
      %1905 = vmatprep.subr.mxu0 0.0
      %1906 = vmatpush2.msra.mxu0 0.0
      %1907 = vmatprep.mubr.f32.mxu0 0.0
      %1908 = vmatmul.mubr.f32.gmra.mxu0 %v1841
      %v1909 = vpop.f32.mrf.mxu0
      %v1910 = vadd.f32 0.0, %v1909
      %v1911 = vpop.f32.mrf.mxu0
      %v1912 = vadd.f32 0.0, %v1911
      %1913 = vdwg.mxu0
      %1914 = vmatprep.subr.mxu0 0.0
      %1915 = vmatpush1.msra.mxu0 0.0
      %1916 = vmatprep.subr.mxu0 0.0
      %1917 = vmatpush1.msra.mxu0 0.0
      %1918 = vmatprep.subr.mxu0 0.0
      %1919 = vmatpush1.msra.mxu0 0.0
      %1920 = vmatprep.subr.mxu0 0.0
      %1921 = vmatpush1.msra.mxu0 0.0
      %1922 = vmatprep.subr.mxu0 0.0
      %1923 = vmatpush1.msra.mxu0 0.0
      %1924 = vmatprep.subr.mxu0 0.0
      %1925 = vmatpush1.msra.mxu0 0.0
      %1926 = vmatprep.subr.mxu0 0.0
      %1927 = vmatpush1.msra.mxu0 0.0
      %1928 = vmatprep.subr.mxu0 0.0
      %1929 = vmatpush1.msra.mxu0 0.0
      %1930 = vmatprep.subr.mxu0 0.0
      %1931 = vmatpush1.msra.mxu0 0.0
      %1932 = vmatprep.subr.mxu0 0.0
      %1933 = vmatpush1.msra.mxu0 0.0
      %1934 = vmatprep.subr.mxu0 0.0
      %1935 = vmatpush1.msra.mxu0 0.0
      %1936 = vmatprep.subr.mxu0 0.0
      %1937 = vmatpush1.msra.mxu0 0.0
      %1938 = vmatprep.subr.mxu0 0.0
      %1939 = vmatpush1.msra.mxu0 0.0
      %1940 = vmatprep.subr.mxu0 0.0
      %1941 = vmatpush1.msra.mxu0 0.0
      %1942 = vmatprep.subr.mxu0 0.0
      %1943 = vmatpush1.msra.mxu0 0.0
      %1944 = vmatprep.subr.mxu0 %v1834
      %1945 = vmatpush1.msra.mxu0 %v1833
      %1946 = vmatprep.subr.mxu0 0.0
      %1947 = vmatpush2.msra.mxu0 0.0
      %1948 = vmatprep.subr.mxu0 0.0
      %1949 = vmatpush2.msra.mxu0 0.0
      %1950 = vmatprep.subr.mxu0 0.0
      %1951 = vmatpush2.msra.mxu0 0.0
      %1952 = vmatprep.subr.mxu0 0.0
      %1953 = vmatpush2.msra.mxu0 0.0
      %1954 = vmatprep.subr.mxu0 0.0
      %1955 = vmatpush2.msra.mxu0 0.0
      %1956 = vmatprep.subr.mxu0 0.0
      %1957 = vmatpush2.msra.mxu0 0.0
      %1958 = vmatprep.subr.mxu0 0.0
      %1959 = vmatpush2.msra.mxu0 0.0
      %1960 = vmatprep.subr.mxu0 0.0
      %1961 = vmatpush2.msra.mxu0 0.0
      %1962 = vmatprep.subr.mxu0 0.0
      %1963 = vmatpush2.msra.mxu0 0.0
      %1964 = vmatprep.subr.mxu0 0.0
      %1965 = vmatpush2.msra.mxu0 0.0
      %1966 = vmatprep.subr.mxu0 0.0
      %1967 = vmatpush2.msra.mxu0 0.0
      %1968 = vmatprep.subr.mxu0 0.0
      %1969 = vmatpush2.msra.mxu0 0.0
      %1970 = vmatprep.subr.mxu0 0.0
      %1971 = vmatpush2.msra.mxu0 0.0
      %1972 = vmatprep.subr.mxu0 0.0
      %1973 = vmatpush2.msra.mxu0 0.0
      %1974 = vmatprep.subr.mxu0 0.0
      %1975 = vmatpush2.msra.mxu0 0.0
      %1976 = vmatprep.subr.mxu0 0.0
      %1977 = vmatpush2.msra.mxu0 0.0
      %1978 = vmatprep.mubr.f32.mxu0 0.0
      %1979 = vmatmul.mubr.f32.gmra.mxu0 %v1841
      %v1980 = vpop.f32.mrf.mxu0
      %v1981 = vadd.f32 0.0, %v1980
      %v1982 = vpop.f32.mrf.mxu0
      %v1983 = vadd.f32 0.0, %v1982
      %1984 = vdwg.mxu0
      %1985 = vmatprep.subr.mxu0 0.0
      %1986 = vmatpush1.msra.mxu0 0.0
      %1987 = vmatprep.subr.mxu0 0.0
      %1988 = vmatpush1.msra.mxu0 0.0
      %1989 = vmatprep.subr.mxu0 0.0
      %1990 = vmatpush1.msra.mxu0 0.0
      %1991 = vmatprep.subr.mxu0 0.0
      %1992 = vmatpush1.msra.mxu0 0.0
      %1993 = vmatprep.subr.mxu0 0.0
      %1994 = vmatpush1.msra.mxu0 0.0
      %1995 = vmatprep.subr.mxu0 0.0
      %1996 = vmatpush1.msra.mxu0 0.0
      %1997 = vmatprep.subr.mxu0 0.0
      %1998 = vmatpush1.msra.mxu0 0.0
      %1999 = vmatprep.subr.mxu0 0.0
      %2000 = vmatpush1.msra.mxu0 0.0
      %2001 = vmatprep.subr.mxu0 0.0
      %2002 = vmatpush1.msra.mxu0 0.0
      %2003 = vmatprep.subr.mxu0 0.0
      %2004 = vmatpush1.msra.mxu0 0.0
      %2005 = vmatprep.subr.mxu0 0.0
      %2006 = vmatpush1.msra.mxu0 0.0
      %2007 = vmatprep.subr.mxu0 0.0
      %2008 = vmatpush1.msra.mxu0 0.0
      %2009 = vmatprep.subr.mxu0 0.0
      %2010 = vmatpush1.msra.mxu0 0.0
      %2011 = vmatprep.subr.mxu0 0.0
      %2012 = vmatpush1.msra.mxu0 0.0
      %2013 = vmatprep.subr.mxu0 0.0
      %2014 = vmatpush1.msra.mxu0 0.0
      %2015 = vmatprep.subr.mxu0 0.0
      %2016 = vmatpush1.msra.mxu0 %v1835
      %2017 = vmatprep.subr.mxu0 0.0
      %2018 = vmatpush2.msra.mxu0 0.0
      %2019 = vmatprep.subr.mxu0 0.0
      %2020 = vmatpush2.msra.mxu0 0.0
      %2021 = vmatprep.subr.mxu0 0.0
      %2022 = vmatpush2.msra.mxu0 0.0
      %2023 = vmatprep.subr.mxu0 0.0
      %2024 = vmatpush2.msra.mxu0 0.0
      %2025 = vmatprep.subr.mxu0 0.0
      %2026 = vmatpush2.msra.mxu0 0.0
      %2027 = vmatprep.subr.mxu0 0.0
      %2028 = vmatpush2.msra.mxu0 0.0
      %2029 = vmatprep.subr.mxu0 0.0
      %2030 = vmatpush2.msra.mxu0 0.0
      %2031 = vmatprep.subr.mxu0 0.0
      %2032 = vmatpush2.msra.mxu0 0.0
      %2033 = vmatprep.subr.mxu0 0.0
      %2034 = vmatpush2.msra.mxu0 0.0
      %2035 = vmatprep.subr.mxu0 0.0
      %2036 = vmatpush2.msra.mxu0 0.0
      %2037 = vmatprep.subr.mxu0 0.0
      %2038 = vmatpush2.msra.mxu0 0.0
      %2039 = vmatprep.subr.mxu0 0.0
      %2040 = vmatpush2.msra.mxu0 0.0
      %2041 = vmatprep.subr.mxu0 0.0
      %2042 = vmatpush2.msra.mxu0 0.0
      %2043 = vmatprep.subr.mxu0 0.0
      %2044 = vmatpush2.msra.mxu0 0.0
      %2045 = vmatprep.subr.mxu0 0.0
      %2046 = vmatpush2.msra.mxu0 0.0
      %2047 = vmatprep.subr.mxu0 0.0
      %2048 = vmatpush2.msra.mxu0 0.0
      %2049 = vmatprep.mubr.f32.mxu0 0.0
      %2050 = vmatmul.mubr.f32.gmra.mxu0 %v1841
      %v2051 = vpop.f32.mrf.mxu0
      %v2052 = vadd.f32 0.0, %v2051
      %v2053 = vpop.f32.mrf.mxu0
      %2054 = vdwg.mxu0
      %v2055 = vadd.f32 %v1811, %v1910
      %v2056 = vadd.f32 %v1812, %v1912
      %v2057 = vadd.f32 %v1813, %v1981
      %v2058 = vadd.f32 %v1814, %v1983
      %v2059 = vadd.f32 %v1815, %v2052
      %2060 = vrot.lane.b32.xlu0 %v360, 72
      %v2061 = vpop.permute.xlu0 %2060
      %2062 = vrot.lane.b32.xlu0 %v1560, 110
      %v2063 = vpop.permute.xlu0 %2062
      %2064 = vrot.lane.b32.xlu0 %v1561, 110
      %v2065 = vpop.permute.xlu0 %2064
      %2066 = vrot.lane.b32.xlu0 %v1562, 110
      %v2067 = vpop.permute.xlu0 %2066
      %2068 = vrot.lane.b32.xlu0 %v1563, 110
      %v2069 = vpop.permute.xlu0 %2068
      %2070 = vrot.lane.b32.xlu0 %v1564, 110
      %v2071 = vpop.permute.xlu0 %2070
      %2072 = vrot.lane.b32.xlu0 %v1565, 110
      %v2073 = vpop.permute.xlu0 %2072
      %vm2074 = vcmask 900096
      %v2075 = vsel %vm2074, %v2063, %v2065
      %v2076 = vsel %vm2074, %v2065, %v2067
      %v2077 = vsel %vm2074, %v2067, %v2069
      %v2078 = vsel %vm2074, %v2069, %v2071
      %v2079 = vsel %vm2074, %v2071, %v2073
      %v2085 = vsel %vm399, %v2061, 0
      %2087 = vmatprep.subr.mxu0 0.0
      %2088 = vmatpush1.msra.mxu0 0.0
      %2089 = vmatprep.subr.mxu0 0.0
      %2090 = vmatpush1.msra.mxu0 0.0
      %2091 = vmatprep.subr.mxu0 0.0
      %2092 = vmatpush1.msra.mxu0 0.0
      %2093 = vmatprep.subr.mxu0 0.0
      %2094 = vmatpush1.msra.mxu0 0.0
      %2095 = vmatprep.subr.mxu0 0.0
      %2096 = vmatpush1.msra.mxu0 0.0
      %2097 = vmatprep.subr.mxu0 0.0
      %2098 = vmatpush1.msra.mxu0 0.0
      %2099 = vmatprep.subr.mxu0 0.0
      %2100 = vmatpush1.msra.mxu0 0.0
      %2101 = vmatprep.subr.mxu0 0.0
      %2102 = vmatpush1.msra.mxu0 0.0
      %2103 = vmatprep.subr.mxu0 0.0
      %2104 = vmatpush1.msra.mxu0 0.0
      %2105 = vmatprep.subr.mxu0 0.0
      %2106 = vmatpush1.msra.mxu0 0.0
      %2107 = vmatprep.subr.mxu0 0.0
      %2108 = vmatpush1.msra.mxu0 0.0
      %2109 = vmatprep.subr.mxu0 0.0
      %2110 = vmatpush1.msra.mxu0 0.0
      %2111 = vmatprep.subr.mxu0 0.0
      %2112 = vmatpush1.msra.mxu0 0.0
      %2113 = vmatprep.subr.mxu0 0.0
      %2114 = vmatpush1.msra.mxu0 0.0
      %2115 = vmatprep.subr.mxu0 0.0
      %2116 = vmatpush1.msra.mxu0 0.0
      %2117 = vmatprep.subr.mxu0 %v2076
      %2118 = vmatpush1.msra.mxu0 %v2075
      %2119 = vmatprep.subr.mxu0 0.0
      %2120 = vmatpush2.msra.mxu0 0.0
      %2121 = vmatprep.subr.mxu0 0.0
      %2122 = vmatpush2.msra.mxu0 0.0
      %2123 = vmatprep.subr.mxu0 0.0
      %2124 = vmatpush2.msra.mxu0 0.0
      %2125 = vmatprep.subr.mxu0 0.0
      %2126 = vmatpush2.msra.mxu0 0.0
      %2127 = vmatprep.subr.mxu0 0.0
      %2128 = vmatpush2.msra.mxu0 0.0
      %2129 = vmatprep.subr.mxu0 0.0
      %2130 = vmatpush2.msra.mxu0 0.0
      %2131 = vmatprep.subr.mxu0 0.0
      %2132 = vmatpush2.msra.mxu0 0.0
      %2133 = vmatprep.subr.mxu0 0.0
      %2134 = vmatpush2.msra.mxu0 0.0
      %2135 = vmatprep.subr.mxu0 0.0
      %2136 = vmatpush2.msra.mxu0 0.0
      %2137 = vmatprep.subr.mxu0 0.0
      %2138 = vmatpush2.msra.mxu0 0.0
      %2139 = vmatprep.subr.mxu0 0.0
      %2140 = vmatpush2.msra.mxu0 0.0
      %2141 = vmatprep.subr.mxu0 0.0
      %2142 = vmatpush2.msra.mxu0 0.0
      %2143 = vmatprep.subr.mxu0 0.0
      %2144 = vmatpush2.msra.mxu0 0.0
      %2145 = vmatprep.subr.mxu0 0.0
      %2146 = vmatpush2.msra.mxu0 0.0
      %2147 = vmatprep.subr.mxu0 0.0
      %2148 = vmatpush2.msra.mxu0 0.0
      %2149 = vmatprep.subr.mxu0 0.0
      %2150 = vmatpush2.msra.mxu0 0.0
      %2151 = vmatprep.mubr.f32.mxu0 0.0
      %2152 = vmatmul.mubr.f32.gmra.mxu0 %v2085
      %v2153 = vpop.f32.mrf.mxu0
      %v2154 = vadd.f32 0.0, %v2153
      %v2155 = vpop.f32.mrf.mxu0
      %v2156 = vadd.f32 0.0, %v2155
      %2157 = vdwg.mxu0
      %2158 = vmatprep.subr.mxu0 0.0
      %2159 = vmatpush1.msra.mxu0 0.0
      %2160 = vmatprep.subr.mxu0 0.0
      %2161 = vmatpush1.msra.mxu0 0.0
      %2162 = vmatprep.subr.mxu0 0.0
      %2163 = vmatpush1.msra.mxu0 0.0
      %2164 = vmatprep.subr.mxu0 0.0
      %2165 = vmatpush1.msra.mxu0 0.0
      %2166 = vmatprep.subr.mxu0 0.0
      %2167 = vmatpush1.msra.mxu0 0.0
      %2168 = vmatprep.subr.mxu0 0.0
      %2169 = vmatpush1.msra.mxu0 0.0
      %2170 = vmatprep.subr.mxu0 0.0
      %2171 = vmatpush1.msra.mxu0 0.0
      %2172 = vmatprep.subr.mxu0 0.0
      %2173 = vmatpush1.msra.mxu0 0.0
      %2174 = vmatprep.subr.mxu0 0.0
      %2175 = vmatpush1.msra.mxu0 0.0
      %2176 = vmatprep.subr.mxu0 0.0
      %2177 = vmatpush1.msra.mxu0 0.0
      %2178 = vmatprep.subr.mxu0 0.0
      %2179 = vmatpush1.msra.mxu0 0.0
      %2180 = vmatprep.subr.mxu0 0.0
      %2181 = vmatpush1.msra.mxu0 0.0
      %2182 = vmatprep.subr.mxu0 0.0
      %2183 = vmatpush1.msra.mxu0 0.0
      %2184 = vmatprep.subr.mxu0 0.0
      %2185 = vmatpush1.msra.mxu0 0.0
      %2186 = vmatprep.subr.mxu0 0.0
      %2187 = vmatpush1.msra.mxu0 0.0
      %2188 = vmatprep.subr.mxu0 %v2078
      %2189 = vmatpush1.msra.mxu0 %v2077
      %2190 = vmatprep.subr.mxu0 0.0
      %2191 = vmatpush2.msra.mxu0 0.0
      %2192 = vmatprep.subr.mxu0 0.0
      %2193 = vmatpush2.msra.mxu0 0.0
      %2194 = vmatprep.subr.mxu0 0.0
      %2195 = vmatpush2.msra.mxu0 0.0
      %2196 = vmatprep.subr.mxu0 0.0
      %2197 = vmatpush2.msra.mxu0 0.0
      %2198 = vmatprep.subr.mxu0 0.0
      %2199 = vmatpush2.msra.mxu0 0.0
      %2200 = vmatprep.subr.mxu0 0.0
      %2201 = vmatpush2.msra.mxu0 0.0
      %2202 = vmatprep.subr.mxu0 0.0
      %2203 = vmatpush2.msra.mxu0 0.0
      %2204 = vmatprep.subr.mxu0 0.0
      %2205 = vmatpush2.msra.mxu0 0.0
      %2206 = vmatprep.subr.mxu0 0.0
      %2207 = vmatpush2.msra.mxu0 0.0
      %2208 = vmatprep.subr.mxu0 0.0
      %2209 = vmatpush2.msra.mxu0 0.0
      %2210 = vmatprep.subr.mxu0 0.0
      %2211 = vmatpush2.msra.mxu0 0.0
      %2212 = vmatprep.subr.mxu0 0.0
      %2213 = vmatpush2.msra.mxu0 0.0
      %2214 = vmatprep.subr.mxu0 0.0
      %2215 = vmatpush2.msra.mxu0 0.0
      %2216 = vmatprep.subr.mxu0 0.0
      %2217 = vmatpush2.msra.mxu0 0.0
      %2218 = vmatprep.subr.mxu0 0.0
      %2219 = vmatpush2.msra.mxu0 0.0
      %2220 = vmatprep.subr.mxu0 0.0
      %2221 = vmatpush2.msra.mxu0 0.0
      %2222 = vmatprep.mubr.f32.mxu0 0.0
      %2223 = vmatmul.mubr.f32.gmra.mxu0 %v2085
      %v2224 = vpop.f32.mrf.mxu0
      %v2225 = vadd.f32 0.0, %v2224
      %v2226 = vpop.f32.mrf.mxu0
      %v2227 = vadd.f32 0.0, %v2226
      %2228 = vdwg.mxu0
      %2229 = vmatprep.subr.mxu0 0.0
      %2230 = vmatpush1.msra.mxu0 0.0
      %2231 = vmatprep.subr.mxu0 0.0
      %2232 = vmatpush1.msra.mxu0 0.0
      %2233 = vmatprep.subr.mxu0 0.0
      %2234 = vmatpush1.msra.mxu0 0.0
      %2235 = vmatprep.subr.mxu0 0.0
      %2236 = vmatpush1.msra.mxu0 0.0
      %2237 = vmatprep.subr.mxu0 0.0
      %2238 = vmatpush1.msra.mxu0 0.0
      %2239 = vmatprep.subr.mxu0 0.0
      %2240 = vmatpush1.msra.mxu0 0.0
      %2241 = vmatprep.subr.mxu0 0.0
      %2242 = vmatpush1.msra.mxu0 0.0
      %2243 = vmatprep.subr.mxu0 0.0
      %2244 = vmatpush1.msra.mxu0 0.0
      %2245 = vmatprep.subr.mxu0 0.0
      %2246 = vmatpush1.msra.mxu0 0.0
      %2247 = vmatprep.subr.mxu0 0.0
      %2248 = vmatpush1.msra.mxu0 0.0
      %2249 = vmatprep.subr.mxu0 0.0
      %2250 = vmatpush1.msra.mxu0 0.0
      %2251 = vmatprep.subr.mxu0 0.0
      %2252 = vmatpush1.msra.mxu0 0.0
      %2253 = vmatprep.subr.mxu0 0.0
      %2254 = vmatpush1.msra.mxu0 0.0
      %2255 = vmatprep.subr.mxu0 0.0
      %2256 = vmatpush1.msra.mxu0 0.0
      %2257 = vmatprep.subr.mxu0 0.0
      %2258 = vmatpush1.msra.mxu0 0.0
      %2259 = vmatprep.subr.mxu0 0.0
      %2260 = vmatpush1.msra.mxu0 %v2079
      %2261 = vmatprep.subr.mxu0 0.0
      %2262 = vmatpush2.msra.mxu0 0.0
      %2263 = vmatprep.subr.mxu0 0.0
      %2264 = vmatpush2.msra.mxu0 0.0
      %2265 = vmatprep.subr.mxu0 0.0
      %2266 = vmatpush2.msra.mxu0 0.0
      %2267 = vmatprep.subr.mxu0 0.0
      %2268 = vmatpush2.msra.mxu0 0.0
      %2269 = vmatprep.subr.mxu0 0.0
      %2270 = vmatpush2.msra.mxu0 0.0
      %2271 = vmatprep.subr.mxu0 0.0
      %2272 = vmatpush2.msra.mxu0 0.0
      %2273 = vmatprep.subr.mxu0 0.0
      %2274 = vmatpush2.msra.mxu0 0.0
      %2275 = vmatprep.subr.mxu0 0.0
      %2276 = vmatpush2.msra.mxu0 0.0
      %2277 = vmatprep.subr.mxu0 0.0
      %2278 = vmatpush2.msra.mxu0 0.0
      %2279 = vmatprep.subr.mxu0 0.0
      %2280 = vmatpush2.msra.mxu0 0.0
      %2281 = vmatprep.subr.mxu0 0.0
      %2282 = vmatpush2.msra.mxu0 0.0
      %2283 = vmatprep.subr.mxu0 0.0
      %2284 = vmatpush2.msra.mxu0 0.0
      %2285 = vmatprep.subr.mxu0 0.0
      %2286 = vmatpush2.msra.mxu0 0.0
      %2287 = vmatprep.subr.mxu0 0.0
      %2288 = vmatpush2.msra.mxu0 0.0
      %2289 = vmatprep.subr.mxu0 0.0
      %2290 = vmatpush2.msra.mxu0 0.0
      %2291 = vmatprep.subr.mxu0 0.0
      %2292 = vmatpush2.msra.mxu0 0.0
      %2293 = vmatprep.mubr.f32.mxu0 0.0
      %2294 = vmatmul.mubr.f32.gmra.mxu0 %v2085
      %v2295 = vpop.f32.mrf.mxu0
      %v2296 = vadd.f32 0.0, %v2295
      %v2297 = vpop.f32.mrf.mxu0
      %2298 = vdwg.mxu0
      %v2299 = vadd.f32 %v2055, %v2154
      %v2300 = vadd.f32 %v2056, %v2156
      %v2301 = vadd.f32 %v2057, %v2225
      %v2302 = vadd.f32 %v2058, %v2227
      %v2303 = vadd.f32 %v2059, %v2296
      %2304 = vrot.lane.b32.xlu0 %v360, 64
      %v2305 = vpop.permute.xlu0 %2304
      %2306 = vrot.lane.b32.xlu0 %v1560, 109
      %v2307 = vpop.permute.xlu0 %2306
      %2308 = vrot.lane.b32.xlu0 %v1561, 109
      %v2309 = vpop.permute.xlu0 %2308
      %2310 = vrot.lane.b32.xlu0 %v1562, 109
      %v2311 = vpop.permute.xlu0 %2310
      %2312 = vrot.lane.b32.xlu0 %v1563, 109
      %v2313 = vpop.permute.xlu0 %2312
      %2314 = vrot.lane.b32.xlu0 %v1564, 109
      %v2315 = vpop.permute.xlu0 %2314
      %2316 = vrot.lane.b32.xlu0 %v1565, 109
      %v2317 = vpop.permute.xlu0 %2316
      %vm2318 = vcmask 891904
      %v2319 = vsel %vm2318, %v2307, %v2309
      %v2320 = vsel %vm2318, %v2309, %v2311
      %v2321 = vsel %vm2318, %v2311, %v2313
      %v2322 = vsel %vm2318, %v2313, %v2315
      %v2323 = vsel %vm2318, %v2315, %v2317
      %v2329 = vsel %vm399, %v2305, 0
      %2331 = vmatprep.subr.mxu0 0.0
      %2332 = vmatpush1.msra.mxu0 0.0
      %2333 = vmatprep.subr.mxu0 0.0
      %2334 = vmatpush1.msra.mxu0 0.0
      %2335 = vmatprep.subr.mxu0 0.0
      %2336 = vmatpush1.msra.mxu0 0.0
      %2337 = vmatprep.subr.mxu0 0.0
      %2338 = vmatpush1.msra.mxu0 0.0
      %2339 = vmatprep.subr.mxu0 0.0
      %2340 = vmatpush1.msra.mxu0 0.0
      %2341 = vmatprep.subr.mxu0 0.0
      %2342 = vmatpush1.msra.mxu0 0.0
      %2343 = vmatprep.subr.mxu0 0.0
      %2344 = vmatpush1.msra.mxu0 0.0
      %2345 = vmatprep.subr.mxu0 0.0
      %2346 = vmatpush1.msra.mxu0 0.0
      %2347 = vmatprep.subr.mxu0 0.0
      %2348 = vmatpush1.msra.mxu0 0.0
      %2349 = vmatprep.subr.mxu0 0.0
      %2350 = vmatpush1.msra.mxu0 0.0
      %2351 = vmatprep.subr.mxu0 0.0
      %2352 = vmatpush1.msra.mxu0 0.0
      %2353 = vmatprep.subr.mxu0 0.0
      %2354 = vmatpush1.msra.mxu0 0.0
      %2355 = vmatprep.subr.mxu0 0.0
      %2356 = vmatpush1.msra.mxu0 0.0
      %2357 = vmatprep.subr.mxu0 0.0
      %2358 = vmatpush1.msra.mxu0 0.0
      %2359 = vmatprep.subr.mxu0 0.0
      %2360 = vmatpush1.msra.mxu0 0.0
      %2361 = vmatprep.subr.mxu0 %v2320
      %2362 = vmatpush1.msra.mxu0 %v2319
      %2363 = vmatprep.subr.mxu0 0.0
      %2364 = vmatpush2.msra.mxu0 0.0
      %2365 = vmatprep.subr.mxu0 0.0
      %2366 = vmatpush2.msra.mxu0 0.0
      %2367 = vmatprep.subr.mxu0 0.0
      %2368 = vmatpush2.msra.mxu0 0.0
      %2369 = vmatprep.subr.mxu0 0.0
      %2370 = vmatpush2.msra.mxu0 0.0
      %2371 = vmatprep.subr.mxu0 0.0
      %2372 = vmatpush2.msra.mxu0 0.0
      %2373 = vmatprep.subr.mxu0 0.0
      %2374 = vmatpush2.msra.mxu0 0.0
      %2375 = vmatprep.subr.mxu0 0.0
      %2376 = vmatpush2.msra.mxu0 0.0
      %2377 = vmatprep.subr.mxu0 0.0
      %2378 = vmatpush2.msra.mxu0 0.0
      %2379 = vmatprep.subr.mxu0 0.0
      %2380 = vmatpush2.msra.mxu0 0.0
      %2381 = vmatprep.subr.mxu0 0.0
      %2382 = vmatpush2.msra.mxu0 0.0
      %2383 = vmatprep.subr.mxu0 0.0
      %2384 = vmatpush2.msra.mxu0 0.0
      %2385 = vmatprep.subr.mxu0 0.0
      %2386 = vmatpush2.msra.mxu0 0.0
      %2387 = vmatprep.subr.mxu0 0.0
      %2388 = vmatpush2.msra.mxu0 0.0
      %2389 = vmatprep.subr.mxu0 0.0
      %2390 = vmatpush2.msra.mxu0 0.0
      %2391 = vmatprep.subr.mxu0 0.0
      %2392 = vmatpush2.msra.mxu0 0.0
      %2393 = vmatprep.subr.mxu0 0.0
      %2394 = vmatpush2.msra.mxu0 0.0
      %2395 = vmatprep.mubr.f32.mxu0 0.0
      %2396 = vmatmul.mubr.f32.gmra.mxu0 %v2329
      %v2397 = vpop.f32.mrf.mxu0
      %v2398 = vadd.f32 0.0, %v2397
      %v2399 = vpop.f32.mrf.mxu0
      %v2400 = vadd.f32 0.0, %v2399
      %2401 = vdwg.mxu0
      %2402 = vmatprep.subr.mxu0 0.0
      %2403 = vmatpush1.msra.mxu0 0.0
      %2404 = vmatprep.subr.mxu0 0.0
      %2405 = vmatpush1.msra.mxu0 0.0
      %2406 = vmatprep.subr.mxu0 0.0
      %2407 = vmatpush1.msra.mxu0 0.0
      %2408 = vmatprep.subr.mxu0 0.0
      %2409 = vmatpush1.msra.mxu0 0.0
      %2410 = vmatprep.subr.mxu0 0.0
      %2411 = vmatpush1.msra.mxu0 0.0
      %2412 = vmatprep.subr.mxu0 0.0
      %2413 = vmatpush1.msra.mxu0 0.0
      %2414 = vmatprep.subr.mxu0 0.0
      %2415 = vmatpush1.msra.mxu0 0.0
      %2416 = vmatprep.subr.mxu0 0.0
      %2417 = vmatpush1.msra.mxu0 0.0
      %2418 = vmatprep.subr.mxu0 0.0
      %2419 = vmatpush1.msra.mxu0 0.0
      %2420 = vmatprep.subr.mxu0 0.0
      %2421 = vmatpush1.msra.mxu0 0.0
      %2422 = vmatprep.subr.mxu0 0.0
      %2423 = vmatpush1.msra.mxu0 0.0
      %2424 = vmatprep.subr.mxu0 0.0
      %2425 = vmatpush1.msra.mxu0 0.0
      %2426 = vmatprep.subr.mxu0 0.0
      %2427 = vmatpush1.msra.mxu0 0.0
      %2428 = vmatprep.subr.mxu0 0.0
      %2429 = vmatpush1.msra.mxu0 0.0
      %2430 = vmatprep.subr.mxu0 0.0
      %2431 = vmatpush1.msra.mxu0 0.0
      %2432 = vmatprep.subr.mxu0 %v2322
      %2433 = vmatpush1.msra.mxu0 %v2321
      %2434 = vmatprep.subr.mxu0 0.0
      %2435 = vmatpush2.msra.mxu0 0.0
      %2436 = vmatprep.subr.mxu0 0.0
      %2437 = vmatpush2.msra.mxu0 0.0
      %2438 = vmatprep.subr.mxu0 0.0
      %2439 = vmatpush2.msra.mxu0 0.0
      %2440 = vmatprep.subr.mxu0 0.0
      %2441 = vmatpush2.msra.mxu0 0.0
      %2442 = vmatprep.subr.mxu0 0.0
      %2443 = vmatpush2.msra.mxu0 0.0
      %2444 = vmatprep.subr.mxu0 0.0
      %2445 = vmatpush2.msra.mxu0 0.0
      %2446 = vmatprep.subr.mxu0 0.0
      %2447 = vmatpush2.msra.mxu0 0.0
      %2448 = vmatprep.subr.mxu0 0.0
      %2449 = vmatpush2.msra.mxu0 0.0
      %2450 = vmatprep.subr.mxu0 0.0
      %2451 = vmatpush2.msra.mxu0 0.0
      %2452 = vmatprep.subr.mxu0 0.0
      %2453 = vmatpush2.msra.mxu0 0.0
      %2454 = vmatprep.subr.mxu0 0.0
      %2455 = vmatpush2.msra.mxu0 0.0
      %2456 = vmatprep.subr.mxu0 0.0
      %2457 = vmatpush2.msra.mxu0 0.0
      %2458 = vmatprep.subr.mxu0 0.0
      %2459 = vmatpush2.msra.mxu0 0.0
      %2460 = vmatprep.subr.mxu0 0.0
      %2461 = vmatpush2.msra.mxu0 0.0
      %2462 = vmatprep.subr.mxu0 0.0
      %2463 = vmatpush2.msra.mxu0 0.0
      %2464 = vmatprep.subr.mxu0 0.0
      %2465 = vmatpush2.msra.mxu0 0.0
      %2466 = vmatprep.mubr.f32.mxu0 0.0
      %2467 = vmatmul.mubr.f32.gmra.mxu0 %v2329
      %v2468 = vpop.f32.mrf.mxu0
      %v2469 = vadd.f32 0.0, %v2468
      %v2470 = vpop.f32.mrf.mxu0
      %v2471 = vadd.f32 0.0, %v2470
      %2472 = vdwg.mxu0
      %2473 = vmatprep.subr.mxu0 0.0
      %2474 = vmatpush1.msra.mxu0 0.0
      %2475 = vmatprep.subr.mxu0 0.0
      %2476 = vmatpush1.msra.mxu0 0.0
      %2477 = vmatprep.subr.mxu0 0.0
      %2478 = vmatpush1.msra.mxu0 0.0
      %2479 = vmatprep.subr.mxu0 0.0
      %2480 = vmatpush1.msra.mxu0 0.0
      %2481 = vmatprep.subr.mxu0 0.0
      %2482 = vmatpush1.msra.mxu0 0.0
      %2483 = vmatprep.subr.mxu0 0.0
      %2484 = vmatpush1.msra.mxu0 0.0
      %2485 = vmatprep.subr.mxu0 0.0
      %2486 = vmatpush1.msra.mxu0 0.0
      %2487 = vmatprep.subr.mxu0 0.0
      %2488 = vmatpush1.msra.mxu0 0.0
      %2489 = vmatprep.subr.mxu0 0.0
      %2490 = vmatpush1.msra.mxu0 0.0
      %2491 = vmatprep.subr.mxu0 0.0
      %2492 = vmatpush1.msra.mxu0 0.0
      %2493 = vmatprep.subr.mxu0 0.0
      %2494 = vmatpush1.msra.mxu0 0.0
      %2495 = vmatprep.subr.mxu0 0.0
      %2496 = vmatpush1.msra.mxu0 0.0
      %2497 = vmatprep.subr.mxu0 0.0
      %2498 = vmatpush1.msra.mxu0 0.0
      %2499 = vmatprep.subr.mxu0 0.0
      %2500 = vmatpush1.msra.mxu0 0.0
      %2501 = vmatprep.subr.mxu0 0.0
      %2502 = vmatpush1.msra.mxu0 0.0
      %2503 = vmatprep.subr.mxu0 0.0
      %2504 = vmatpush1.msra.mxu0 %v2323
      %2505 = vmatprep.subr.mxu0 0.0
      %2506 = vmatpush2.msra.mxu0 0.0
      %2507 = vmatprep.subr.mxu0 0.0
      %2508 = vmatpush2.msra.mxu0 0.0
      %2509 = vmatprep.subr.mxu0 0.0
      %2510 = vmatpush2.msra.mxu0 0.0
      %2511 = vmatprep.subr.mxu0 0.0
      %2512 = vmatpush2.msra.mxu0 0.0
      %2513 = vmatprep.subr.mxu0 0.0
      %2514 = vmatpush2.msra.mxu0 0.0
      %2515 = vmatprep.subr.mxu0 0.0
      %2516 = vmatpush2.msra.mxu0 0.0
      %2517 = vmatprep.subr.mxu0 0.0
      %2518 = vmatpush2.msra.mxu0 0.0
      %2519 = vmatprep.subr.mxu0 0.0
      %2520 = vmatpush2.msra.mxu0 0.0
      %2521 = vmatprep.subr.mxu0 0.0
      %2522 = vmatpush2.msra.mxu0 0.0
      %2523 = vmatprep.subr.mxu0 0.0
      %2524 = vmatpush2.msra.mxu0 0.0
      %2525 = vmatprep.subr.mxu0 0.0
      %2526 = vmatpush2.msra.mxu0 0.0
      %2527 = vmatprep.subr.mxu0 0.0
      %2528 = vmatpush2.msra.mxu0 0.0
      %2529 = vmatprep.subr.mxu0 0.0
      %2530 = vmatpush2.msra.mxu0 0.0
      %2531 = vmatprep.subr.mxu0 0.0
      %2532 = vmatpush2.msra.mxu0 0.0
      %2533 = vmatprep.subr.mxu0 0.0
      %2534 = vmatpush2.msra.mxu0 0.0
      %2535 = vmatprep.subr.mxu0 0.0
      %2536 = vmatpush2.msra.mxu0 0.0
      %2537 = vmatprep.mubr.f32.mxu0 0.0
      %2538 = vmatmul.mubr.f32.gmra.mxu0 %v2329
      %v2539 = vpop.f32.mrf.mxu0
      %v2540 = vadd.f32 0.0, %v2539
      %v2541 = vpop.f32.mrf.mxu0
      %2542 = vdwg.mxu0
      %v2543 = vadd.f32 %v2299, %v2398
      %v2544 = vadd.f32 %v2300, %v2400
      %v2545 = vadd.f32 %v2301, %v2469
      %v2546 = vadd.f32 %v2302, %v2471
      %v2547 = vadd.f32 %v2303, %v2540
      %v2548 = vld [vmem:[%s320] sm:$0xff]
      %2550 = vset.pattern.permute.xlu0 0
      %2551 = vperm.xlu0 %2550, %v2548
      %v2552 = vpop.permute.xlu0 %2551
      %v2554 = vadd.f32 %v2543, %v2552
      %v2555 = vadd.f32 %v2544, %v2552
      %v2556 = vadd.f32 %v2545, %v2552
      %v2557 = vadd.f32 %v2546, %v2552
      %v2558 = vadd.f32 %v2547, %v2552
      %v2559 = vmax.f32 %v2554, 0.0
      %v2560 = vmax.f32 %v2555, 0.0
      %v2561 = vmax.f32 %v2556, 0.0
      %v2562 = vmax.f32 %v2557, 0.0
      %v2563 = vmax.f32 %v2558, 0.0
      %v2564 = vmul.f32 %v2559, %v355
      %v2565 = vmul.f32 %v2560, %v356
      %v2566 = vmul.f32 %v2561, %v357
      %v2567 = vmul.f32 %v2562, %v358
      %v2568 = vmul.f32 %v2563, %v359
      %2569 = vst [vmem:[#allocation2 + $0x8] sm:$0xff] %v2564
      %2570 = vst [vmem:[#allocation2 + $0x10] sm:$0xff] %v2565
      %2571 = vst [vmem:[#allocation2 + $0x18] sm:$0xff] %v2566
      %2572 = vst [vmem:[#allocation2 + $0x20] sm:$0xff] %v2567
      %2573 = vst [vmem:[#allocation2 + $0x28] sm:$0xff] %v2568
      %v2574 = vld [vmem:[%s324] sm:$0xff]
      %v2575 = vld [vmem:[#allocation2] sm:$0xff]
      %v2576 = vld [vmem:[#allocation2 + $0x8] sm:$0xff]
      %v2577 = vld [vmem:[#allocation2 + $0x10] sm:$0xff]
      %v2578 = vld [vmem:[#allocation2 + $0x18] sm:$0xff]
      %v2579 = vld [vmem:[#allocation2 + $0x20] sm:$0xff]
      %v2580 = vld [vmem:[#allocation2 + $0x28] sm:$0xff]
      %2582 = vrot.lane.b32.xlu0 %v2574, 120
      %v2583 = vpop.permute.xlu0 %2582
      %2590 = vrot.lane.b32.xlu0 %v2575, 18
      %v2591 = vpop.permute.xlu0 %2590
      %2592 = vrot.lane.b32.xlu0 %v2576, 18
      %v2593 = vpop.permute.xlu0 %2592
      %2594 = vrot.lane.b32.xlu0 %v2577, 18
      %v2595 = vpop.permute.xlu0 %2594
      %2596 = vrot.lane.b32.xlu0 %v2578, 18
      %v2597 = vpop.permute.xlu0 %2596
      %2598 = vrot.lane.b32.xlu0 %v2579, 18
      %v2599 = vpop.permute.xlu0 %2598
      %2600 = vrot.lane.b32.xlu0 %v2580, 18
      %v2601 = vpop.permute.xlu0 %2600
      %v2602 = vsel %vm388, %v2591, %v2593
      %v2603 = vsel %vm388, %v2593, %v2595
      %v2604 = vsel %vm388, %v2595, %v2597
      %v2605 = vsel %vm388, %v2597, %v2599
      %v2606 = vsel %vm388, %v2599, %v2601
      %v2612 = vsel %vm399, %v2583, 0
      %2614 = vmatprep.subr.mxu0 0.0
      %2615 = vmatpush1.msra.mxu0 0.0
      %2616 = vmatprep.subr.mxu0 0.0
      %2617 = vmatpush1.msra.mxu0 0.0
      %2618 = vmatprep.subr.mxu0 0.0
      %2619 = vmatpush1.msra.mxu0 0.0
      %2620 = vmatprep.subr.mxu0 0.0
      %2621 = vmatpush1.msra.mxu0 0.0
      %2622 = vmatprep.subr.mxu0 0.0
      %2623 = vmatpush1.msra.mxu0 0.0
      %2624 = vmatprep.subr.mxu0 0.0
      %2625 = vmatpush1.msra.mxu0 0.0
      %2626 = vmatprep.subr.mxu0 0.0
      %2627 = vmatpush1.msra.mxu0 0.0
      %2628 = vmatprep.subr.mxu0 0.0
      %2629 = vmatpush1.msra.mxu0 0.0
      %2630 = vmatprep.subr.mxu0 0.0
      %2631 = vmatpush1.msra.mxu0 0.0
      %2632 = vmatprep.subr.mxu0 0.0
      %2633 = vmatpush1.msra.mxu0 0.0
      %2634 = vmatprep.subr.mxu0 0.0
      %2635 = vmatpush1.msra.mxu0 0.0
      %2636 = vmatprep.subr.mxu0 0.0
      %2637 = vmatpush1.msra.mxu0 0.0
      %2638 = vmatprep.subr.mxu0 0.0
      %2639 = vmatpush1.msra.mxu0 0.0
      %2640 = vmatprep.subr.mxu0 0.0
      %2641 = vmatpush1.msra.mxu0 0.0
      %2642 = vmatprep.subr.mxu0 0.0
      %2643 = vmatpush1.msra.mxu0 0.0
      %2644 = vmatprep.subr.mxu0 %v2603
      %2645 = vmatpush1.msra.mxu0 %v2602
      %2646 = vmatprep.subr.mxu0 0.0
      %2647 = vmatpush2.msra.mxu0 0.0
      %2648 = vmatprep.subr.mxu0 0.0
      %2649 = vmatpush2.msra.mxu0 0.0
      %2650 = vmatprep.subr.mxu0 0.0
      %2651 = vmatpush2.msra.mxu0 0.0
      %2652 = vmatprep.subr.mxu0 0.0
      %2653 = vmatpush2.msra.mxu0 0.0
      %2654 = vmatprep.subr.mxu0 0.0
      %2655 = vmatpush2.msra.mxu0 0.0
      %2656 = vmatprep.subr.mxu0 0.0
      %2657 = vmatpush2.msra.mxu0 0.0
      %2658 = vmatprep.subr.mxu0 0.0
      %2659 = vmatpush2.msra.mxu0 0.0
      %2660 = vmatprep.subr.mxu0 0.0
      %2661 = vmatpush2.msra.mxu0 0.0
      %2662 = vmatprep.subr.mxu0 0.0
      %2663 = vmatpush2.msra.mxu0 0.0
      %2664 = vmatprep.subr.mxu0 0.0
      %2665 = vmatpush2.msra.mxu0 0.0
      %2666 = vmatprep.subr.mxu0 0.0
      %2667 = vmatpush2.msra.mxu0 0.0
      %2668 = vmatprep.subr.mxu0 0.0
      %2669 = vmatpush2.msra.mxu0 0.0
      %2670 = vmatprep.subr.mxu0 0.0
      %2671 = vmatpush2.msra.mxu0 0.0
      %2672 = vmatprep.subr.mxu0 0.0
      %2673 = vmatpush2.msra.mxu0 0.0
      %2674 = vmatprep.subr.mxu0 0.0
      %2675 = vmatpush2.msra.mxu0 0.0
      %2676 = vmatprep.subr.mxu0 0.0
      %2677 = vmatpush2.msra.mxu0 0.0
      %2678 = vmatprep.mubr.f32.mxu0 0.0
      %2679 = vmatmul.mubr.f32.gmra.mxu0 %v2612
      %v2680 = vpop.f32.mrf.mxu0
      %v2681 = vadd.f32 0.0, %v2680
      %v2682 = vpop.f32.mrf.mxu0
      %v2683 = vadd.f32 0.0, %v2682
      %2684 = vdwg.mxu0
      %2685 = vmatprep.subr.mxu0 0.0
      %2686 = vmatpush1.msra.mxu0 0.0
      %2687 = vmatprep.subr.mxu0 0.0
      %2688 = vmatpush1.msra.mxu0 0.0
      %2689 = vmatprep.subr.mxu0 0.0
      %2690 = vmatpush1.msra.mxu0 0.0
      %2691 = vmatprep.subr.mxu0 0.0
      %2692 = vmatpush1.msra.mxu0 0.0
      %2693 = vmatprep.subr.mxu0 0.0
      %2694 = vmatpush1.msra.mxu0 0.0
      %2695 = vmatprep.subr.mxu0 0.0
      %2696 = vmatpush1.msra.mxu0 0.0
      %2697 = vmatprep.subr.mxu0 0.0
      %2698 = vmatpush1.msra.mxu0 0.0
      %2699 = vmatprep.subr.mxu0 0.0
      %2700 = vmatpush1.msra.mxu0 0.0
      %2701 = vmatprep.subr.mxu0 0.0
      %2702 = vmatpush1.msra.mxu0 0.0
      %2703 = vmatprep.subr.mxu0 0.0
      %2704 = vmatpush1.msra.mxu0 0.0
      %2705 = vmatprep.subr.mxu0 0.0
      %2706 = vmatpush1.msra.mxu0 0.0
      %2707 = vmatprep.subr.mxu0 0.0
      %2708 = vmatpush1.msra.mxu0 0.0
      %2709 = vmatprep.subr.mxu0 0.0
      %2710 = vmatpush1.msra.mxu0 0.0
      %2711 = vmatprep.subr.mxu0 0.0
      %2712 = vmatpush1.msra.mxu0 0.0
      %2713 = vmatprep.subr.mxu0 0.0
      %2714 = vmatpush1.msra.mxu0 0.0
      %2715 = vmatprep.subr.mxu0 %v2605
      %2716 = vmatpush1.msra.mxu0 %v2604
      %2717 = vmatprep.subr.mxu0 0.0
      %2718 = vmatpush2.msra.mxu0 0.0
      %2719 = vmatprep.subr.mxu0 0.0
      %2720 = vmatpush2.msra.mxu0 0.0
      %2721 = vmatprep.subr.mxu0 0.0
      %2722 = vmatpush2.msra.mxu0 0.0
      %2723 = vmatprep.subr.mxu0 0.0
      %2724 = vmatpush2.msra.mxu0 0.0
      %2725 = vmatprep.subr.mxu0 0.0
      %2726 = vmatpush2.msra.mxu0 0.0
      %2727 = vmatprep.subr.mxu0 0.0
      %2728 = vmatpush2.msra.mxu0 0.0
      %2729 = vmatprep.subr.mxu0 0.0
      %2730 = vmatpush2.msra.mxu0 0.0
      %2731 = vmatprep.subr.mxu0 0.0
      %2732 = vmatpush2.msra.mxu0 0.0
      %2733 = vmatprep.subr.mxu0 0.0
      %2734 = vmatpush2.msra.mxu0 0.0
      %2735 = vmatprep.subr.mxu0 0.0
      %2736 = vmatpush2.msra.mxu0 0.0
      %2737 = vmatprep.subr.mxu0 0.0
      %2738 = vmatpush2.msra.mxu0 0.0
      %2739 = vmatprep.subr.mxu0 0.0
      %2740 = vmatpush2.msra.mxu0 0.0
      %2741 = vmatprep.subr.mxu0 0.0
      %2742 = vmatpush2.msra.mxu0 0.0
      %2743 = vmatprep.subr.mxu0 0.0
      %2744 = vmatpush2.msra.mxu0 0.0
      %2745 = vmatprep.subr.mxu0 0.0
      %2746 = vmatpush2.msra.mxu0 0.0
      %2747 = vmatprep.subr.mxu0 0.0
      %2748 = vmatpush2.msra.mxu0 0.0
      %2749 = vmatprep.mubr.f32.mxu0 0.0
      %2750 = vmatmul.mubr.f32.gmra.mxu0 %v2612
      %v2751 = vpop.f32.mrf.mxu0
      %v2752 = vadd.f32 0.0, %v2751
      %v2753 = vpop.f32.mrf.mxu0
      %v2754 = vadd.f32 0.0, %v2753
      %2755 = vdwg.mxu0
      %2756 = vmatprep.subr.mxu0 0.0
      %2757 = vmatpush1.msra.mxu0 0.0
      %2758 = vmatprep.subr.mxu0 0.0
      %2759 = vmatpush1.msra.mxu0 0.0
      %2760 = vmatprep.subr.mxu0 0.0
      %2761 = vmatpush1.msra.mxu0 0.0
      %2762 = vmatprep.subr.mxu0 0.0
      %2763 = vmatpush1.msra.mxu0 0.0
      %2764 = vmatprep.subr.mxu0 0.0
      %2765 = vmatpush1.msra.mxu0 0.0
      %2766 = vmatprep.subr.mxu0 0.0
      %2767 = vmatpush1.msra.mxu0 0.0
      %2768 = vmatprep.subr.mxu0 0.0
      %2769 = vmatpush1.msra.mxu0 0.0
      %2770 = vmatprep.subr.mxu0 0.0
      %2771 = vmatpush1.msra.mxu0 0.0
      %2772 = vmatprep.subr.mxu0 0.0
      %2773 = vmatpush1.msra.mxu0 0.0
      %2774 = vmatprep.subr.mxu0 0.0
      %2775 = vmatpush1.msra.mxu0 0.0
      %2776 = vmatprep.subr.mxu0 0.0
      %2777 = vmatpush1.msra.mxu0 0.0
      %2778 = vmatprep.subr.mxu0 0.0
      %2779 = vmatpush1.msra.mxu0 0.0
      %2780 = vmatprep.subr.mxu0 0.0
      %2781 = vmatpush1.msra.mxu0 0.0
      %2782 = vmatprep.subr.mxu0 0.0
      %2783 = vmatpush1.msra.mxu0 0.0
      %2784 = vmatprep.subr.mxu0 0.0
      %2785 = vmatpush1.msra.mxu0 0.0
      %2786 = vmatprep.subr.mxu0 0.0
      %2787 = vmatpush1.msra.mxu0 %v2606
      %2788 = vmatprep.subr.mxu0 0.0
      %2789 = vmatpush2.msra.mxu0 0.0
      %2790 = vmatprep.subr.mxu0 0.0
      %2791 = vmatpush2.msra.mxu0 0.0
      %2792 = vmatprep.subr.mxu0 0.0
      %2793 = vmatpush2.msra.mxu0 0.0
      %2794 = vmatprep.subr.mxu0 0.0
      %2795 = vmatpush2.msra.mxu0 0.0
      %2796 = vmatprep.subr.mxu0 0.0
      %2797 = vmatpush2.msra.mxu0 0.0
      %2798 = vmatprep.subr.mxu0 0.0
      %2799 = vmatpush2.msra.mxu0 0.0
      %2800 = vmatprep.subr.mxu0 0.0
      %2801 = vmatpush2.msra.mxu0 0.0
      %2802 = vmatprep.subr.mxu0 0.0
      %2803 = vmatpush2.msra.mxu0 0.0
      %2804 = vmatprep.subr.mxu0 0.0
      %2805 = vmatpush2.msra.mxu0 0.0
      %2806 = vmatprep.subr.mxu0 0.0
      %2807 = vmatpush2.msra.mxu0 0.0
      %2808 = vmatprep.subr.mxu0 0.0
      %2809 = vmatpush2.msra.mxu0 0.0
      %2810 = vmatprep.subr.mxu0 0.0
      %2811 = vmatpush2.msra.mxu0 0.0
      %2812 = vmatprep.subr.mxu0 0.0
      %2813 = vmatpush2.msra.mxu0 0.0
      %2814 = vmatprep.subr.mxu0 0.0
      %2815 = vmatpush2.msra.mxu0 0.0
      %2816 = vmatprep.subr.mxu0 0.0
      %2817 = vmatpush2.msra.mxu0 0.0
      %2818 = vmatprep.subr.mxu0 0.0
      %2819 = vmatpush2.msra.mxu0 0.0
      %2820 = vmatprep.mubr.f32.mxu0 0.0
      %2821 = vmatmul.mubr.f32.gmra.mxu0 %v2612
      %v2822 = vpop.f32.mrf.mxu0
      %v2823 = vadd.f32 0.0, %v2822
      %v2824 = vpop.f32.mrf.mxu0
      %2825 = vdwg.mxu0
      %2826 = vrot.lane.b32.xlu0 %v2575, 19
      %v2827 = vpop.permute.xlu0 %2826
      %2828 = vrot.lane.b32.xlu0 %v2576, 19
      %v2829 = vpop.permute.xlu0 %2828
      %2830 = vrot.lane.b32.xlu0 %v2577, 19
      %v2831 = vpop.permute.xlu0 %2830
      %2832 = vrot.lane.b32.xlu0 %v2578, 19
      %v2833 = vpop.permute.xlu0 %2832
      %2834 = vrot.lane.b32.xlu0 %v2579, 19
      %v2835 = vpop.permute.xlu0 %2834
      %2836 = vrot.lane.b32.xlu0 %v2580, 19
      %v2837 = vpop.permute.xlu0 %2836
      %v2838 = vsel %vm626, %v2827, %v2829
      %v2839 = vsel %vm626, %v2829, %v2831
      %v2840 = vsel %vm626, %v2831, %v2833
      %v2841 = vsel %vm626, %v2833, %v2835
      %v2842 = vsel %vm626, %v2835, %v2837
      %v2848 = vsel %vm399, %v2574, 0
      %2850 = vmatprep.subr.mxu0 0.0
      %2851 = vmatpush1.msra.mxu0 0.0
      %2852 = vmatprep.subr.mxu0 0.0
      %2853 = vmatpush1.msra.mxu0 0.0
      %2854 = vmatprep.subr.mxu0 0.0
      %2855 = vmatpush1.msra.mxu0 0.0
      %2856 = vmatprep.subr.mxu0 0.0
      %2857 = vmatpush1.msra.mxu0 0.0
      %2858 = vmatprep.subr.mxu0 0.0
      %2859 = vmatpush1.msra.mxu0 0.0
      %2860 = vmatprep.subr.mxu0 0.0
      %2861 = vmatpush1.msra.mxu0 0.0
      %2862 = vmatprep.subr.mxu0 0.0
      %2863 = vmatpush1.msra.mxu0 0.0
      %2864 = vmatprep.subr.mxu0 0.0
      %2865 = vmatpush1.msra.mxu0 0.0
      %2866 = vmatprep.subr.mxu0 0.0
      %2867 = vmatpush1.msra.mxu0 0.0
      %2868 = vmatprep.subr.mxu0 0.0
      %2869 = vmatpush1.msra.mxu0 0.0
      %2870 = vmatprep.subr.mxu0 0.0
      %2871 = vmatpush1.msra.mxu0 0.0
      %2872 = vmatprep.subr.mxu0 0.0
      %2873 = vmatpush1.msra.mxu0 0.0
      %2874 = vmatprep.subr.mxu0 0.0
      %2875 = vmatpush1.msra.mxu0 0.0
      %2876 = vmatprep.subr.mxu0 0.0
      %2877 = vmatpush1.msra.mxu0 0.0
      %2878 = vmatprep.subr.mxu0 0.0
      %2879 = vmatpush1.msra.mxu0 0.0
      %2880 = vmatprep.subr.mxu0 %v2839
      %2881 = vmatpush1.msra.mxu0 %v2838
      %2882 = vmatprep.subr.mxu0 0.0
      %2883 = vmatpush2.msra.mxu0 0.0
      %2884 = vmatprep.subr.mxu0 0.0
      %2885 = vmatpush2.msra.mxu0 0.0
      %2886 = vmatprep.subr.mxu0 0.0
      %2887 = vmatpush2.msra.mxu0 0.0
      %2888 = vmatprep.subr.mxu0 0.0
      %2889 = vmatpush2.msra.mxu0 0.0
      %2890 = vmatprep.subr.mxu0 0.0
      %2891 = vmatpush2.msra.mxu0 0.0
      %2892 = vmatprep.subr.mxu0 0.0
      %2893 = vmatpush2.msra.mxu0 0.0
      %2894 = vmatprep.subr.mxu0 0.0
      %2895 = vmatpush2.msra.mxu0 0.0
      %2896 = vmatprep.subr.mxu0 0.0
      %2897 = vmatpush2.msra.mxu0 0.0
      %2898 = vmatprep.subr.mxu0 0.0
      %2899 = vmatpush2.msra.mxu0 0.0
      %2900 = vmatprep.subr.mxu0 0.0
      %2901 = vmatpush2.msra.mxu0 0.0
      %2902 = vmatprep.subr.mxu0 0.0
      %2903 = vmatpush2.msra.mxu0 0.0
      %2904 = vmatprep.subr.mxu0 0.0
      %2905 = vmatpush2.msra.mxu0 0.0
      %2906 = vmatprep.subr.mxu0 0.0
      %2907 = vmatpush2.msra.mxu0 0.0
      %2908 = vmatprep.subr.mxu0 0.0
      %2909 = vmatpush2.msra.mxu0 0.0
      %2910 = vmatprep.subr.mxu0 0.0
      %2911 = vmatpush2.msra.mxu0 0.0
      %2912 = vmatprep.subr.mxu0 0.0
      %2913 = vmatpush2.msra.mxu0 0.0
      %2914 = vmatprep.mubr.f32.mxu0 0.0
      %2915 = vmatmul.mubr.f32.gmra.mxu0 %v2848
      %v2916 = vpop.f32.mrf.mxu0
      %v2917 = vadd.f32 %v2681, %v2916
      %v2918 = vpop.f32.mrf.mxu0
      %v2919 = vadd.f32 %v2683, %v2918
      %2920 = vdwg.mxu0
      %2921 = vmatprep.subr.mxu0 0.0
      %2922 = vmatpush1.msra.mxu0 0.0
      %2923 = vmatprep.subr.mxu0 0.0
      %2924 = vmatpush1.msra.mxu0 0.0
      %2925 = vmatprep.subr.mxu0 0.0
      %2926 = vmatpush1.msra.mxu0 0.0
      %2927 = vmatprep.subr.mxu0 0.0
      %2928 = vmatpush1.msra.mxu0 0.0
      %2929 = vmatprep.subr.mxu0 0.0
      %2930 = vmatpush1.msra.mxu0 0.0
      %2931 = vmatprep.subr.mxu0 0.0
      %2932 = vmatpush1.msra.mxu0 0.0
      %2933 = vmatprep.subr.mxu0 0.0
      %2934 = vmatpush1.msra.mxu0 0.0
      %2935 = vmatprep.subr.mxu0 0.0
      %2936 = vmatpush1.msra.mxu0 0.0
      %2937 = vmatprep.subr.mxu0 0.0
      %2938 = vmatpush1.msra.mxu0 0.0
      %2939 = vmatprep.subr.mxu0 0.0
      %2940 = vmatpush1.msra.mxu0 0.0
      %2941 = vmatprep.subr.mxu0 0.0
      %2942 = vmatpush1.msra.mxu0 0.0
      %2943 = vmatprep.subr.mxu0 0.0
      %2944 = vmatpush1.msra.mxu0 0.0
      %2945 = vmatprep.subr.mxu0 0.0
      %2946 = vmatpush1.msra.mxu0 0.0
      %2947 = vmatprep.subr.mxu0 0.0
      %2948 = vmatpush1.msra.mxu0 0.0
      %2949 = vmatprep.subr.mxu0 0.0
      %2950 = vmatpush1.msra.mxu0 0.0
      %2951 = vmatprep.subr.mxu0 %v2841
      %2952 = vmatpush1.msra.mxu0 %v2840
      %2953 = vmatprep.subr.mxu0 0.0
      %2954 = vmatpush2.msra.mxu0 0.0
      %2955 = vmatprep.subr.mxu0 0.0
      %2956 = vmatpush2.msra.mxu0 0.0
      %2957 = vmatprep.subr.mxu0 0.0
      %2958 = vmatpush2.msra.mxu0 0.0
      %2959 = vmatprep.subr.mxu0 0.0
      %2960 = vmatpush2.msra.mxu0 0.0
      %2961 = vmatprep.subr.mxu0 0.0
      %2962 = vmatpush2.msra.mxu0 0.0
      %2963 = vmatprep.subr.mxu0 0.0
      %2964 = vmatpush2.msra.mxu0 0.0
      %2965 = vmatprep.subr.mxu0 0.0
      %2966 = vmatpush2.msra.mxu0 0.0
      %2967 = vmatprep.subr.mxu0 0.0
      %2968 = vmatpush2.msra.mxu0 0.0
      %2969 = vmatprep.subr.mxu0 0.0
      %2970 = vmatpush2.msra.mxu0 0.0
      %2971 = vmatprep.subr.mxu0 0.0
      %2972 = vmatpush2.msra.mxu0 0.0
      %2973 = vmatprep.subr.mxu0 0.0
      %2974 = vmatpush2.msra.mxu0 0.0
      %2975 = vmatprep.subr.mxu0 0.0
      %2976 = vmatpush2.msra.mxu0 0.0
      %2977 = vmatprep.subr.mxu0 0.0
      %2978 = vmatpush2.msra.mxu0 0.0
      %2979 = vmatprep.subr.mxu0 0.0
      %2980 = vmatpush2.msra.mxu0 0.0
      %2981 = vmatprep.subr.mxu0 0.0
      %2982 = vmatpush2.msra.mxu0 0.0
      %2983 = vmatprep.subr.mxu0 0.0
      %2984 = vmatpush2.msra.mxu0 0.0
      %2985 = vmatprep.mubr.f32.mxu0 0.0
      %2986 = vmatmul.mubr.f32.gmra.mxu0 %v2848
      %v2987 = vpop.f32.mrf.mxu0
      %v2988 = vadd.f32 %v2752, %v2987
      %v2989 = vpop.f32.mrf.mxu0
      %v2990 = vadd.f32 %v2754, %v2989
      %2991 = vdwg.mxu0
      %2992 = vmatprep.subr.mxu0 0.0
      %2993 = vmatpush1.msra.mxu0 0.0
      %2994 = vmatprep.subr.mxu0 0.0
      %2995 = vmatpush1.msra.mxu0 0.0
      %2996 = vmatprep.subr.mxu0 0.0
      %2997 = vmatpush1.msra.mxu0 0.0
      %2998 = vmatprep.subr.mxu0 0.0
      %2999 = vmatpush1.msra.mxu0 0.0
      %3000 = vmatprep.subr.mxu0 0.0
      %3001 = vmatpush1.msra.mxu0 0.0
      %3002 = vmatprep.subr.mxu0 0.0
      %3003 = vmatpush1.msra.mxu0 0.0
      %3004 = vmatprep.subr.mxu0 0.0
      %3005 = vmatpush1.msra.mxu0 0.0
      %3006 = vmatprep.subr.mxu0 0.0
      %3007 = vmatpush1.msra.mxu0 0.0
      %3008 = vmatprep.subr.mxu0 0.0
      %3009 = vmatpush1.msra.mxu0 0.0
      %3010 = vmatprep.subr.mxu0 0.0
      %3011 = vmatpush1.msra.mxu0 0.0
      %3012 = vmatprep.subr.mxu0 0.0
      %3013 = vmatpush1.msra.mxu0 0.0
      %3014 = vmatprep.subr.mxu0 0.0
      %3015 = vmatpush1.msra.mxu0 0.0
      %3016 = vmatprep.subr.mxu0 0.0
      %3017 = vmatpush1.msra.mxu0 0.0
      %3018 = vmatprep.subr.mxu0 0.0
      %3019 = vmatpush1.msra.mxu0 0.0
      %3020 = vmatprep.subr.mxu0 0.0
      %3021 = vmatpush1.msra.mxu0 0.0
      %3022 = vmatprep.subr.mxu0 0.0
      %3023 = vmatpush1.msra.mxu0 %v2842
      %3024 = vmatprep.subr.mxu0 0.0
      %3025 = vmatpush2.msra.mxu0 0.0
      %3026 = vmatprep.subr.mxu0 0.0
      %3027 = vmatpush2.msra.mxu0 0.0
      %3028 = vmatprep.subr.mxu0 0.0
      %3029 = vmatpush2.msra.mxu0 0.0
      %3030 = vmatprep.subr.mxu0 0.0
      %3031 = vmatpush2.msra.mxu0 0.0
      %3032 = vmatprep.subr.mxu0 0.0
      %3033 = vmatpush2.msra.mxu0 0.0
      %3034 = vmatprep.subr.mxu0 0.0
      %3035 = vmatpush2.msra.mxu0 0.0
      %3036 = vmatprep.subr.mxu0 0.0
      %3037 = vmatpush2.msra.mxu0 0.0
      %3038 = vmatprep.subr.mxu0 0.0
      %3039 = vmatpush2.msra.mxu0 0.0
      %3040 = vmatprep.subr.mxu0 0.0
      %3041 = vmatpush2.msra.mxu0 0.0
      %3042 = vmatprep.subr.mxu0 0.0
      %3043 = vmatpush2.msra.mxu0 0.0
      %3044 = vmatprep.subr.mxu0 0.0
      %3045 = vmatpush2.msra.mxu0 0.0
      %3046 = vmatprep.subr.mxu0 0.0
      %3047 = vmatpush2.msra.mxu0 0.0
      %3048 = vmatprep.subr.mxu0 0.0
      %3049 = vmatpush2.msra.mxu0 0.0
      %3050 = vmatprep.subr.mxu0 0.0
      %3051 = vmatpush2.msra.mxu0 0.0
      %3052 = vmatprep.subr.mxu0 0.0
      %3053 = vmatpush2.msra.mxu0 0.0
      %3054 = vmatprep.subr.mxu0 0.0
      %3055 = vmatpush2.msra.mxu0 0.0
      %3056 = vmatprep.mubr.f32.mxu0 0.0
      %3057 = vmatmul.mubr.f32.gmra.mxu0 %v2848
      %v3058 = vpop.f32.mrf.mxu0
      %v3059 = vadd.f32 %v2823, %v3058
      %v3060 = vpop.f32.mrf.mxu0
      %3061 = vdwg.mxu0
      %3062 = vrot.lane.b32.xlu0 %v2574, 112
      %v3063 = vpop.permute.xlu0 %3062
      %3064 = vrot.lane.b32.xlu0 %v2575, 17
      %v3065 = vpop.permute.xlu0 %3064
      %3066 = vrot.lane.b32.xlu0 %v2576, 17
      %v3067 = vpop.permute.xlu0 %3066
      %3068 = vrot.lane.b32.xlu0 %v2577, 17
      %v3069 = vpop.permute.xlu0 %3068
      %3070 = vrot.lane.b32.xlu0 %v2578, 17
      %v3071 = vpop.permute.xlu0 %3070
      %3072 = vrot.lane.b32.xlu0 %v2579, 17
      %v3073 = vpop.permute.xlu0 %3072
      %3074 = vrot.lane.b32.xlu0 %v2580, 17
      %v3075 = vpop.permute.xlu0 %3074
      %v3076 = vsel %vm865, %v3065, %v3067
      %v3077 = vsel %vm865, %v3067, %v3069
      %v3078 = vsel %vm865, %v3069, %v3071
      %v3079 = vsel %vm865, %v3071, %v3073
      %v3080 = vsel %vm865, %v3073, %v3075
      %v3086 = vsel %vm399, %v3063, 0
      %3088 = vmatprep.subr.mxu0 0.0
      %3089 = vmatpush1.msra.mxu0 0.0
      %3090 = vmatprep.subr.mxu0 0.0
      %3091 = vmatpush1.msra.mxu0 0.0
      %3092 = vmatprep.subr.mxu0 0.0
      %3093 = vmatpush1.msra.mxu0 0.0
      %3094 = vmatprep.subr.mxu0 0.0
      %3095 = vmatpush1.msra.mxu0 0.0
      %3096 = vmatprep.subr.mxu0 0.0
      %3097 = vmatpush1.msra.mxu0 0.0
      %3098 = vmatprep.subr.mxu0 0.0
      %3099 = vmatpush1.msra.mxu0 0.0
      %3100 = vmatprep.subr.mxu0 0.0
      %3101 = vmatpush1.msra.mxu0 0.0
      %3102 = vmatprep.subr.mxu0 0.0
      %3103 = vmatpush1.msra.mxu0 0.0
      %3104 = vmatprep.subr.mxu0 0.0
      %3105 = vmatpush1.msra.mxu0 0.0
      %3106 = vmatprep.subr.mxu0 0.0
      %3107 = vmatpush1.msra.mxu0 0.0
      %3108 = vmatprep.subr.mxu0 0.0
      %3109 = vmatpush1.msra.mxu0 0.0
      %3110 = vmatprep.subr.mxu0 0.0
      %3111 = vmatpush1.msra.mxu0 0.0
      %3112 = vmatprep.subr.mxu0 0.0
      %3113 = vmatpush1.msra.mxu0 0.0
      %3114 = vmatprep.subr.mxu0 0.0
      %3115 = vmatpush1.msra.mxu0 0.0
      %3116 = vmatprep.subr.mxu0 0.0
      %3117 = vmatpush1.msra.mxu0 0.0
      %3118 = vmatprep.subr.mxu0 %v3077
      %3119 = vmatpush1.msra.mxu0 %v3076
      %3120 = vmatprep.subr.mxu0 0.0
      %3121 = vmatpush2.msra.mxu0 0.0
      %3122 = vmatprep.subr.mxu0 0.0
      %3123 = vmatpush2.msra.mxu0 0.0
      %3124 = vmatprep.subr.mxu0 0.0
      %3125 = vmatpush2.msra.mxu0 0.0
      %3126 = vmatprep.subr.mxu0 0.0
      %3127 = vmatpush2.msra.mxu0 0.0
      %3128 = vmatprep.subr.mxu0 0.0
      %3129 = vmatpush2.msra.mxu0 0.0
      %3130 = vmatprep.subr.mxu0 0.0
      %3131 = vmatpush2.msra.mxu0 0.0
      %3132 = vmatprep.subr.mxu0 0.0
      %3133 = vmatpush2.msra.mxu0 0.0
      %3134 = vmatprep.subr.mxu0 0.0
      %3135 = vmatpush2.msra.mxu0 0.0
      %3136 = vmatprep.subr.mxu0 0.0
      %3137 = vmatpush2.msra.mxu0 0.0
      %3138 = vmatprep.subr.mxu0 0.0
      %3139 = vmatpush2.msra.mxu0 0.0
      %3140 = vmatprep.subr.mxu0 0.0
      %3141 = vmatpush2.msra.mxu0 0.0
      %3142 = vmatprep.subr.mxu0 0.0
      %3143 = vmatpush2.msra.mxu0 0.0
      %3144 = vmatprep.subr.mxu0 0.0
      %3145 = vmatpush2.msra.mxu0 0.0
      %3146 = vmatprep.subr.mxu0 0.0
      %3147 = vmatpush2.msra.mxu0 0.0
      %3148 = vmatprep.subr.mxu0 0.0
      %3149 = vmatpush2.msra.mxu0 0.0
      %3150 = vmatprep.subr.mxu0 0.0
      %3151 = vmatpush2.msra.mxu0 0.0
      %3152 = vmatprep.mubr.f32.mxu0 0.0
      %3153 = vmatmul.mubr.f32.gmra.mxu0 %v3086
      %v3154 = vpop.f32.mrf.mxu0
      %v3155 = vadd.f32 0.0, %v3154
      %v3156 = vpop.f32.mrf.mxu0
      %v3157 = vadd.f32 0.0, %v3156
      %3158 = vdwg.mxu0
      %3159 = vmatprep.subr.mxu0 0.0
      %3160 = vmatpush1.msra.mxu0 0.0
      %3161 = vmatprep.subr.mxu0 0.0
      %3162 = vmatpush1.msra.mxu0 0.0
      %3163 = vmatprep.subr.mxu0 0.0
      %3164 = vmatpush1.msra.mxu0 0.0
      %3165 = vmatprep.subr.mxu0 0.0
      %3166 = vmatpush1.msra.mxu0 0.0
      %3167 = vmatprep.subr.mxu0 0.0
      %3168 = vmatpush1.msra.mxu0 0.0
      %3169 = vmatprep.subr.mxu0 0.0
      %3170 = vmatpush1.msra.mxu0 0.0
      %3171 = vmatprep.subr.mxu0 0.0
      %3172 = vmatpush1.msra.mxu0 0.0
      %3173 = vmatprep.subr.mxu0 0.0
      %3174 = vmatpush1.msra.mxu0 0.0
      %3175 = vmatprep.subr.mxu0 0.0
      %3176 = vmatpush1.msra.mxu0 0.0
      %3177 = vmatprep.subr.mxu0 0.0
      %3178 = vmatpush1.msra.mxu0 0.0
      %3179 = vmatprep.subr.mxu0 0.0
      %3180 = vmatpush1.msra.mxu0 0.0
      %3181 = vmatprep.subr.mxu0 0.0
      %3182 = vmatpush1.msra.mxu0 0.0
      %3183 = vmatprep.subr.mxu0 0.0
      %3184 = vmatpush1.msra.mxu0 0.0
      %3185 = vmatprep.subr.mxu0 0.0
      %3186 = vmatpush1.msra.mxu0 0.0
      %3187 = vmatprep.subr.mxu0 0.0
      %3188 = vmatpush1.msra.mxu0 0.0
      %3189 = vmatprep.subr.mxu0 %v3079
      %3190 = vmatpush1.msra.mxu0 %v3078
      %3191 = vmatprep.subr.mxu0 0.0
      %3192 = vmatpush2.msra.mxu0 0.0
      %3193 = vmatprep.subr.mxu0 0.0
      %3194 = vmatpush2.msra.mxu0 0.0
      %3195 = vmatprep.subr.mxu0 0.0
      %3196 = vmatpush2.msra.mxu0 0.0
      %3197 = vmatprep.subr.mxu0 0.0
      %3198 = vmatpush2.msra.mxu0 0.0
      %3199 = vmatprep.subr.mxu0 0.0
      %3200 = vmatpush2.msra.mxu0 0.0
      %3201 = vmatprep.subr.mxu0 0.0
      %3202 = vmatpush2.msra.mxu0 0.0
      %3203 = vmatprep.subr.mxu0 0.0
      %3204 = vmatpush2.msra.mxu0 0.0
      %3205 = vmatprep.subr.mxu0 0.0
      %3206 = vmatpush2.msra.mxu0 0.0
      %3207 = vmatprep.subr.mxu0 0.0
      %3208 = vmatpush2.msra.mxu0 0.0
      %3209 = vmatprep.subr.mxu0 0.0
      %3210 = vmatpush2.msra.mxu0 0.0
      %3211 = vmatprep.subr.mxu0 0.0
      %3212 = vmatpush2.msra.mxu0 0.0
      %3213 = vmatprep.subr.mxu0 0.0
      %3214 = vmatpush2.msra.mxu0 0.0
      %3215 = vmatprep.subr.mxu0 0.0
      %3216 = vmatpush2.msra.mxu0 0.0
      %3217 = vmatprep.subr.mxu0 0.0
      %3218 = vmatpush2.msra.mxu0 0.0
      %3219 = vmatprep.subr.mxu0 0.0
      %3220 = vmatpush2.msra.mxu0 0.0
      %3221 = vmatprep.subr.mxu0 0.0
      %3222 = vmatpush2.msra.mxu0 0.0
      %3223 = vmatprep.mubr.f32.mxu0 0.0
      %3224 = vmatmul.mubr.f32.gmra.mxu0 %v3086
      %v3225 = vpop.f32.mrf.mxu0
      %v3226 = vadd.f32 0.0, %v3225
      %v3227 = vpop.f32.mrf.mxu0
      %v3228 = vadd.f32 0.0, %v3227
      %3229 = vdwg.mxu0
      %3230 = vmatprep.subr.mxu0 0.0
      %3231 = vmatpush1.msra.mxu0 0.0
      %3232 = vmatprep.subr.mxu0 0.0
      %3233 = vmatpush1.msra.mxu0 0.0
      %3234 = vmatprep.subr.mxu0 0.0
      %3235 = vmatpush1.msra.mxu0 0.0
      %3236 = vmatprep.subr.mxu0 0.0
      %3237 = vmatpush1.msra.mxu0 0.0
      %3238 = vmatprep.subr.mxu0 0.0
      %3239 = vmatpush1.msra.mxu0 0.0
      %3240 = vmatprep.subr.mxu0 0.0
      %3241 = vmatpush1.msra.mxu0 0.0
      %3242 = vmatprep.subr.mxu0 0.0
      %3243 = vmatpush1.msra.mxu0 0.0
      %3244 = vmatprep.subr.mxu0 0.0
      %3245 = vmatpush1.msra.mxu0 0.0
      %3246 = vmatprep.subr.mxu0 0.0
      %3247 = vmatpush1.msra.mxu0 0.0
      %3248 = vmatprep.subr.mxu0 0.0
      %3249 = vmatpush1.msra.mxu0 0.0
      %3250 = vmatprep.subr.mxu0 0.0
      %3251 = vmatpush1.msra.mxu0 0.0
      %3252 = vmatprep.subr.mxu0 0.0
      %3253 = vmatpush1.msra.mxu0 0.0
      %3254 = vmatprep.subr.mxu0 0.0
      %3255 = vmatpush1.msra.mxu0 0.0
      %3256 = vmatprep.subr.mxu0 0.0
      %3257 = vmatpush1.msra.mxu0 0.0
      %3258 = vmatprep.subr.mxu0 0.0
      %3259 = vmatpush1.msra.mxu0 0.0
      %3260 = vmatprep.subr.mxu0 0.0
      %3261 = vmatpush1.msra.mxu0 %v3080
      %3262 = vmatprep.subr.mxu0 0.0
      %3263 = vmatpush2.msra.mxu0 0.0
      %3264 = vmatprep.subr.mxu0 0.0
      %3265 = vmatpush2.msra.mxu0 0.0
      %3266 = vmatprep.subr.mxu0 0.0
      %3267 = vmatpush2.msra.mxu0 0.0
      %3268 = vmatprep.subr.mxu0 0.0
      %3269 = vmatpush2.msra.mxu0 0.0
      %3270 = vmatprep.subr.mxu0 0.0
      %3271 = vmatpush2.msra.mxu0 0.0
      %3272 = vmatprep.subr.mxu0 0.0
      %3273 = vmatpush2.msra.mxu0 0.0
      %3274 = vmatprep.subr.mxu0 0.0
      %3275 = vmatpush2.msra.mxu0 0.0
      %3276 = vmatprep.subr.mxu0 0.0
      %3277 = vmatpush2.msra.mxu0 0.0
      %3278 = vmatprep.subr.mxu0 0.0
      %3279 = vmatpush2.msra.mxu0 0.0
      %3280 = vmatprep.subr.mxu0 0.0
      %3281 = vmatpush2.msra.mxu0 0.0
      %3282 = vmatprep.subr.mxu0 0.0
      %3283 = vmatpush2.msra.mxu0 0.0
      %3284 = vmatprep.subr.mxu0 0.0
      %3285 = vmatpush2.msra.mxu0 0.0
      %3286 = vmatprep.subr.mxu0 0.0
      %3287 = vmatpush2.msra.mxu0 0.0
      %3288 = vmatprep.subr.mxu0 0.0
      %3289 = vmatpush2.msra.mxu0 0.0
      %3290 = vmatprep.subr.mxu0 0.0
      %3291 = vmatpush2.msra.mxu0 0.0
      %3292 = vmatprep.subr.mxu0 0.0
      %3293 = vmatpush2.msra.mxu0 0.0
      %3294 = vmatprep.mubr.f32.mxu0 0.0
      %3295 = vmatmul.mubr.f32.gmra.mxu0 %v3086
      %v3296 = vpop.f32.mrf.mxu0
      %v3297 = vadd.f32 0.0, %v3296
      %v3298 = vpop.f32.mrf.mxu0
      %3299 = vdwg.mxu0
      %v3300 = vadd.f32 %v2917, %v3155
      %v3301 = vadd.f32 %v2919, %v3157
      %v3302 = vadd.f32 %v2988, %v3226
      %v3303 = vadd.f32 %v2990, %v3228
      %v3304 = vadd.f32 %v3059, %v3297
      %3305 = vrot.lane.b32.xlu0 %v2574, 104
      %v3306 = vpop.permute.xlu0 %3305
      %3307 = vrot.lane.b32.xlu0 %v2575, 1
      %v3308 = vpop.permute.xlu0 %3307
      %3309 = vrot.lane.b32.xlu0 %v2576, 1
      %v3310 = vpop.permute.xlu0 %3309
      %3311 = vrot.lane.b32.xlu0 %v2577, 1
      %v3312 = vpop.permute.xlu0 %3311
      %3313 = vrot.lane.b32.xlu0 %v2578, 1
      %v3314 = vpop.permute.xlu0 %3313
      %3315 = vrot.lane.b32.xlu0 %v2579, 1
      %v3316 = vpop.permute.xlu0 %3315
      %3317 = vrot.lane.b32.xlu0 %v2580, 1
      %v3318 = vpop.permute.xlu0 %3317
      %v3319 = vsel %vm1109, %v3308, %v3310
      %v3320 = vsel %vm1109, %v3310, %v3312
      %v3321 = vsel %vm1109, %v3312, %v3314
      %v3322 = vsel %vm1109, %v3314, %v3316
      %v3323 = vsel %vm1109, %v3316, %v3318
      %v3329 = vsel %vm399, %v3306, 0
      %3331 = vmatprep.subr.mxu0 0.0
      %3332 = vmatpush1.msra.mxu0 0.0
      %3333 = vmatprep.subr.mxu0 0.0
      %3334 = vmatpush1.msra.mxu0 0.0
      %3335 = vmatprep.subr.mxu0 0.0
      %3336 = vmatpush1.msra.mxu0 0.0
      %3337 = vmatprep.subr.mxu0 0.0
      %3338 = vmatpush1.msra.mxu0 0.0
      %3339 = vmatprep.subr.mxu0 0.0
      %3340 = vmatpush1.msra.mxu0 0.0
      %3341 = vmatprep.subr.mxu0 0.0
      %3342 = vmatpush1.msra.mxu0 0.0
      %3343 = vmatprep.subr.mxu0 0.0
      %3344 = vmatpush1.msra.mxu0 0.0
      %3345 = vmatprep.subr.mxu0 0.0
      %3346 = vmatpush1.msra.mxu0 0.0
      %3347 = vmatprep.subr.mxu0 0.0
      %3348 = vmatpush1.msra.mxu0 0.0
      %3349 = vmatprep.subr.mxu0 0.0
      %3350 = vmatpush1.msra.mxu0 0.0
      %3351 = vmatprep.subr.mxu0 0.0
      %3352 = vmatpush1.msra.mxu0 0.0
      %3353 = vmatprep.subr.mxu0 0.0
      %3354 = vmatpush1.msra.mxu0 0.0
      %3355 = vmatprep.subr.mxu0 0.0
      %3356 = vmatpush1.msra.mxu0 0.0
      %3357 = vmatprep.subr.mxu0 0.0
      %3358 = vmatpush1.msra.mxu0 0.0
      %3359 = vmatprep.subr.mxu0 0.0
      %3360 = vmatpush1.msra.mxu0 0.0
      %3361 = vmatprep.subr.mxu0 %v3320
      %3362 = vmatpush1.msra.mxu0 %v3319
      %3363 = vmatprep.subr.mxu0 0.0
      %3364 = vmatpush2.msra.mxu0 0.0
      %3365 = vmatprep.subr.mxu0 0.0
      %3366 = vmatpush2.msra.mxu0 0.0
      %3367 = vmatprep.subr.mxu0 0.0
      %3368 = vmatpush2.msra.mxu0 0.0
      %3369 = vmatprep.subr.mxu0 0.0
      %3370 = vmatpush2.msra.mxu0 0.0
      %3371 = vmatprep.subr.mxu0 0.0
      %3372 = vmatpush2.msra.mxu0 0.0
      %3373 = vmatprep.subr.mxu0 0.0
      %3374 = vmatpush2.msra.mxu0 0.0
      %3375 = vmatprep.subr.mxu0 0.0
      %3376 = vmatpush2.msra.mxu0 0.0
      %3377 = vmatprep.subr.mxu0 0.0
      %3378 = vmatpush2.msra.mxu0 0.0
      %3379 = vmatprep.subr.mxu0 0.0
      %3380 = vmatpush2.msra.mxu0 0.0
      %3381 = vmatprep.subr.mxu0 0.0
      %3382 = vmatpush2.msra.mxu0 0.0
      %3383 = vmatprep.subr.mxu0 0.0
      %3384 = vmatpush2.msra.mxu0 0.0
      %3385 = vmatprep.subr.mxu0 0.0
      %3386 = vmatpush2.msra.mxu0 0.0
      %3387 = vmatprep.subr.mxu0 0.0
      %3388 = vmatpush2.msra.mxu0 0.0
      %3389 = vmatprep.subr.mxu0 0.0
      %3390 = vmatpush2.msra.mxu0 0.0
      %3391 = vmatprep.subr.mxu0 0.0
      %3392 = vmatpush2.msra.mxu0 0.0
      %3393 = vmatprep.subr.mxu0 0.0
      %3394 = vmatpush2.msra.mxu0 0.0
      %3395 = vmatprep.mubr.f32.mxu0 0.0
      %3396 = vmatmul.mubr.f32.gmra.mxu0 %v3329
      %v3397 = vpop.f32.mrf.mxu0
      %v3398 = vadd.f32 0.0, %v3397
      %v3399 = vpop.f32.mrf.mxu0
      %v3400 = vadd.f32 0.0, %v3399
      %3401 = vdwg.mxu0
      %3402 = vmatprep.subr.mxu0 0.0
      %3403 = vmatpush1.msra.mxu0 0.0
      %3404 = vmatprep.subr.mxu0 0.0
      %3405 = vmatpush1.msra.mxu0 0.0
      %3406 = vmatprep.subr.mxu0 0.0
      %3407 = vmatpush1.msra.mxu0 0.0
      %3408 = vmatprep.subr.mxu0 0.0
      %3409 = vmatpush1.msra.mxu0 0.0
      %3410 = vmatprep.subr.mxu0 0.0
      %3411 = vmatpush1.msra.mxu0 0.0
      %3412 = vmatprep.subr.mxu0 0.0
      %3413 = vmatpush1.msra.mxu0 0.0
      %3414 = vmatprep.subr.mxu0 0.0
      %3415 = vmatpush1.msra.mxu0 0.0
      %3416 = vmatprep.subr.mxu0 0.0
      %3417 = vmatpush1.msra.mxu0 0.0
      %3418 = vmatprep.subr.mxu0 0.0
      %3419 = vmatpush1.msra.mxu0 0.0
      %3420 = vmatprep.subr.mxu0 0.0
      %3421 = vmatpush1.msra.mxu0 0.0
      %3422 = vmatprep.subr.mxu0 0.0
      %3423 = vmatpush1.msra.mxu0 0.0
      %3424 = vmatprep.subr.mxu0 0.0
      %3425 = vmatpush1.msra.mxu0 0.0
      %3426 = vmatprep.subr.mxu0 0.0
      %3427 = vmatpush1.msra.mxu0 0.0
      %3428 = vmatprep.subr.mxu0 0.0
      %3429 = vmatpush1.msra.mxu0 0.0
      %3430 = vmatprep.subr.mxu0 0.0
      %3431 = vmatpush1.msra.mxu0 0.0
      %3432 = vmatprep.subr.mxu0 %v3322
      %3433 = vmatpush1.msra.mxu0 %v3321
      %3434 = vmatprep.subr.mxu0 0.0
      %3435 = vmatpush2.msra.mxu0 0.0
      %3436 = vmatprep.subr.mxu0 0.0
      %3437 = vmatpush2.msra.mxu0 0.0
      %3438 = vmatprep.subr.mxu0 0.0
      %3439 = vmatpush2.msra.mxu0 0.0
      %3440 = vmatprep.subr.mxu0 0.0
      %3441 = vmatpush2.msra.mxu0 0.0
      %3442 = vmatprep.subr.mxu0 0.0
      %3443 = vmatpush2.msra.mxu0 0.0
      %3444 = vmatprep.subr.mxu0 0.0
      %3445 = vmatpush2.msra.mxu0 0.0
      %3446 = vmatprep.subr.mxu0 0.0
      %3447 = vmatpush2.msra.mxu0 0.0
      %3448 = vmatprep.subr.mxu0 0.0
      %3449 = vmatpush2.msra.mxu0 0.0
      %3450 = vmatprep.subr.mxu0 0.0
      %3451 = vmatpush2.msra.mxu0 0.0
      %3452 = vmatprep.subr.mxu0 0.0
      %3453 = vmatpush2.msra.mxu0 0.0
      %3454 = vmatprep.subr.mxu0 0.0
      %3455 = vmatpush2.msra.mxu0 0.0
      %3456 = vmatprep.subr.mxu0 0.0
      %3457 = vmatpush2.msra.mxu0 0.0
      %3458 = vmatprep.subr.mxu0 0.0
      %3459 = vmatpush2.msra.mxu0 0.0
      %3460 = vmatprep.subr.mxu0 0.0
      %3461 = vmatpush2.msra.mxu0 0.0
      %3462 = vmatprep.subr.mxu0 0.0
      %3463 = vmatpush2.msra.mxu0 0.0
      %3464 = vmatprep.subr.mxu0 0.0
      %3465 = vmatpush2.msra.mxu0 0.0
      %3466 = vmatprep.mubr.f32.mxu0 0.0
      %3467 = vmatmul.mubr.f32.gmra.mxu0 %v3329
      %v3468 = vpop.f32.mrf.mxu0
      %v3469 = vadd.f32 0.0, %v3468
      %v3470 = vpop.f32.mrf.mxu0
      %v3471 = vadd.f32 0.0, %v3470
      %3472 = vdwg.mxu0
      %3473 = vmatprep.subr.mxu0 0.0
      %3474 = vmatpush1.msra.mxu0 0.0
      %3475 = vmatprep.subr.mxu0 0.0
      %3476 = vmatpush1.msra.mxu0 0.0
      %3477 = vmatprep.subr.mxu0 0.0
      %3478 = vmatpush1.msra.mxu0 0.0
      %3479 = vmatprep.subr.mxu0 0.0
      %3480 = vmatpush1.msra.mxu0 0.0
      %3481 = vmatprep.subr.mxu0 0.0
      %3482 = vmatpush1.msra.mxu0 0.0
      %3483 = vmatprep.subr.mxu0 0.0
      %3484 = vmatpush1.msra.mxu0 0.0
      %3485 = vmatprep.subr.mxu0 0.0
      %3486 = vmatpush1.msra.mxu0 0.0
      %3487 = vmatprep.subr.mxu0 0.0
      %3488 = vmatpush1.msra.mxu0 0.0
      %3489 = vmatprep.subr.mxu0 0.0
      %3490 = vmatpush1.msra.mxu0 0.0
      %3491 = vmatprep.subr.mxu0 0.0
      %3492 = vmatpush1.msra.mxu0 0.0
      %3493 = vmatprep.subr.mxu0 0.0
      %3494 = vmatpush1.msra.mxu0 0.0
      %3495 = vmatprep.subr.mxu0 0.0
      %3496 = vmatpush1.msra.mxu0 0.0
      %3497 = vmatprep.subr.mxu0 0.0
      %3498 = vmatpush1.msra.mxu0 0.0
      %3499 = vmatprep.subr.mxu0 0.0
      %3500 = vmatpush1.msra.mxu0 0.0
      %3501 = vmatprep.subr.mxu0 0.0
      %3502 = vmatpush1.msra.mxu0 0.0
      %3503 = vmatprep.subr.mxu0 0.0
      %3504 = vmatpush1.msra.mxu0 %v3323
      %3505 = vmatprep.subr.mxu0 0.0
      %3506 = vmatpush2.msra.mxu0 0.0
      %3507 = vmatprep.subr.mxu0 0.0
      %3508 = vmatpush2.msra.mxu0 0.0
      %3509 = vmatprep.subr.mxu0 0.0
      %3510 = vmatpush2.msra.mxu0 0.0
      %3511 = vmatprep.subr.mxu0 0.0
      %3512 = vmatpush2.msra.mxu0 0.0
      %3513 = vmatprep.subr.mxu0 0.0
      %3514 = vmatpush2.msra.mxu0 0.0
      %3515 = vmatprep.subr.mxu0 0.0
      %3516 = vmatpush2.msra.mxu0 0.0
      %3517 = vmatprep.subr.mxu0 0.0
      %3518 = vmatpush2.msra.mxu0 0.0
      %3519 = vmatprep.subr.mxu0 0.0
      %3520 = vmatpush2.msra.mxu0 0.0
      %3521 = vmatprep.subr.mxu0 0.0
      %3522 = vmatpush2.msra.mxu0 0.0
      %3523 = vmatprep.subr.mxu0 0.0
      %3524 = vmatpush2.msra.mxu0 0.0
      %3525 = vmatprep.subr.mxu0 0.0
      %3526 = vmatpush2.msra.mxu0 0.0
      %3527 = vmatprep.subr.mxu0 0.0
      %3528 = vmatpush2.msra.mxu0 0.0
      %3529 = vmatprep.subr.mxu0 0.0
      %3530 = vmatpush2.msra.mxu0 0.0
      %3531 = vmatprep.subr.mxu0 0.0
      %3532 = vmatpush2.msra.mxu0 0.0
      %3533 = vmatprep.subr.mxu0 0.0
      %3534 = vmatpush2.msra.mxu0 0.0
      %3535 = vmatprep.subr.mxu0 0.0
      %3536 = vmatpush2.msra.mxu0 0.0
      %3537 = vmatprep.mubr.f32.mxu0 0.0
      %3538 = vmatmul.mubr.f32.gmra.mxu0 %v3329
      %v3539 = vpop.f32.mrf.mxu0
      %v3540 = vadd.f32 0.0, %v3539
      %v3541 = vpop.f32.mrf.mxu0
      %3542 = vdwg.mxu0
      %v3543 = vadd.f32 %v3300, %v3398
      %v3544 = vadd.f32 %v3301, %v3400
      %v3545 = vadd.f32 %v3302, %v3469
      %v3546 = vadd.f32 %v3303, %v3471
      %v3547 = vadd.f32 %v3304, %v3540
      %3548 = vrot.lane.b32.xlu0 %v2574, 96
      %v3549 = vpop.permute.xlu0 %3548
      %v3550 = vsel %vm399, %v3549, 0
      %3552 = vmatprep.subr.mxu0 0.0
      %3553 = vmatpush1.msra.mxu0 0.0
      %3554 = vmatprep.subr.mxu0 0.0
      %3555 = vmatpush1.msra.mxu0 0.0
      %3556 = vmatprep.subr.mxu0 0.0
      %3557 = vmatpush1.msra.mxu0 0.0
      %3558 = vmatprep.subr.mxu0 0.0
      %3559 = vmatpush1.msra.mxu0 0.0
      %3560 = vmatprep.subr.mxu0 0.0
      %3561 = vmatpush1.msra.mxu0 0.0
      %3562 = vmatprep.subr.mxu0 0.0
      %3563 = vmatpush1.msra.mxu0 0.0
      %3564 = vmatprep.subr.mxu0 0.0
      %3565 = vmatpush1.msra.mxu0 0.0
      %3566 = vmatprep.subr.mxu0 0.0
      %3567 = vmatpush1.msra.mxu0 0.0
      %3568 = vmatprep.subr.mxu0 0.0
      %3569 = vmatpush1.msra.mxu0 0.0
      %3570 = vmatprep.subr.mxu0 0.0
      %3571 = vmatpush1.msra.mxu0 0.0
      %3572 = vmatprep.subr.mxu0 0.0
      %3573 = vmatpush1.msra.mxu0 0.0
      %3574 = vmatprep.subr.mxu0 0.0
      %3575 = vmatpush1.msra.mxu0 0.0
      %3576 = vmatprep.subr.mxu0 0.0
      %3577 = vmatpush1.msra.mxu0 0.0
      %3578 = vmatprep.subr.mxu0 0.0
      %3579 = vmatpush1.msra.mxu0 0.0
      %3580 = vmatprep.subr.mxu0 0.0
      %3581 = vmatpush1.msra.mxu0 0.0
      %3582 = vmatprep.subr.mxu0 %v2577
      %3583 = vmatpush1.msra.mxu0 %v2576
      %3584 = vmatprep.subr.mxu0 0.0
      %3585 = vmatpush2.msra.mxu0 0.0
      %3586 = vmatprep.subr.mxu0 0.0
      %3587 = vmatpush2.msra.mxu0 0.0
      %3588 = vmatprep.subr.mxu0 0.0
      %3589 = vmatpush2.msra.mxu0 0.0
      %3590 = vmatprep.subr.mxu0 0.0
      %3591 = vmatpush2.msra.mxu0 0.0
      %3592 = vmatprep.subr.mxu0 0.0
      %3593 = vmatpush2.msra.mxu0 0.0
      %3594 = vmatprep.subr.mxu0 0.0
      %3595 = vmatpush2.msra.mxu0 0.0
      %3596 = vmatprep.subr.mxu0 0.0
      %3597 = vmatpush2.msra.mxu0 0.0
      %3598 = vmatprep.subr.mxu0 0.0
      %3599 = vmatpush2.msra.mxu0 0.0
      %3600 = vmatprep.subr.mxu0 0.0
      %3601 = vmatpush2.msra.mxu0 0.0
      %3602 = vmatprep.subr.mxu0 0.0
      %3603 = vmatpush2.msra.mxu0 0.0
      %3604 = vmatprep.subr.mxu0 0.0
      %3605 = vmatpush2.msra.mxu0 0.0
      %3606 = vmatprep.subr.mxu0 0.0
      %3607 = vmatpush2.msra.mxu0 0.0
      %3608 = vmatprep.subr.mxu0 0.0
      %3609 = vmatpush2.msra.mxu0 0.0
      %3610 = vmatprep.subr.mxu0 0.0
      %3611 = vmatpush2.msra.mxu0 0.0
      %3612 = vmatprep.subr.mxu0 0.0
      %3613 = vmatpush2.msra.mxu0 0.0
      %3614 = vmatprep.subr.mxu0 0.0
      %3615 = vmatpush2.msra.mxu0 0.0
      %3616 = vmatprep.mubr.f32.mxu0 0.0
      %3617 = vmatmul.mubr.f32.gmra.mxu0 %v3550
      %v3618 = vpop.f32.mrf.mxu0
      %v3619 = vadd.f32 0.0, %v3618
      %v3620 = vpop.f32.mrf.mxu0
      %v3621 = vadd.f32 0.0, %v3620
      %3622 = vdwg.mxu0
      %3623 = vmatprep.subr.mxu0 0.0
      %3624 = vmatpush1.msra.mxu0 0.0
      %3625 = vmatprep.subr.mxu0 0.0
      %3626 = vmatpush1.msra.mxu0 0.0
      %3627 = vmatprep.subr.mxu0 0.0
      %3628 = vmatpush1.msra.mxu0 0.0
      %3629 = vmatprep.subr.mxu0 0.0
      %3630 = vmatpush1.msra.mxu0 0.0
      %3631 = vmatprep.subr.mxu0 0.0
      %3632 = vmatpush1.msra.mxu0 0.0
      %3633 = vmatprep.subr.mxu0 0.0
      %3634 = vmatpush1.msra.mxu0 0.0
      %3635 = vmatprep.subr.mxu0 0.0
      %3636 = vmatpush1.msra.mxu0 0.0
      %3637 = vmatprep.subr.mxu0 0.0
      %3638 = vmatpush1.msra.mxu0 0.0
      %3639 = vmatprep.subr.mxu0 0.0
      %3640 = vmatpush1.msra.mxu0 0.0
      %3641 = vmatprep.subr.mxu0 0.0
      %3642 = vmatpush1.msra.mxu0 0.0
      %3643 = vmatprep.subr.mxu0 0.0
      %3644 = vmatpush1.msra.mxu0 0.0
      %3645 = vmatprep.subr.mxu0 0.0
      %3646 = vmatpush1.msra.mxu0 0.0
      %3647 = vmatprep.subr.mxu0 0.0
      %3648 = vmatpush1.msra.mxu0 0.0
      %3649 = vmatprep.subr.mxu0 0.0
      %3650 = vmatpush1.msra.mxu0 0.0
      %3651 = vmatprep.subr.mxu0 0.0
      %3652 = vmatpush1.msra.mxu0 0.0
      %3653 = vmatprep.subr.mxu0 %v2579
      %3654 = vmatpush1.msra.mxu0 %v2578
      %3655 = vmatprep.subr.mxu0 0.0
      %3656 = vmatpush2.msra.mxu0 0.0
      %3657 = vmatprep.subr.mxu0 0.0
      %3658 = vmatpush2.msra.mxu0 0.0
      %3659 = vmatprep.subr.mxu0 0.0
      %3660 = vmatpush2.msra.mxu0 0.0
      %3661 = vmatprep.subr.mxu0 0.0
      %3662 = vmatpush2.msra.mxu0 0.0
      %3663 = vmatprep.subr.mxu0 0.0
      %3664 = vmatpush2.msra.mxu0 0.0
      %3665 = vmatprep.subr.mxu0 0.0
      %3666 = vmatpush2.msra.mxu0 0.0
      %3667 = vmatprep.subr.mxu0 0.0
      %3668 = vmatpush2.msra.mxu0 0.0
      %3669 = vmatprep.subr.mxu0 0.0
      %3670 = vmatpush2.msra.mxu0 0.0
      %3671 = vmatprep.subr.mxu0 0.0
      %3672 = vmatpush2.msra.mxu0 0.0
      %3673 = vmatprep.subr.mxu0 0.0
      %3674 = vmatpush2.msra.mxu0 0.0
      %3675 = vmatprep.subr.mxu0 0.0
      %3676 = vmatpush2.msra.mxu0 0.0
      %3677 = vmatprep.subr.mxu0 0.0
      %3678 = vmatpush2.msra.mxu0 0.0
      %3679 = vmatprep.subr.mxu0 0.0
      %3680 = vmatpush2.msra.mxu0 0.0
      %3681 = vmatprep.subr.mxu0 0.0
      %3682 = vmatpush2.msra.mxu0 0.0
      %3683 = vmatprep.subr.mxu0 0.0
      %3684 = vmatpush2.msra.mxu0 0.0
      %3685 = vmatprep.subr.mxu0 0.0
      %3686 = vmatpush2.msra.mxu0 0.0
      %3687 = vmatprep.mubr.f32.mxu0 0.0
      %3688 = vmatmul.mubr.f32.gmra.mxu0 %v3550
      %v3689 = vpop.f32.mrf.mxu0
      %v3690 = vadd.f32 0.0, %v3689
      %v3691 = vpop.f32.mrf.mxu0
      %v3692 = vadd.f32 0.0, %v3691
      %3693 = vdwg.mxu0
      %3694 = vmatprep.subr.mxu0 0.0
      %3695 = vmatpush1.msra.mxu0 0.0
      %3696 = vmatprep.subr.mxu0 0.0
      %3697 = vmatpush1.msra.mxu0 0.0
      %3698 = vmatprep.subr.mxu0 0.0
      %3699 = vmatpush1.msra.mxu0 0.0
      %3700 = vmatprep.subr.mxu0 0.0
      %3701 = vmatpush1.msra.mxu0 0.0
      %3702 = vmatprep.subr.mxu0 0.0
      %3703 = vmatpush1.msra.mxu0 0.0
      %3704 = vmatprep.subr.mxu0 0.0
      %3705 = vmatpush1.msra.mxu0 0.0
      %3706 = vmatprep.subr.mxu0 0.0
      %3707 = vmatpush1.msra.mxu0 0.0
      %3708 = vmatprep.subr.mxu0 0.0
      %3709 = vmatpush1.msra.mxu0 0.0
      %3710 = vmatprep.subr.mxu0 0.0
      %3711 = vmatpush1.msra.mxu0 0.0
      %3712 = vmatprep.subr.mxu0 0.0
      %3713 = vmatpush1.msra.mxu0 0.0
      %3714 = vmatprep.subr.mxu0 0.0
      %3715 = vmatpush1.msra.mxu0 0.0
      %3716 = vmatprep.subr.mxu0 0.0
      %3717 = vmatpush1.msra.mxu0 0.0
      %3718 = vmatprep.subr.mxu0 0.0
      %3719 = vmatpush1.msra.mxu0 0.0
      %3720 = vmatprep.subr.mxu0 0.0
      %3721 = vmatpush1.msra.mxu0 0.0
      %3722 = vmatprep.subr.mxu0 0.0
      %3723 = vmatpush1.msra.mxu0 0.0
      %3724 = vmatprep.subr.mxu0 0.0
      %3725 = vmatpush1.msra.mxu0 %v2580
      %3726 = vmatprep.subr.mxu0 0.0
      %3727 = vmatpush2.msra.mxu0 0.0
      %3728 = vmatprep.subr.mxu0 0.0
      %3729 = vmatpush2.msra.mxu0 0.0
      %3730 = vmatprep.subr.mxu0 0.0
      %3731 = vmatpush2.msra.mxu0 0.0
      %3732 = vmatprep.subr.mxu0 0.0
      %3733 = vmatpush2.msra.mxu0 0.0
      %3734 = vmatprep.subr.mxu0 0.0
      %3735 = vmatpush2.msra.mxu0 0.0
      %3736 = vmatprep.subr.mxu0 0.0
      %3737 = vmatpush2.msra.mxu0 0.0
      %3738 = vmatprep.subr.mxu0 0.0
      %3739 = vmatpush2.msra.mxu0 0.0
      %3740 = vmatprep.subr.mxu0 0.0
      %3741 = vmatpush2.msra.mxu0 0.0
      %3742 = vmatprep.subr.mxu0 0.0
      %3743 = vmatpush2.msra.mxu0 0.0
      %3744 = vmatprep.subr.mxu0 0.0
      %3745 = vmatpush2.msra.mxu0 0.0
      %3746 = vmatprep.subr.mxu0 0.0
      %3747 = vmatpush2.msra.mxu0 0.0
      %3748 = vmatprep.subr.mxu0 0.0
      %3749 = vmatpush2.msra.mxu0 0.0
      %3750 = vmatprep.subr.mxu0 0.0
      %3751 = vmatpush2.msra.mxu0 0.0
      %3752 = vmatprep.subr.mxu0 0.0
      %3753 = vmatpush2.msra.mxu0 0.0
      %3754 = vmatprep.subr.mxu0 0.0
      %3755 = vmatpush2.msra.mxu0 0.0
      %3756 = vmatprep.subr.mxu0 0.0
      %3757 = vmatpush2.msra.mxu0 0.0
      %3758 = vmatprep.mubr.f32.mxu0 0.0
      %3759 = vmatmul.mubr.f32.gmra.mxu0 %v3550
      %v3760 = vpop.f32.mrf.mxu0
      %v3761 = vadd.f32 0.0, %v3760
      %v3762 = vpop.f32.mrf.mxu0
      %3763 = vdwg.mxu0
      %v3764 = vadd.f32 %v3543, %v3619
      %v3765 = vadd.f32 %v3544, %v3621
      %v3766 = vadd.f32 %v3545, %v3690
      %v3767 = vadd.f32 %v3546, %v3692
      %v3768 = vadd.f32 %v3547, %v3761
      %v3769 = vld [vmem:[#allocation2 + $0x8] sm:$0xff]
      %v3770 = vld [vmem:[#allocation2 + $0x10] sm:$0xff]
      %v3771 = vld [vmem:[#allocation2 + $0x18] sm:$0xff]
      %v3772 = vld [vmem:[#allocation2 + $0x20] sm:$0xff]
      %v3773 = vld [vmem:[#allocation2 + $0x28] sm:$0xff]
      %v3774 = vld [vmem:[#allocation2 + $0x30] sm:$0xff]
      %3775 = vrot.lane.b32.xlu0 %v2574, 88
      %v3776 = vpop.permute.xlu0 %3775
      %3783 = vrot.lane.b32.xlu0 %v3769, 127
      %v3784 = vpop.permute.xlu0 %3783
      %3785 = vrot.lane.b32.xlu0 %v3770, 127
      %v3786 = vpop.permute.xlu0 %3785
      %3787 = vrot.lane.b32.xlu0 %v3771, 127
      %v3788 = vpop.permute.xlu0 %3787
      %3789 = vrot.lane.b32.xlu0 %v3772, 127
      %v3790 = vpop.permute.xlu0 %3789
      %3791 = vrot.lane.b32.xlu0 %v3773, 127
      %v3792 = vpop.permute.xlu0 %3791
      %3793 = vrot.lane.b32.xlu0 %v3774, 127
      %v3794 = vpop.permute.xlu0 %3793
      %v3795 = vsel %vm1586, %v3784, %v3786
      %v3796 = vsel %vm1586, %v3786, %v3788
      %v3797 = vsel %vm1586, %v3788, %v3790
      %v3798 = vsel %vm1586, %v3790, %v3792
      %v3799 = vsel %vm1586, %v3792, %v3794
      %v3805 = vsel %vm399, %v3776, 0
      %3807 = vmatprep.subr.mxu0 0.0
      %3808 = vmatpush1.msra.mxu0 0.0
      %3809 = vmatprep.subr.mxu0 0.0
      %3810 = vmatpush1.msra.mxu0 0.0
      %3811 = vmatprep.subr.mxu0 0.0
      %3812 = vmatpush1.msra.mxu0 0.0
      %3813 = vmatprep.subr.mxu0 0.0
      %3814 = vmatpush1.msra.mxu0 0.0
      %3815 = vmatprep.subr.mxu0 0.0
      %3816 = vmatpush1.msra.mxu0 0.0
      %3817 = vmatprep.subr.mxu0 0.0
      %3818 = vmatpush1.msra.mxu0 0.0
      %3819 = vmatprep.subr.mxu0 0.0
      %3820 = vmatpush1.msra.mxu0 0.0
      %3821 = vmatprep.subr.mxu0 0.0
      %3822 = vmatpush1.msra.mxu0 0.0
      %3823 = vmatprep.subr.mxu0 0.0
      %3824 = vmatpush1.msra.mxu0 0.0
      %3825 = vmatprep.subr.mxu0 0.0
      %3826 = vmatpush1.msra.mxu0 0.0
      %3827 = vmatprep.subr.mxu0 0.0
      %3828 = vmatpush1.msra.mxu0 0.0
      %3829 = vmatprep.subr.mxu0 0.0
      %3830 = vmatpush1.msra.mxu0 0.0
      %3831 = vmatprep.subr.mxu0 0.0
      %3832 = vmatpush1.msra.mxu0 0.0
      %3833 = vmatprep.subr.mxu0 0.0
      %3834 = vmatpush1.msra.mxu0 0.0
      %3835 = vmatprep.subr.mxu0 0.0
      %3836 = vmatpush1.msra.mxu0 0.0
      %3837 = vmatprep.subr.mxu0 %v3796
      %3838 = vmatpush1.msra.mxu0 %v3795
      %3839 = vmatprep.subr.mxu0 0.0
      %3840 = vmatpush2.msra.mxu0 0.0
      %3841 = vmatprep.subr.mxu0 0.0
      %3842 = vmatpush2.msra.mxu0 0.0
      %3843 = vmatprep.subr.mxu0 0.0
      %3844 = vmatpush2.msra.mxu0 0.0
      %3845 = vmatprep.subr.mxu0 0.0
      %3846 = vmatpush2.msra.mxu0 0.0
      %3847 = vmatprep.subr.mxu0 0.0
      %3848 = vmatpush2.msra.mxu0 0.0
      %3849 = vmatprep.subr.mxu0 0.0
      %3850 = vmatpush2.msra.mxu0 0.0
      %3851 = vmatprep.subr.mxu0 0.0
      %3852 = vmatpush2.msra.mxu0 0.0
      %3853 = vmatprep.subr.mxu0 0.0
      %3854 = vmatpush2.msra.mxu0 0.0
      %3855 = vmatprep.subr.mxu0 0.0
      %3856 = vmatpush2.msra.mxu0 0.0
      %3857 = vmatprep.subr.mxu0 0.0
      %3858 = vmatpush2.msra.mxu0 0.0
      %3859 = vmatprep.subr.mxu0 0.0
      %3860 = vmatpush2.msra.mxu0 0.0
      %3861 = vmatprep.subr.mxu0 0.0
      %3862 = vmatpush2.msra.mxu0 0.0
      %3863 = vmatprep.subr.mxu0 0.0
      %3864 = vmatpush2.msra.mxu0 0.0
      %3865 = vmatprep.subr.mxu0 0.0
      %3866 = vmatpush2.msra.mxu0 0.0
      %3867 = vmatprep.subr.mxu0 0.0
      %3868 = vmatpush2.msra.mxu0 0.0
      %3869 = vmatprep.subr.mxu0 0.0
      %3870 = vmatpush2.msra.mxu0 0.0
      %3871 = vmatprep.mubr.f32.mxu0 0.0
      %3872 = vmatmul.mubr.f32.gmra.mxu0 %v3805
      %v3873 = vpop.f32.mrf.mxu0
      %v3874 = vadd.f32 0.0, %v3873
      %v3875 = vpop.f32.mrf.mxu0
      %v3876 = vadd.f32 0.0, %v3875
      %3877 = vdwg.mxu0
      %3878 = vmatprep.subr.mxu0 0.0
      %3879 = vmatpush1.msra.mxu0 0.0
      %3880 = vmatprep.subr.mxu0 0.0
      %3881 = vmatpush1.msra.mxu0 0.0
      %3882 = vmatprep.subr.mxu0 0.0
      %3883 = vmatpush1.msra.mxu0 0.0
      %3884 = vmatprep.subr.mxu0 0.0
      %3885 = vmatpush1.msra.mxu0 0.0
      %3886 = vmatprep.subr.mxu0 0.0
      %3887 = vmatpush1.msra.mxu0 0.0
      %3888 = vmatprep.subr.mxu0 0.0
      %3889 = vmatpush1.msra.mxu0 0.0
      %3890 = vmatprep.subr.mxu0 0.0
      %3891 = vmatpush1.msra.mxu0 0.0
      %3892 = vmatprep.subr.mxu0 0.0
      %3893 = vmatpush1.msra.mxu0 0.0
      %3894 = vmatprep.subr.mxu0 0.0
      %3895 = vmatpush1.msra.mxu0 0.0
      %3896 = vmatprep.subr.mxu0 0.0
      %3897 = vmatpush1.msra.mxu0 0.0
      %3898 = vmatprep.subr.mxu0 0.0
      %3899 = vmatpush1.msra.mxu0 0.0
      %3900 = vmatprep.subr.mxu0 0.0
      %3901 = vmatpush1.msra.mxu0 0.0
      %3902 = vmatprep.subr.mxu0 0.0
      %3903 = vmatpush1.msra.mxu0 0.0
      %3904 = vmatprep.subr.mxu0 0.0
      %3905 = vmatpush1.msra.mxu0 0.0
      %3906 = vmatprep.subr.mxu0 0.0
      %3907 = vmatpush1.msra.mxu0 0.0
      %3908 = vmatprep.subr.mxu0 %v3798
      %3909 = vmatpush1.msra.mxu0 %v3797
      %3910 = vmatprep.subr.mxu0 0.0
      %3911 = vmatpush2.msra.mxu0 0.0
      %3912 = vmatprep.subr.mxu0 0.0
      %3913 = vmatpush2.msra.mxu0 0.0
      %3914 = vmatprep.subr.mxu0 0.0
      %3915 = vmatpush2.msra.mxu0 0.0
      %3916 = vmatprep.subr.mxu0 0.0
      %3917 = vmatpush2.msra.mxu0 0.0
      %3918 = vmatprep.subr.mxu0 0.0
      %3919 = vmatpush2.msra.mxu0 0.0
      %3920 = vmatprep.subr.mxu0 0.0
      %3921 = vmatpush2.msra.mxu0 0.0
      %3922 = vmatprep.subr.mxu0 0.0
      %3923 = vmatpush2.msra.mxu0 0.0
      %3924 = vmatprep.subr.mxu0 0.0
      %3925 = vmatpush2.msra.mxu0 0.0
      %3926 = vmatprep.subr.mxu0 0.0
      %3927 = vmatpush2.msra.mxu0 0.0
      %3928 = vmatprep.subr.mxu0 0.0
      %3929 = vmatpush2.msra.mxu0 0.0
      %3930 = vmatprep.subr.mxu0 0.0
      %3931 = vmatpush2.msra.mxu0 0.0
      %3932 = vmatprep.subr.mxu0 0.0
      %3933 = vmatpush2.msra.mxu0 0.0
      %3934 = vmatprep.subr.mxu0 0.0
      %3935 = vmatpush2.msra.mxu0 0.0
      %3936 = vmatprep.subr.mxu0 0.0
      %3937 = vmatpush2.msra.mxu0 0.0
      %3938 = vmatprep.subr.mxu0 0.0
      %3939 = vmatpush2.msra.mxu0 0.0
      %3940 = vmatprep.subr.mxu0 0.0
      %3941 = vmatpush2.msra.mxu0 0.0
      %3942 = vmatprep.mubr.f32.mxu0 0.0
      %3943 = vmatmul.mubr.f32.gmra.mxu0 %v3805
      %v3944 = vpop.f32.mrf.mxu0
      %v3945 = vadd.f32 0.0, %v3944
      %v3946 = vpop.f32.mrf.mxu0
      %v3947 = vadd.f32 0.0, %v3946
      %3948 = vdwg.mxu0
      %3949 = vmatprep.subr.mxu0 0.0
      %3950 = vmatpush1.msra.mxu0 0.0
      %3951 = vmatprep.subr.mxu0 0.0
      %3952 = vmatpush1.msra.mxu0 0.0
      %3953 = vmatprep.subr.mxu0 0.0
      %3954 = vmatpush1.msra.mxu0 0.0
      %3955 = vmatprep.subr.mxu0 0.0
      %3956 = vmatpush1.msra.mxu0 0.0
      %3957 = vmatprep.subr.mxu0 0.0
      %3958 = vmatpush1.msra.mxu0 0.0
      %3959 = vmatprep.subr.mxu0 0.0
      %3960 = vmatpush1.msra.mxu0 0.0
      %3961 = vmatprep.subr.mxu0 0.0
      %3962 = vmatpush1.msra.mxu0 0.0
      %3963 = vmatprep.subr.mxu0 0.0
      %3964 = vmatpush1.msra.mxu0 0.0
      %3965 = vmatprep.subr.mxu0 0.0
      %3966 = vmatpush1.msra.mxu0 0.0
      %3967 = vmatprep.subr.mxu0 0.0
      %3968 = vmatpush1.msra.mxu0 0.0
      %3969 = vmatprep.subr.mxu0 0.0
      %3970 = vmatpush1.msra.mxu0 0.0
      %3971 = vmatprep.subr.mxu0 0.0
      %3972 = vmatpush1.msra.mxu0 0.0
      %3973 = vmatprep.subr.mxu0 0.0
      %3974 = vmatpush1.msra.mxu0 0.0
      %3975 = vmatprep.subr.mxu0 0.0
      %3976 = vmatpush1.msra.mxu0 0.0
      %3977 = vmatprep.subr.mxu0 0.0
      %3978 = vmatpush1.msra.mxu0 0.0
      %3979 = vmatprep.subr.mxu0 0.0
      %3980 = vmatpush1.msra.mxu0 %v3799
      %3981 = vmatprep.subr.mxu0 0.0
      %3982 = vmatpush2.msra.mxu0 0.0
      %3983 = vmatprep.subr.mxu0 0.0
      %3984 = vmatpush2.msra.mxu0 0.0
      %3985 = vmatprep.subr.mxu0 0.0
      %3986 = vmatpush2.msra.mxu0 0.0
      %3987 = vmatprep.subr.mxu0 0.0
      %3988 = vmatpush2.msra.mxu0 0.0
      %3989 = vmatprep.subr.mxu0 0.0
      %3990 = vmatpush2.msra.mxu0 0.0
      %3991 = vmatprep.subr.mxu0 0.0
      %3992 = vmatpush2.msra.mxu0 0.0
      %3993 = vmatprep.subr.mxu0 0.0
      %3994 = vmatpush2.msra.mxu0 0.0
      %3995 = vmatprep.subr.mxu0 0.0
      %3996 = vmatpush2.msra.mxu0 0.0
      %3997 = vmatprep.subr.mxu0 0.0
      %3998 = vmatpush2.msra.mxu0 0.0
      %3999 = vmatprep.subr.mxu0 0.0
      %4000 = vmatpush2.msra.mxu0 0.0
      %4001 = vmatprep.subr.mxu0 0.0
      %4002 = vmatpush2.msra.mxu0 0.0
      %4003 = vmatprep.subr.mxu0 0.0
      %4004 = vmatpush2.msra.mxu0 0.0
      %4005 = vmatprep.subr.mxu0 0.0
      %4006 = vmatpush2.msra.mxu0 0.0
      %4007 = vmatprep.subr.mxu0 0.0
      %4008 = vmatpush2.msra.mxu0 0.0
      %4009 = vmatprep.subr.mxu0 0.0
      %4010 = vmatpush2.msra.mxu0 0.0
      %4011 = vmatprep.subr.mxu0 0.0
      %4012 = vmatpush2.msra.mxu0 0.0
      %4013 = vmatprep.mubr.f32.mxu0 0.0
      %4014 = vmatmul.mubr.f32.gmra.mxu0 %v3805
      %v4015 = vpop.f32.mrf.mxu0
      %v4016 = vadd.f32 0.0, %v4015
      %v4017 = vpop.f32.mrf.mxu0
      %4018 = vdwg.mxu0
      %v4019 = vadd.f32 %v3764, %v3874
      %v4020 = vadd.f32 %v3765, %v3876
      %v4021 = vadd.f32 %v3766, %v3945
      %v4022 = vadd.f32 %v3767, %v3947
      %v4023 = vadd.f32 %v3768, %v4016
      %4024 = vrot.lane.b32.xlu0 %v2574, 80
      %v4025 = vpop.permute.xlu0 %4024
      %4026 = vrot.lane.b32.xlu0 %v3769, 111
      %v4027 = vpop.permute.xlu0 %4026
      %4028 = vrot.lane.b32.xlu0 %v3770, 111
      %v4029 = vpop.permute.xlu0 %4028
      %4030 = vrot.lane.b32.xlu0 %v3771, 111
      %v4031 = vpop.permute.xlu0 %4030
      %4032 = vrot.lane.b32.xlu0 %v3772, 111
      %v4033 = vpop.permute.xlu0 %4032
      %4034 = vrot.lane.b32.xlu0 %v3773, 111
      %v4035 = vpop.permute.xlu0 %4034
      %4036 = vrot.lane.b32.xlu0 %v3774, 111
      %v4037 = vpop.permute.xlu0 %4036
      %v4038 = vsel %vm1830, %v4027, %v4029
      %v4039 = vsel %vm1830, %v4029, %v4031
      %v4040 = vsel %vm1830, %v4031, %v4033
      %v4041 = vsel %vm1830, %v4033, %v4035
      %v4042 = vsel %vm1830, %v4035, %v4037
      %v4048 = vsel %vm399, %v4025, 0
      %4050 = vmatprep.subr.mxu0 0.0
      %4051 = vmatpush1.msra.mxu0 0.0
      %4052 = vmatprep.subr.mxu0 0.0
      %4053 = vmatpush1.msra.mxu0 0.0
      %4054 = vmatprep.subr.mxu0 0.0
      %4055 = vmatpush1.msra.mxu0 0.0
      %4056 = vmatprep.subr.mxu0 0.0
      %4057 = vmatpush1.msra.mxu0 0.0
      %4058 = vmatprep.subr.mxu0 0.0
      %4059 = vmatpush1.msra.mxu0 0.0
      %4060 = vmatprep.subr.mxu0 0.0
      %4061 = vmatpush1.msra.mxu0 0.0
      %4062 = vmatprep.subr.mxu0 0.0
      %4063 = vmatpush1.msra.mxu0 0.0
      %4064 = vmatprep.subr.mxu0 0.0
      %4065 = vmatpush1.msra.mxu0 0.0
      %4066 = vmatprep.subr.mxu0 0.0
      %4067 = vmatpush1.msra.mxu0 0.0
      %4068 = vmatprep.subr.mxu0 0.0
      %4069 = vmatpush1.msra.mxu0 0.0
      %4070 = vmatprep.subr.mxu0 0.0
      %4071 = vmatpush1.msra.mxu0 0.0
      %4072 = vmatprep.subr.mxu0 0.0
      %4073 = vmatpush1.msra.mxu0 0.0
      %4074 = vmatprep.subr.mxu0 0.0
      %4075 = vmatpush1.msra.mxu0 0.0
      %4076 = vmatprep.subr.mxu0 0.0
      %4077 = vmatpush1.msra.mxu0 0.0
      %4078 = vmatprep.subr.mxu0 0.0
      %4079 = vmatpush1.msra.mxu0 0.0
      %4080 = vmatprep.subr.mxu0 %v4039
      %4081 = vmatpush1.msra.mxu0 %v4038
      %4082 = vmatprep.subr.mxu0 0.0
      %4083 = vmatpush2.msra.mxu0 0.0
      %4084 = vmatprep.subr.mxu0 0.0
      %4085 = vmatpush2.msra.mxu0 0.0
      %4086 = vmatprep.subr.mxu0 0.0
      %4087 = vmatpush2.msra.mxu0 0.0
      %4088 = vmatprep.subr.mxu0 0.0
      %4089 = vmatpush2.msra.mxu0 0.0
      %4090 = vmatprep.subr.mxu0 0.0
      %4091 = vmatpush2.msra.mxu0 0.0
      %4092 = vmatprep.subr.mxu0 0.0
      %4093 = vmatpush2.msra.mxu0 0.0
      %4094 = vmatprep.subr.mxu0 0.0
      %4095 = vmatpush2.msra.mxu0 0.0
      %4096 = vmatprep.subr.mxu0 0.0
      %4097 = vmatpush2.msra.mxu0 0.0
      %4098 = vmatprep.subr.mxu0 0.0
      %4099 = vmatpush2.msra.mxu0 0.0
      %4100 = vmatprep.subr.mxu0 0.0
      %4101 = vmatpush2.msra.mxu0 0.0
      %4102 = vmatprep.subr.mxu0 0.0
      %4103 = vmatpush2.msra.mxu0 0.0
      %4104 = vmatprep.subr.mxu0 0.0
      %4105 = vmatpush2.msra.mxu0 0.0
      %4106 = vmatprep.subr.mxu0 0.0
      %4107 = vmatpush2.msra.mxu0 0.0
      %4108 = vmatprep.subr.mxu0 0.0
      %4109 = vmatpush2.msra.mxu0 0.0
      %4110 = vmatprep.subr.mxu0 0.0
      %4111 = vmatpush2.msra.mxu0 0.0
      %4112 = vmatprep.subr.mxu0 0.0
      %4113 = vmatpush2.msra.mxu0 0.0
      %4114 = vmatprep.mubr.f32.mxu0 0.0
      %4115 = vmatmul.mubr.f32.gmra.mxu0 %v4048
      %v4116 = vpop.f32.mrf.mxu0
      %v4117 = vadd.f32 0.0, %v4116
      %v4118 = vpop.f32.mrf.mxu0
      %v4119 = vadd.f32 0.0, %v4118
      %4120 = vdwg.mxu0
      %4121 = vmatprep.subr.mxu0 0.0
      %4122 = vmatpush1.msra.mxu0 0.0
      %4123 = vmatprep.subr.mxu0 0.0
      %4124 = vmatpush1.msra.mxu0 0.0
      %4125 = vmatprep.subr.mxu0 0.0
      %4126 = vmatpush1.msra.mxu0 0.0
      %4127 = vmatprep.subr.mxu0 0.0
      %4128 = vmatpush1.msra.mxu0 0.0
      %4129 = vmatprep.subr.mxu0 0.0
      %4130 = vmatpush1.msra.mxu0 0.0
      %4131 = vmatprep.subr.mxu0 0.0
      %4132 = vmatpush1.msra.mxu0 0.0
      %4133 = vmatprep.subr.mxu0 0.0
      %4134 = vmatpush1.msra.mxu0 0.0
      %4135 = vmatprep.subr.mxu0 0.0
      %4136 = vmatpush1.msra.mxu0 0.0
      %4137 = vmatprep.subr.mxu0 0.0
      %4138 = vmatpush1.msra.mxu0 0.0
      %4139 = vmatprep.subr.mxu0 0.0
      %4140 = vmatpush1.msra.mxu0 0.0
      %4141 = vmatprep.subr.mxu0 0.0
      %4142 = vmatpush1.msra.mxu0 0.0
      %4143 = vmatprep.subr.mxu0 0.0
      %4144 = vmatpush1.msra.mxu0 0.0
      %4145 = vmatprep.subr.mxu0 0.0
      %4146 = vmatpush1.msra.mxu0 0.0
      %4147 = vmatprep.subr.mxu0 0.0
      %4148 = vmatpush1.msra.mxu0 0.0
      %4149 = vmatprep.subr.mxu0 0.0
      %4150 = vmatpush1.msra.mxu0 0.0
      %4151 = vmatprep.subr.mxu0 %v4041
      %4152 = vmatpush1.msra.mxu0 %v4040
      %4153 = vmatprep.subr.mxu0 0.0
      %4154 = vmatpush2.msra.mxu0 0.0
      %4155 = vmatprep.subr.mxu0 0.0
      %4156 = vmatpush2.msra.mxu0 0.0
      %4157 = vmatprep.subr.mxu0 0.0
      %4158 = vmatpush2.msra.mxu0 0.0
      %4159 = vmatprep.subr.mxu0 0.0
      %4160 = vmatpush2.msra.mxu0 0.0
      %4161 = vmatprep.subr.mxu0 0.0
      %4162 = vmatpush2.msra.mxu0 0.0
      %4163 = vmatprep.subr.mxu0 0.0
      %4164 = vmatpush2.msra.mxu0 0.0
      %4165 = vmatprep.subr.mxu0 0.0
      %4166 = vmatpush2.msra.mxu0 0.0
      %4167 = vmatprep.subr.mxu0 0.0
      %4168 = vmatpush2.msra.mxu0 0.0
      %4169 = vmatprep.subr.mxu0 0.0
      %4170 = vmatpush2.msra.mxu0 0.0
      %4171 = vmatprep.subr.mxu0 0.0
      %4172 = vmatpush2.msra.mxu0 0.0
      %4173 = vmatprep.subr.mxu0 0.0
      %4174 = vmatpush2.msra.mxu0 0.0
      %4175 = vmatprep.subr.mxu0 0.0
      %4176 = vmatpush2.msra.mxu0 0.0
      %4177 = vmatprep.subr.mxu0 0.0
      %4178 = vmatpush2.msra.mxu0 0.0
      %4179 = vmatprep.subr.mxu0 0.0
      %4180 = vmatpush2.msra.mxu0 0.0
      %4181 = vmatprep.subr.mxu0 0.0
      %4182 = vmatpush2.msra.mxu0 0.0
      %4183 = vmatprep.subr.mxu0 0.0
      %4184 = vmatpush2.msra.mxu0 0.0
      %4185 = vmatprep.mubr.f32.mxu0 0.0
      %4186 = vmatmul.mubr.f32.gmra.mxu0 %v4048
      %v4187 = vpop.f32.mrf.mxu0
      %v4188 = vadd.f32 0.0, %v4187
      %v4189 = vpop.f32.mrf.mxu0
      %v4190 = vadd.f32 0.0, %v4189
      %4191 = vdwg.mxu0
      %4192 = vmatprep.subr.mxu0 0.0
      %4193 = vmatpush1.msra.mxu0 0.0
      %4194 = vmatprep.subr.mxu0 0.0
      %4195 = vmatpush1.msra.mxu0 0.0
      %4196 = vmatprep.subr.mxu0 0.0
      %4197 = vmatpush1.msra.mxu0 0.0
      %4198 = vmatprep.subr.mxu0 0.0
      %4199 = vmatpush1.msra.mxu0 0.0
      %4200 = vmatprep.subr.mxu0 0.0
      %4201 = vmatpush1.msra.mxu0 0.0
      %4202 = vmatprep.subr.mxu0 0.0
      %4203 = vmatpush1.msra.mxu0 0.0
      %4204 = vmatprep.subr.mxu0 0.0
      %4205 = vmatpush1.msra.mxu0 0.0
      %4206 = vmatprep.subr.mxu0 0.0
      %4207 = vmatpush1.msra.mxu0 0.0
      %4208 = vmatprep.subr.mxu0 0.0
      %4209 = vmatpush1.msra.mxu0 0.0
      %4210 = vmatprep.subr.mxu0 0.0
      %4211 = vmatpush1.msra.mxu0 0.0
      %4212 = vmatprep.subr.mxu0 0.0
      %4213 = vmatpush1.msra.mxu0 0.0
      %4214 = vmatprep.subr.mxu0 0.0
      %4215 = vmatpush1.msra.mxu0 0.0
      %4216 = vmatprep.subr.mxu0 0.0
      %4217 = vmatpush1.msra.mxu0 0.0
      %4218 = vmatprep.subr.mxu0 0.0
      %4219 = vmatpush1.msra.mxu0 0.0
      %4220 = vmatprep.subr.mxu0 0.0
      %4221 = vmatpush1.msra.mxu0 0.0
      %4222 = vmatprep.subr.mxu0 0.0
      %4223 = vmatpush1.msra.mxu0 %v4042
      %4224 = vmatprep.subr.mxu0 0.0
      %4225 = vmatpush2.msra.mxu0 0.0
      %4226 = vmatprep.subr.mxu0 0.0
      %4227 = vmatpush2.msra.mxu0 0.0
      %4228 = vmatprep.subr.mxu0 0.0
      %4229 = vmatpush2.msra.mxu0 0.0
      %4230 = vmatprep.subr.mxu0 0.0
      %4231 = vmatpush2.msra.mxu0 0.0
      %4232 = vmatprep.subr.mxu0 0.0
      %4233 = vmatpush2.msra.mxu0 0.0
      %4234 = vmatprep.subr.mxu0 0.0
      %4235 = vmatpush2.msra.mxu0 0.0
      %4236 = vmatprep.subr.mxu0 0.0
      %4237 = vmatpush2.msra.mxu0 0.0
      %4238 = vmatprep.subr.mxu0 0.0
      %4239 = vmatpush2.msra.mxu0 0.0
      %4240 = vmatprep.subr.mxu0 0.0
      %4241 = vmatpush2.msra.mxu0 0.0
      %4242 = vmatprep.subr.mxu0 0.0
      %4243 = vmatpush2.msra.mxu0 0.0
      %4244 = vmatprep.subr.mxu0 0.0
      %4245 = vmatpush2.msra.mxu0 0.0
      %4246 = vmatprep.subr.mxu0 0.0
      %4247 = vmatpush2.msra.mxu0 0.0
      %4248 = vmatprep.subr.mxu0 0.0
      %4249 = vmatpush2.msra.mxu0 0.0
      %4250 = vmatprep.subr.mxu0 0.0
      %4251 = vmatpush2.msra.mxu0 0.0
      %4252 = vmatprep.subr.mxu0 0.0
      %4253 = vmatpush2.msra.mxu0 0.0
      %4254 = vmatprep.subr.mxu0 0.0
      %4255 = vmatpush2.msra.mxu0 0.0
      %4256 = vmatprep.mubr.f32.mxu0 0.0
      %4257 = vmatmul.mubr.f32.gmra.mxu0 %v4048
      %v4258 = vpop.f32.mrf.mxu0
      %v4259 = vadd.f32 0.0, %v4258
      %v4260 = vpop.f32.mrf.mxu0
      %4261 = vdwg.mxu0
      %v4262 = vadd.f32 %v4019, %v4117
      %v4263 = vadd.f32 %v4020, %v4119
      %v4264 = vadd.f32 %v4021, %v4188
      %v4265 = vadd.f32 %v4022, %v4190
      %v4266 = vadd.f32 %v4023, %v4259
      %4267 = vrot.lane.b32.xlu0 %v2574, 72
      %v4268 = vpop.permute.xlu0 %4267
      %4269 = vrot.lane.b32.xlu0 %v3769, 110
      %v4270 = vpop.permute.xlu0 %4269
      %4271 = vrot.lane.b32.xlu0 %v3770, 110
      %v4272 = vpop.permute.xlu0 %4271
      %4273 = vrot.lane.b32.xlu0 %v3771, 110
      %v4274 = vpop.permute.xlu0 %4273
      %4275 = vrot.lane.b32.xlu0 %v3772, 110
      %v4276 = vpop.permute.xlu0 %4275
      %4277 = vrot.lane.b32.xlu0 %v3773, 110
      %v4278 = vpop.permute.xlu0 %4277
      %4279 = vrot.lane.b32.xlu0 %v3774, 110
      %v4280 = vpop.permute.xlu0 %4279
      %v4281 = vsel %vm2074, %v4270, %v4272
      %v4282 = vsel %vm2074, %v4272, %v4274
      %v4283 = vsel %vm2074, %v4274, %v4276
      %v4284 = vsel %vm2074, %v4276, %v4278
      %v4285 = vsel %vm2074, %v4278, %v4280
      %v4291 = vsel %vm399, %v4268, 0
      %4293 = vmatprep.subr.mxu0 0.0
      %4294 = vmatpush1.msra.mxu0 0.0
      %4295 = vmatprep.subr.mxu0 0.0
      %4296 = vmatpush1.msra.mxu0 0.0
      %4297 = vmatprep.subr.mxu0 0.0
      %4298 = vmatpush1.msra.mxu0 0.0
      %4299 = vmatprep.subr.mxu0 0.0
      %4300 = vmatpush1.msra.mxu0 0.0
      %4301 = vmatprep.subr.mxu0 0.0
      %4302 = vmatpush1.msra.mxu0 0.0
      %4303 = vmatprep.subr.mxu0 0.0
      %4304 = vmatpush1.msra.mxu0 0.0
      %4305 = vmatprep.subr.mxu0 0.0
      %4306 = vmatpush1.msra.mxu0 0.0
      %4307 = vmatprep.subr.mxu0 0.0
      %4308 = vmatpush1.msra.mxu0 0.0
      %4309 = vmatprep.subr.mxu0 0.0
      %4310 = vmatpush1.msra.mxu0 0.0
      %4311 = vmatprep.subr.mxu0 0.0
      %4312 = vmatpush1.msra.mxu0 0.0
      %4313 = vmatprep.subr.mxu0 0.0
      %4314 = vmatpush1.msra.mxu0 0.0
      %4315 = vmatprep.subr.mxu0 0.0
      %4316 = vmatpush1.msra.mxu0 0.0
      %4317 = vmatprep.subr.mxu0 0.0
      %4318 = vmatpush1.msra.mxu0 0.0
      %4319 = vmatprep.subr.mxu0 0.0
      %4320 = vmatpush1.msra.mxu0 0.0
      %4321 = vmatprep.subr.mxu0 0.0
      %4322 = vmatpush1.msra.mxu0 0.0
      %4323 = vmatprep.subr.mxu0 %v4282
      %4324 = vmatpush1.msra.mxu0 %v4281
      %4325 = vmatprep.subr.mxu0 0.0
      %4326 = vmatpush2.msra.mxu0 0.0
      %4327 = vmatprep.subr.mxu0 0.0
      %4328 = vmatpush2.msra.mxu0 0.0
      %4329 = vmatprep.subr.mxu0 0.0
      %4330 = vmatpush2.msra.mxu0 0.0
      %4331 = vmatprep.subr.mxu0 0.0
      %4332 = vmatpush2.msra.mxu0 0.0
      %4333 = vmatprep.subr.mxu0 0.0
      %4334 = vmatpush2.msra.mxu0 0.0
      %4335 = vmatprep.subr.mxu0 0.0
      %4336 = vmatpush2.msra.mxu0 0.0
      %4337 = vmatprep.subr.mxu0 0.0
      %4338 = vmatpush2.msra.mxu0 0.0
      %4339 = vmatprep.subr.mxu0 0.0
      %4340 = vmatpush2.msra.mxu0 0.0
      %4341 = vmatprep.subr.mxu0 0.0
      %4342 = vmatpush2.msra.mxu0 0.0
      %4343 = vmatprep.subr.mxu0 0.0
      %4344 = vmatpush2.msra.mxu0 0.0
      %4345 = vmatprep.subr.mxu0 0.0
      %4346 = vmatpush2.msra.mxu0 0.0
      %4347 = vmatprep.subr.mxu0 0.0
      %4348 = vmatpush2.msra.mxu0 0.0
      %4349 = vmatprep.subr.mxu0 0.0
      %4350 = vmatpush2.msra.mxu0 0.0
      %4351 = vmatprep.subr.mxu0 0.0
      %4352 = vmatpush2.msra.mxu0 0.0
      %4353 = vmatprep.subr.mxu0 0.0
      %4354 = vmatpush2.msra.mxu0 0.0
      %4355 = vmatprep.subr.mxu0 0.0
      %4356 = vmatpush2.msra.mxu0 0.0
      %4357 = vmatprep.mubr.f32.mxu0 0.0
      %4358 = vmatmul.mubr.f32.gmra.mxu0 %v4291
      %v4359 = vpop.f32.mrf.mxu0
      %v4360 = vadd.f32 0.0, %v4359
      %v4361 = vpop.f32.mrf.mxu0
      %v4362 = vadd.f32 0.0, %v4361
      %4363 = vdwg.mxu0
      %4364 = vmatprep.subr.mxu0 0.0
      %4365 = vmatpush1.msra.mxu0 0.0
      %4366 = vmatprep.subr.mxu0 0.0
      %4367 = vmatpush1.msra.mxu0 0.0
      %4368 = vmatprep.subr.mxu0 0.0
      %4369 = vmatpush1.msra.mxu0 0.0
      %4370 = vmatprep.subr.mxu0 0.0
      %4371 = vmatpush1.msra.mxu0 0.0
      %4372 = vmatprep.subr.mxu0 0.0
      %4373 = vmatpush1.msra.mxu0 0.0
      %4374 = vmatprep.subr.mxu0 0.0
      %4375 = vmatpush1.msra.mxu0 0.0
      %4376 = vmatprep.subr.mxu0 0.0
      %4377 = vmatpush1.msra.mxu0 0.0
      %4378 = vmatprep.subr.mxu0 0.0
      %4379 = vmatpush1.msra.mxu0 0.0
      %4380 = vmatprep.subr.mxu0 0.0
      %4381 = vmatpush1.msra.mxu0 0.0
      %4382 = vmatprep.subr.mxu0 0.0
      %4383 = vmatpush1.msra.mxu0 0.0
      %4384 = vmatprep.subr.mxu0 0.0
      %4385 = vmatpush1.msra.mxu0 0.0
      %4386 = vmatprep.subr.mxu0 0.0
      %4387 = vmatpush1.msra.mxu0 0.0
      %4388 = vmatprep.subr.mxu0 0.0
      %4389 = vmatpush1.msra.mxu0 0.0
      %4390 = vmatprep.subr.mxu0 0.0
      %4391 = vmatpush1.msra.mxu0 0.0
      %4392 = vmatprep.subr.mxu0 0.0
      %4393 = vmatpush1.msra.mxu0 0.0
      %4394 = vmatprep.subr.mxu0 %v4284
      %4395 = vmatpush1.msra.mxu0 %v4283
      %4396 = vmatprep.subr.mxu0 0.0
      %4397 = vmatpush2.msra.mxu0 0.0
      %4398 = vmatprep.subr.mxu0 0.0
      %4399 = vmatpush2.msra.mxu0 0.0
      %4400 = vmatprep.subr.mxu0 0.0
      %4401 = vmatpush2.msra.mxu0 0.0
      %4402 = vmatprep.subr.mxu0 0.0
      %4403 = vmatpush2.msra.mxu0 0.0
      %4404 = vmatprep.subr.mxu0 0.0
      %4405 = vmatpush2.msra.mxu0 0.0
      %4406 = vmatprep.subr.mxu0 0.0
      %4407 = vmatpush2.msra.mxu0 0.0
      %4408 = vmatprep.subr.mxu0 0.0
      %4409 = vmatpush2.msra.mxu0 0.0
      %4410 = vmatprep.subr.mxu0 0.0
      %4411 = vmatpush2.msra.mxu0 0.0
      %4412 = vmatprep.subr.mxu0 0.0
      %4413 = vmatpush2.msra.mxu0 0.0
      %4414 = vmatprep.subr.mxu0 0.0
      %4415 = vmatpush2.msra.mxu0 0.0
      %4416 = vmatprep.subr.mxu0 0.0
      %4417 = vmatpush2.msra.mxu0 0.0
      %4418 = vmatprep.subr.mxu0 0.0
      %4419 = vmatpush2.msra.mxu0 0.0
      %4420 = vmatprep.subr.mxu0 0.0
      %4421 = vmatpush2.msra.mxu0 0.0
      %4422 = vmatprep.subr.mxu0 0.0
      %4423 = vmatpush2.msra.mxu0 0.0
      %4424 = vmatprep.subr.mxu0 0.0
      %4425 = vmatpush2.msra.mxu0 0.0
      %4426 = vmatprep.subr.mxu0 0.0
      %4427 = vmatpush2.msra.mxu0 0.0
      %4428 = vmatprep.mubr.f32.mxu0 0.0
      %4429 = vmatmul.mubr.f32.gmra.mxu0 %v4291
      %v4430 = vpop.f32.mrf.mxu0
      %v4431 = vadd.f32 0.0, %v4430
      %v4432 = vpop.f32.mrf.mxu0
      %v4433 = vadd.f32 0.0, %v4432
      %4434 = vdwg.mxu0
      %4435 = vmatprep.subr.mxu0 0.0
      %4436 = vmatpush1.msra.mxu0 0.0
      %4437 = vmatprep.subr.mxu0 0.0
      %4438 = vmatpush1.msra.mxu0 0.0
      %4439 = vmatprep.subr.mxu0 0.0
      %4440 = vmatpush1.msra.mxu0 0.0
      %4441 = vmatprep.subr.mxu0 0.0
      %4442 = vmatpush1.msra.mxu0 0.0
      %4443 = vmatprep.subr.mxu0 0.0
      %4444 = vmatpush1.msra.mxu0 0.0
      %4445 = vmatprep.subr.mxu0 0.0
      %4446 = vmatpush1.msra.mxu0 0.0
      %4447 = vmatprep.subr.mxu0 0.0
      %4448 = vmatpush1.msra.mxu0 0.0
      %4449 = vmatprep.subr.mxu0 0.0
      %4450 = vmatpush1.msra.mxu0 0.0
      %4451 = vmatprep.subr.mxu0 0.0
      %4452 = vmatpush1.msra.mxu0 0.0
      %4453 = vmatprep.subr.mxu0 0.0
      %4454 = vmatpush1.msra.mxu0 0.0
      %4455 = vmatprep.subr.mxu0 0.0
      %4456 = vmatpush1.msra.mxu0 0.0
      %4457 = vmatprep.subr.mxu0 0.0
      %4458 = vmatpush1.msra.mxu0 0.0
      %4459 = vmatprep.subr.mxu0 0.0
      %4460 = vmatpush1.msra.mxu0 0.0
      %4461 = vmatprep.subr.mxu0 0.0
      %4462 = vmatpush1.msra.mxu0 0.0
      %4463 = vmatprep.subr.mxu0 0.0
      %4464 = vmatpush1.msra.mxu0 0.0
      %4465 = vmatprep.subr.mxu0 0.0
      %4466 = vmatpush1.msra.mxu0 %v4285
      %4467 = vmatprep.subr.mxu0 0.0
      %4468 = vmatpush2.msra.mxu0 0.0
      %4469 = vmatprep.subr.mxu0 0.0
      %4470 = vmatpush2.msra.mxu0 0.0
      %4471 = vmatprep.subr.mxu0 0.0
      %4472 = vmatpush2.msra.mxu0 0.0
      %4473 = vmatprep.subr.mxu0 0.0
      %4474 = vmatpush2.msra.mxu0 0.0
      %4475 = vmatprep.subr.mxu0 0.0
      %4476 = vmatpush2.msra.mxu0 0.0
      %4477 = vmatprep.subr.mxu0 0.0
      %4478 = vmatpush2.msra.mxu0 0.0
      %4479 = vmatprep.subr.mxu0 0.0
      %4480 = vmatpush2.msra.mxu0 0.0
      %4481 = vmatprep.subr.mxu0 0.0
      %4482 = vmatpush2.msra.mxu0 0.0
      %4483 = vmatprep.subr.mxu0 0.0
      %4484 = vmatpush2.msra.mxu0 0.0
      %4485 = vmatprep.subr.mxu0 0.0
      %4486 = vmatpush2.msra.mxu0 0.0
      %4487 = vmatprep.subr.mxu0 0.0
      %4488 = vmatpush2.msra.mxu0 0.0
      %4489 = vmatprep.subr.mxu0 0.0
      %4490 = vmatpush2.msra.mxu0 0.0
      %4491 = vmatprep.subr.mxu0 0.0
      %4492 = vmatpush2.msra.mxu0 0.0
      %4493 = vmatprep.subr.mxu0 0.0
      %4494 = vmatpush2.msra.mxu0 0.0
      %4495 = vmatprep.subr.mxu0 0.0
      %4496 = vmatpush2.msra.mxu0 0.0
      %4497 = vmatprep.subr.mxu0 0.0
      %4498 = vmatpush2.msra.mxu0 0.0
      %4499 = vmatprep.mubr.f32.mxu0 0.0
      %4500 = vmatmul.mubr.f32.gmra.mxu0 %v4291
      %v4501 = vpop.f32.mrf.mxu0
      %v4502 = vadd.f32 0.0, %v4501
      %v4503 = vpop.f32.mrf.mxu0
      %4504 = vdwg.mxu0
      %v4505 = vadd.f32 %v4262, %v4360
      %v4506 = vadd.f32 %v4263, %v4362
      %v4507 = vadd.f32 %v4264, %v4431
      %v4508 = vadd.f32 %v4265, %v4433
      %v4509 = vadd.f32 %v4266, %v4502
      %4510 = vrot.lane.b32.xlu0 %v2574, 64
      %v4511 = vpop.permute.xlu0 %4510
      %4512 = vrot.lane.b32.xlu0 %v3769, 109
      %v4513 = vpop.permute.xlu0 %4512
      %4514 = vrot.lane.b32.xlu0 %v3770, 109
      %v4515 = vpop.permute.xlu0 %4514
      %4516 = vrot.lane.b32.xlu0 %v3771, 109
      %v4517 = vpop.permute.xlu0 %4516
      %4518 = vrot.lane.b32.xlu0 %v3772, 109
      %v4519 = vpop.permute.xlu0 %4518
      %4520 = vrot.lane.b32.xlu0 %v3773, 109
      %v4521 = vpop.permute.xlu0 %4520
      %4522 = vrot.lane.b32.xlu0 %v3774, 109
      %v4523 = vpop.permute.xlu0 %4522
      %v4524 = vsel %vm2318, %v4513, %v4515
      %v4525 = vsel %vm2318, %v4515, %v4517
      %v4526 = vsel %vm2318, %v4517, %v4519
      %v4527 = vsel %vm2318, %v4519, %v4521
      %v4528 = vsel %vm2318, %v4521, %v4523
      %v4534 = vsel %vm399, %v4511, 0
      %4536 = vmatprep.subr.mxu0 0.0
      %4537 = vmatpush1.msra.mxu0 0.0
      %4538 = vmatprep.subr.mxu0 0.0
      %4539 = vmatpush1.msra.mxu0 0.0
      %4540 = vmatprep.subr.mxu0 0.0
      %4541 = vmatpush1.msra.mxu0 0.0
      %4542 = vmatprep.subr.mxu0 0.0
      %4543 = vmatpush1.msra.mxu0 0.0
      %4544 = vmatprep.subr.mxu0 0.0
      %4545 = vmatpush1.msra.mxu0 0.0
      %4546 = vmatprep.subr.mxu0 0.0
      %4547 = vmatpush1.msra.mxu0 0.0
      %4548 = vmatprep.subr.mxu0 0.0
      %4549 = vmatpush1.msra.mxu0 0.0
      %4550 = vmatprep.subr.mxu0 0.0
      %4551 = vmatpush1.msra.mxu0 0.0
      %4552 = vmatprep.subr.mxu0 0.0
      %4553 = vmatpush1.msra.mxu0 0.0
      %4554 = vmatprep.subr.mxu0 0.0
      %4555 = vmatpush1.msra.mxu0 0.0
      %4556 = vmatprep.subr.mxu0 0.0
      %4557 = vmatpush1.msra.mxu0 0.0
      %4558 = vmatprep.subr.mxu0 0.0
      %4559 = vmatpush1.msra.mxu0 0.0
      %4560 = vmatprep.subr.mxu0 0.0
      %4561 = vmatpush1.msra.mxu0 0.0
      %4562 = vmatprep.subr.mxu0 0.0
      %4563 = vmatpush1.msra.mxu0 0.0
      %4564 = vmatprep.subr.mxu0 0.0
      %4565 = vmatpush1.msra.mxu0 0.0
      %4566 = vmatprep.subr.mxu0 %v4525
      %4567 = vmatpush1.msra.mxu0 %v4524
      %4568 = vmatprep.subr.mxu0 0.0
      %4569 = vmatpush2.msra.mxu0 0.0
      %4570 = vmatprep.subr.mxu0 0.0
      %4571 = vmatpush2.msra.mxu0 0.0
      %4572 = vmatprep.subr.mxu0 0.0
      %4573 = vmatpush2.msra.mxu0 0.0
      %4574 = vmatprep.subr.mxu0 0.0
      %4575 = vmatpush2.msra.mxu0 0.0
      %4576 = vmatprep.subr.mxu0 0.0
      %4577 = vmatpush2.msra.mxu0 0.0
      %4578 = vmatprep.subr.mxu0 0.0
      %4579 = vmatpush2.msra.mxu0 0.0
      %4580 = vmatprep.subr.mxu0 0.0
      %4581 = vmatpush2.msra.mxu0 0.0
      %4582 = vmatprep.subr.mxu0 0.0
      %4583 = vmatpush2.msra.mxu0 0.0
      %4584 = vmatprep.subr.mxu0 0.0
      %4585 = vmatpush2.msra.mxu0 0.0
      %4586 = vmatprep.subr.mxu0 0.0
      %4587 = vmatpush2.msra.mxu0 0.0
      %4588 = vmatprep.subr.mxu0 0.0
      %4589 = vmatpush2.msra.mxu0 0.0
      %4590 = vmatprep.subr.mxu0 0.0
      %4591 = vmatpush2.msra.mxu0 0.0
      %4592 = vmatprep.subr.mxu0 0.0
      %4593 = vmatpush2.msra.mxu0 0.0
      %4594 = vmatprep.subr.mxu0 0.0
      %4595 = vmatpush2.msra.mxu0 0.0
      %4596 = vmatprep.subr.mxu0 0.0
      %4597 = vmatpush2.msra.mxu0 0.0
      %4598 = vmatprep.subr.mxu0 0.0
      %4599 = vmatpush2.msra.mxu0 0.0
      %4600 = vmatprep.mubr.f32.mxu0 0.0
      %4601 = vmatmul.mubr.f32.gmra.mxu0 %v4534
      %v4602 = vpop.f32.mrf.mxu0
      %v4603 = vadd.f32 0.0, %v4602
      %v4604 = vpop.f32.mrf.mxu0
      %v4605 = vadd.f32 0.0, %v4604
      %4606 = vdwg.mxu0
      %4607 = vmatprep.subr.mxu0 0.0
      %4608 = vmatpush1.msra.mxu0 0.0
      %4609 = vmatprep.subr.mxu0 0.0
      %4610 = vmatpush1.msra.mxu0 0.0
      %4611 = vmatprep.subr.mxu0 0.0
      %4612 = vmatpush1.msra.mxu0 0.0
      %4613 = vmatprep.subr.mxu0 0.0
      %4614 = vmatpush1.msra.mxu0 0.0
      %4615 = vmatprep.subr.mxu0 0.0
      %4616 = vmatpush1.msra.mxu0 0.0
      %4617 = vmatprep.subr.mxu0 0.0
      %4618 = vmatpush1.msra.mxu0 0.0
      %4619 = vmatprep.subr.mxu0 0.0
      %4620 = vmatpush1.msra.mxu0 0.0
      %4621 = vmatprep.subr.mxu0 0.0
      %4622 = vmatpush1.msra.mxu0 0.0
      %4623 = vmatprep.subr.mxu0 0.0
      %4624 = vmatpush1.msra.mxu0 0.0
      %4625 = vmatprep.subr.mxu0 0.0
      %4626 = vmatpush1.msra.mxu0 0.0
      %4627 = vmatprep.subr.mxu0 0.0
      %4628 = vmatpush1.msra.mxu0 0.0
      %4629 = vmatprep.subr.mxu0 0.0
      %4630 = vmatpush1.msra.mxu0 0.0
      %4631 = vmatprep.subr.mxu0 0.0
      %4632 = vmatpush1.msra.mxu0 0.0
      %4633 = vmatprep.subr.mxu0 0.0
      %4634 = vmatpush1.msra.mxu0 0.0
      %4635 = vmatprep.subr.mxu0 0.0
      %4636 = vmatpush1.msra.mxu0 0.0
      %4637 = vmatprep.subr.mxu0 %v4527
      %4638 = vmatpush1.msra.mxu0 %v4526
      %4639 = vmatprep.subr.mxu0 0.0
      %4640 = vmatpush2.msra.mxu0 0.0
      %4641 = vmatprep.subr.mxu0 0.0
      %4642 = vmatpush2.msra.mxu0 0.0
      %4643 = vmatprep.subr.mxu0 0.0
      %4644 = vmatpush2.msra.mxu0 0.0
      %4645 = vmatprep.subr.mxu0 0.0
      %4646 = vmatpush2.msra.mxu0 0.0
      %4647 = vmatprep.subr.mxu0 0.0
      %4648 = vmatpush2.msra.mxu0 0.0
      %4649 = vmatprep.subr.mxu0 0.0
      %4650 = vmatpush2.msra.mxu0 0.0
      %4651 = vmatprep.subr.mxu0 0.0
      %4652 = vmatpush2.msra.mxu0 0.0
      %4653 = vmatprep.subr.mxu0 0.0
      %4654 = vmatpush2.msra.mxu0 0.0
      %4655 = vmatprep.subr.mxu0 0.0
      %4656 = vmatpush2.msra.mxu0 0.0
      %4657 = vmatprep.subr.mxu0 0.0
      %4658 = vmatpush2.msra.mxu0 0.0
      %4659 = vmatprep.subr.mxu0 0.0
      %4660 = vmatpush2.msra.mxu0 0.0
      %4661 = vmatprep.subr.mxu0 0.0
      %4662 = vmatpush2.msra.mxu0 0.0
      %4663 = vmatprep.subr.mxu0 0.0
      %4664 = vmatpush2.msra.mxu0 0.0
      %4665 = vmatprep.subr.mxu0 0.0
      %4666 = vmatpush2.msra.mxu0 0.0
      %4667 = vmatprep.subr.mxu0 0.0
      %4668 = vmatpush2.msra.mxu0 0.0
      %4669 = vmatprep.subr.mxu0 0.0
      %4670 = vmatpush2.msra.mxu0 0.0
      %4671 = vmatprep.mubr.f32.mxu0 0.0
      %4672 = vmatmul.mubr.f32.gmra.mxu0 %v4534
      %v4673 = vpop.f32.mrf.mxu0
      %v4674 = vadd.f32 0.0, %v4673
      %v4675 = vpop.f32.mrf.mxu0
      %v4676 = vadd.f32 0.0, %v4675
      %4677 = vdwg.mxu0
      %4678 = vmatprep.subr.mxu0 0.0
      %4679 = vmatpush1.msra.mxu0 0.0
      %4680 = vmatprep.subr.mxu0 0.0
      %4681 = vmatpush1.msra.mxu0 0.0
      %4682 = vmatprep.subr.mxu0 0.0
      %4683 = vmatpush1.msra.mxu0 0.0
      %4684 = vmatprep.subr.mxu0 0.0
      %4685 = vmatpush1.msra.mxu0 0.0
      %4686 = vmatprep.subr.mxu0 0.0
      %4687 = vmatpush1.msra.mxu0 0.0
      %4688 = vmatprep.subr.mxu0 0.0
      %4689 = vmatpush1.msra.mxu0 0.0
      %4690 = vmatprep.subr.mxu0 0.0
      %4691 = vmatpush1.msra.mxu0 0.0
      %4692 = vmatprep.subr.mxu0 0.0
      %4693 = vmatpush1.msra.mxu0 0.0
      %4694 = vmatprep.subr.mxu0 0.0
      %4695 = vmatpush1.msra.mxu0 0.0
      %4696 = vmatprep.subr.mxu0 0.0
      %4697 = vmatpush1.msra.mxu0 0.0
      %4698 = vmatprep.subr.mxu0 0.0
      %4699 = vmatpush1.msra.mxu0 0.0
      %4700 = vmatprep.subr.mxu0 0.0
      %4701 = vmatpush1.msra.mxu0 0.0
      %4702 = vmatprep.subr.mxu0 0.0
      %4703 = vmatpush1.msra.mxu0 0.0
      %4704 = vmatprep.subr.mxu0 0.0
      %4705 = vmatpush1.msra.mxu0 0.0
      %4706 = vmatprep.subr.mxu0 0.0
      %4707 = vmatpush1.msra.mxu0 0.0
      %4708 = vmatprep.subr.mxu0 0.0
      %4709 = vmatpush1.msra.mxu0 %v4528
      %4710 = vmatprep.subr.mxu0 0.0
      %4711 = vmatpush2.msra.mxu0 0.0
      %4712 = vmatprep.subr.mxu0 0.0
      %4713 = vmatpush2.msra.mxu0 0.0
      %4714 = vmatprep.subr.mxu0 0.0
      %4715 = vmatpush2.msra.mxu0 0.0
      %4716 = vmatprep.subr.mxu0 0.0
      %4717 = vmatpush2.msra.mxu0 0.0
      %4718 = vmatprep.subr.mxu0 0.0
      %4719 = vmatpush2.msra.mxu0 0.0
      %4720 = vmatprep.subr.mxu0 0.0
      %4721 = vmatpush2.msra.mxu0 0.0
      %4722 = vmatprep.subr.mxu0 0.0
      %4723 = vmatpush2.msra.mxu0 0.0
      %4724 = vmatprep.subr.mxu0 0.0
      %4725 = vmatpush2.msra.mxu0 0.0
      %4726 = vmatprep.subr.mxu0 0.0
      %4727 = vmatpush2.msra.mxu0 0.0
      %4728 = vmatprep.subr.mxu0 0.0
      %4729 = vmatpush2.msra.mxu0 0.0
      %4730 = vmatprep.subr.mxu0 0.0
      %4731 = vmatpush2.msra.mxu0 0.0
      %4732 = vmatprep.subr.mxu0 0.0
      %4733 = vmatpush2.msra.mxu0 0.0
      %4734 = vmatprep.subr.mxu0 0.0
      %4735 = vmatpush2.msra.mxu0 0.0
      %4736 = vmatprep.subr.mxu0 0.0
      %4737 = vmatpush2.msra.mxu0 0.0
      %4738 = vmatprep.subr.mxu0 0.0
      %4739 = vmatpush2.msra.mxu0 0.0
      %4740 = vmatprep.subr.mxu0 0.0
      %4741 = vmatpush2.msra.mxu0 0.0
      %4742 = vmatprep.mubr.f32.mxu0 0.0
      %4743 = vmatmul.mubr.f32.gmra.mxu0 %v4534
      %v4744 = vpop.f32.mrf.mxu0
      %v4745 = vadd.f32 0.0, %v4744
      %v4746 = vpop.f32.mrf.mxu0
      %4747 = vdwg.mxu0
      %v4748 = vadd.f32 %v4505, %v4603
      %v4749 = vadd.f32 %v4506, %v4605
      %v4750 = vadd.f32 %v4507, %v4674
      %v4751 = vadd.f32 %v4508, %v4676
      %v4752 = vadd.f32 %v4509, %v4745
      %v4753 = vld [vmem:[%s328] sm:$0xff]
      %4755 = vset.pattern.permute.xlu0 0
      %4756 = vperm.xlu0 %4755, %v4753
      %v4757 = vpop.permute.xlu0 %4756
      %v4759 = vadd.f32 %v4748, %v4757
      %v4760 = vadd.f32 %v4749, %v4757
      %v4761 = vadd.f32 %v4750, %v4757
      %v4762 = vadd.f32 %v4751, %v4757
      %v4763 = vadd.f32 %v4752, %v4757
      %v4764 = vmul.f32 %v4759, %v355
      %v4765 = vmul.f32 %v4760, %v356
      %v4766 = vmul.f32 %v4761, %v357
      %v4767 = vmul.f32 %v4762, %v358
      %v4768 = vmul.f32 %v4763, %v359
      %v4769 = vld [vmem:[%s333 + $0x8] sm:$0xff]
      %v4770 = vld [vmem:[%s333 + $0x10] sm:$0xff]
      %v4771 = vld [vmem:[%s333 + $0x18] sm:$0xff]
      %v4772 = vld [vmem:[%s333 + $0x20] sm:$0xff]
      %v4773 = vld [vmem:[%s333 + $0x28] sm:$0xff]
      %v4774 = vadd.f32 %v4769, %v4764
      %v4775 = vadd.f32 %v4770, %v4765
      %v4776 = vadd.f32 %v4771, %v4766
      %v4777 = vadd.f32 %v4772, %v4767
      %v4778 = vadd.f32 %v4773, %v4768
      %4779 = vst [vmem:[%s333 + $0x8] sm:$0xff] %v4774
      %4780 = vst [vmem:[%s333 + $0x10] sm:$0xff] %v4775
      %4781 = vst [vmem:[%s333 + $0x18] sm:$0xff] %v4776
      %4782 = vst [vmem:[%s333 + $0x20] sm:$0xff] %v4777
      %4783 = vst [vmem:[%s333 + $0x28] sm:$0xff] %v4778
      %s4784 = smul.u32 7, %s21
      %p4785 = scmp.lt.s32.totalorder %s4784, 6
      %s4786 = scalar_select %p4785, %s4784, 6
      %s4787 = smul.addr %s4786, 8
      %s4788 = scalar_lea.vmem %s6, %s4787
      // Predicated region
      $region49: #{projnet_m_forward.1} parent=43 // pred_check
        %p4789 = pneg %p198
      $region50: #{projnet_m_forward.1} parent=43 // pred_check_branch
        %4791 = sbr.rel (%p4789) target = $region52
      $region51: #{projnet_m_forward.1} parent=43 // pred_region
        %s4792 = smul.u32 7, %s21
      $region52: #{projnet_m_forward.1} parent=43 // pred_fallthru
        _
      // Predicated region
      $region53: #{projnet_m_forward.1} parent=43 // pred_check
        %p4793 = pneg %p198
      $region54: #{projnet_m_forward.1} parent=43 // pred_check_branch
        %4795 = sbr.rel (%p4793) target = $region56
      $region55: #{projnet_m_forward.1} parent=43 // pred_region
        %s4796 = smul.u32 7, %s21
        %p4797 = scmp.lt.s32.totalorder %s4796, 6
        %s4798 = scalar_select %p4797, %s4796, 6
        %s4799 = smul.addr %s4798, 8
        %s4800 = scalar_lea.vmem %s6, %s4799
      $region56: #{projnet_m_forward.1} parent=43 // pred_fallthru
        _
    $region44: #{projnet_m_forward.1} parent=5 // pred_fallthru
      _
    %p4801 = scmp.le.s32.totalorder 2, %s12
    // Predicated region
    $region57: #{projnet_m_forward.1} parent=5 // pred_check
      %p4802 = pneg %p4801
    $region58: #{projnet_m_forward.1} parent=5 // pred_check_branch
      %4804 = sbr.rel (%p4802) target = $region60
    $region59: #{projnet_m_forward.1} parent=5 // pred_region
      %s4805 = ssub.s32 %s12, 2
    $region60: #{projnet_m_forward.1} parent=5 // pred_fallthru
      _
  $region6: #{projnet_m_forward.1} parent=0 // loop_footer
    %s16 = sadd.s32 1, %s12
  $region7: #{projnet_m_forward.1} parent=0 // loop_footer_branch
    %11 = sbr.rel target = $region3
  $region8: #{projnet_m_forward.1} parent=0 // loop_exit
    _

</llo_original>
